<compile_context>
chip_gen: v7x
topology: tpu7x:2x2x1
jax: 0.10.0
libtpu: 0.0.40
codegen_flags: <defaults>
</compile_context>

<pallas_src>
import functools
import math

import jax
import jax.numpy as jnp
from jax.experimental import pallas as pl
from jax.experimental.pallas import tpu as pltpu


def _mha_body(q_ref, k_ref, v_ref, bias_ref, wqkv_ref, bqkv_ref, wo_ref, bo_ref,
              out_ref, qh_scr, m_scr, l_scr, acc_scr, *,
              heads, scale, mxu_dtype, approx_softmax):
    """One (batch, q-tile, kv-tile) grid step of fused MHA with online softmax."""
    f32 = jnp.float32
    ki = pl.program_id(2)
    cast = lambda a: a.astype(mxu_dtype)   # no-op when mxu_dtype == f32

    # ---- first KV tile of this (batch, q-tile): project Q once, reset softmax state.
    @pl.when(ki == 0)
    def _init():
        xq = cast(q_ref[0])                                            # (tq, D)
        for h in range(heads):   # static unroll; per-head weights -> no lane slicing
            qp = jnp.dot(xq, wqkv_ref[0, h], preferred_element_type=f32)   # (tq, d_k)
            qh_scr[h] = ((qp + bqkv_ref[0, h]) * scale).astype(qh_scr.dtype)
        m_scr[...] = jnp.full(m_scr.shape, -jnp.inf, dtype=m_scr.dtype)
        l_scr[...] = jnp.zeros(l_scr.shape, dtype=l_scr.dtype)
        acc_scr[...] = jnp.zeros(acc_scr.shape, dtype=acc_scr.dtype)

    # ---- project the current K/V tile into head layout (per-head matmuls).
    xk = cast(k_ref[0])                                                 # (tk, D)
    xv = xk if (v_ref is k_ref) else cast(v_ref[0])                     # self-attn dedupe
    kh = jnp.stack([jnp.dot(xk, wqkv_ref[1, h], preferred_element_type=f32)
                    + bqkv_ref[1, h] for h in range(heads)], axis=0)    # (H, tk, d_k)
    vh = jnp.stack([jnp.dot(xv, wqkv_ref[2, h], preferred_element_type=f32)
                    + bqkv_ref[2, h] for h in range(heads)], axis=0)    # (H, tk, d_k)

    # ---- head-batched scores + additive key mask (0 / -1e9, precomputed on host).
    s = jnp.einsum('hqd,hkd->hqk', qh_scr[...], cast(kh),
                   preferred_element_type=f32)                          # (H, tq, tk)
    s = s + bias_ref[0][None, :, :]

    # ---- online-softmax update (f32 accumulators).
    # TODO(synk): on v6e/v7x the exp could run on bf16 inputs (bf16 EUP) if the
    # EUP ever becomes the binding slot; kept f32 here for v5e and accuracy.
    m_prev = m_scr[...]
    m_new = jnp.maximum(m_prev, jnp.max(s, axis=-1, keepdims=True))
    alpha = jnp.exp(m_prev - m_new)
    p = jnp.exp(s - m_new)
    l_scr[...] = alpha * l_scr[...] + jnp.sum(p, axis=-1, keepdims=True)
    acc_scr[...] = alpha * acc_scr[...] + jnp.einsum(
        'hqk,hkd->hqd', cast(p), cast(vh), preferred_element_type=f32)
    m_scr[...] = m_new

    # ---- last KV tile: normalize and fuse the output projection over heads.
    @pl.when(ki == pl.num_programs(2) - 1)
    def _finalize():
        inv_l = pl.reciprocal(l_scr[...], approx=approx_softmax)        # (H, tq, 1)
        out = None
        for h in range(heads):
            ctx_h = cast(acc_scr[h] * inv_l[h])                         # (tq, d_k)
            term = jnp.dot(ctx_h, wo_ref[h], preferred_element_type=f32)  # (tq, D)
            out = term if out is None else out + term                   # MXU-accumulate heads
        out_ref[0] = (out + bo_ref[0]).astype(out_ref.dtype)


def _pick_q_block(s, target=128):
    """Largest multiple of 8 <= target dividing s (or s itself when s <= target)."""
    if s <= target:
        return s
    t = target - (target % 8)
    while t >= 8:
        if s % t == 0:
            return t
        t -= 8
    return s


def _pick_kv_block(s, target=512):
    """Largest multiple of 128 <= target dividing s (the additive key-mask bias has
    the KV axis as its last (lane) dim, so KV tiles must be lane-aligned), else s."""
    if s <= target:
        return s
    t = target - (target % 128)
    while t >= 128:
        if s % t == 0:
            return t
        t -= 128
    return s


def _default_vmem_limit():
    # Size the scoped-VMEM budget per TPU generation: ~7/8 of physical on v7x
    # (64 MiB -> 56 MiB), capped at ~100 MiB on v5e/v6e (128 MiB physical).
    try:
        cap = pltpu.get_tpu_info().vmem_capacity_bytes
        return int(min(100 * 1024 * 1024, (cap * 7) // 8))
    except Exception:
        return 48 * 1024 * 1024


def multi_headed_attention(query, key, value, mask, params, *, heads,
                           mxu_dtype=jnp.float32, approx_softmax=False,
                           q_block=None, kv_block=None,
                           single_buffer_weights=False, vmem_limit_bytes=None):
    """query: (B, Sq, D), key/value: (B, Sk, D), mask: (B, 1, 1, Sk).

    Matches the PyTorch MultiHeadedAttention forward (eval mode: dropout no-op).
    """
    B, Sq, D = query.shape
    _, Sk, _ = key.shape
    assert key.shape == value.shape and key.shape[0] == B and key.shape[2] == D
    assert D % heads == 0
    d_k = D // heads

    tq = q_block if q_block is not None else _pick_q_block(Sq)
    tk = kv_block if kv_block is not None else _pick_kv_block(Sk)
    assert Sq % tq == 0 and Sk % tk == 0, "sequence length must divide the tile sizes"
    # TODO(synk): pad ragged sequence lengths to the tile size instead of asserting.

    # Additive key mask computed once on host: 0 keep / -1e9 drop
    # (same semantics as masked_fill(mask == 0, -1e9)).
    bias = jnp.where(mask.reshape(B, 1, Sk) == 0, -1e9, 0.0).astype(jnp.float32)

    # torch Linear weight is (out, in); transpose to (in, out) and pre-split the
    # head axis on the host so the kernel never lane-slices: (3, H, D, d_k).
    def per_head(w):                      # (D, D) torch layout -> (H, D, d_k)
        return w.T.reshape(D, heads, d_k).transpose(1, 0, 2)

    wqkv = jnp.stack([per_head(params["wq"]), per_head(params["wk"]),
                      per_head(params["wv"])], axis=0).astype(mxu_dtype)   # (3,H,D,d_k)
    bqkv = jnp.stack([params["bq"], params["bk"], params["bv"]],
                     axis=0).reshape(3, heads, 1, d_k).astype(jnp.float32)  # (3,H,1,d_k)
    wo_h = params["wo"].T.reshape(heads, d_k, D).astype(mxu_dtype)          # (H,d_k,D)
    bo = params["bo"].reshape(1, D).astype(jnp.float32)

    kv_shared = key is value   # BERT self-attention: K and V read the same rows

    grid = (B, Sq // tq, Sk // tk)

    q_spec = pl.BlockSpec((1, tq, D), lambda b, qi, ki: (b, qi, 0))
    kv_spec = pl.BlockSpec((1, tk, D), lambda b, qi, ki: (b, ki, 0))
    bias_spec = pl.BlockSpec((1, 1, tk), lambda b, qi, ki: (b, 0, ki))
    out_spec = pl.BlockSpec((1, tq, D), lambda b, qi, ki: (b, qi, 0))

    # Constant-index weight/bias blocks are fetched once; optionally single-buffer
    # them to free VMEM (v7x headroom). Off by default for maximal compatibility.
    wkw = dict(pipeline_mode=pl.Buffered(1)) if single_buffer_weights else {}
    wqkv_spec = pl.BlockSpec((3, heads, D, d_k), lambda b, qi, ki: (0, 0, 0, 0), **wkw)
    bqkv_spec = pl.BlockSpec((3, heads, 1, d_k), lambda b, qi, ki: (0, 0, 0, 0), **wkw)
    wo_spec = pl.BlockSpec((heads, d_k, D), lambda b, qi, ki: (0, 0, 0), **wkw)
    bo_spec = pl.BlockSpec((1, D), lambda b, qi, ki: (0, 0), **wkw)

    body = functools.partial(_mha_body, heads=heads, scale=1.0 / math.sqrt(d_k),
                             mxu_dtype=mxu_dtype, approx_softmax=approx_softmax)

    if kv_shared:
        def kernel(q_ref, kv_ref, bias_ref, wqkv_ref, bqkv_ref, wo_ref, bo_ref,
                   out_ref, qh_scr, m_scr, l_scr, acc_scr):
            body(q_ref, kv_ref, kv_ref, bias_ref, wqkv_ref, bqkv_ref, wo_ref,
                 bo_ref, out_ref, qh_scr, m_scr, l_scr, acc_scr)
        seq_inputs = (query, key)
        seq_specs = [q_spec, kv_spec]
    else:
        def kernel(q_ref, k_ref, v_ref, bias_ref, wqkv_ref, bqkv_ref, wo_ref,
                   bo_ref, out_ref, qh_scr, m_scr, l_scr, acc_scr):
            body(q_ref, k_ref, v_ref, bias_ref, wqkv_ref, bqkv_ref, wo_ref,
                 bo_ref, out_ref, qh_scr, m_scr, l_scr, acc_scr)
        seq_inputs = (query, key, value)
        seq_specs = [q_spec, kv_spec, kv_spec]

    if vmem_limit_bytes is None:
        vmem_limit_bytes = _default_vmem_limit()

    return pl.pallas_call(
        kernel,
        out_shape=jax.ShapeDtypeStruct((B, Sq, D), query.dtype),
        grid_spec=pltpu.PrefetchScalarGridSpec(
            num_scalar_prefetch=0,
            grid=grid,
            in_specs=seq_specs + [bias_spec, wqkv_spec, bqkv_spec, wo_spec, bo_spec],
            out_specs=out_spec,
            scratch_shapes=[
                pltpu.VMEM((heads, tq, d_k), mxu_dtype),    # projected Q tile
                pltpu.VMEM((heads, tq, 1), jnp.float32),    # online-softmax running max
                pltpu.VMEM((heads, tq, 1), jnp.float32),    # online-softmax running denom
                pltpu.VMEM((heads, tq, d_k), jnp.float32),  # unnormalized context accumulator
            ]),
        compiler_params=pltpu.CompilerParams(
            # batch and query-tile axes shard across TensorCores (v7x megacore)
            # even when B == 1; KV axis is the reduction -> last + "arbitrary".
            dimension_semantics=("parallel", "parallel", "arbitrary"),
            vmem_limit_bytes=vmem_limit_bytes),
    )(*seq_inputs, bias, wqkv, bqkv, wo_h, bo)


def _reference(query, key, value, mask, params, *, heads):
    """Pure-JAX reference mirroring the PyTorch forward (dropout in eval mode)."""
    B, S, D = query.shape
    d_k = D // heads
    lin = lambda x, w, b: x @ w.T + b
    split = lambda x: x.reshape(x.shape[0], x.shape[1], heads, d_k).transpose(0, 2, 1, 3)
    q = split(lin(query, params["wq"], params["bq"]))
    k = split(lin(key, params["wk"], params["bk"]))
    v = split(lin(value, params["wv"], params["bv"]))
    scores = jnp.einsum("bhqd,bhkd->bhqk", q, k) / math.sqrt(d_k)
    scores = jnp.where(mask == 0.0, -1e9, scores)
    weights = jax.nn.softmax(scores, axis=-1)
    ctx = jnp.einsum("bhqk,bhkd->bhqd", weights, v)
    ctx = ctx.transpose(0, 2, 1, 3).reshape(B, S, D)
    return lin(ctx, params["wo"], params["bo"])


if __name__ == "__main__":
    B, S, D, H = 2, 8, 32, 4  # batch, max_len, d_model, heads
    # NOTE: toy shapes (D=32 < 128 lanes) are mostly MXU/lane padding; the kernel
    # is lane-dense at real BERT sizes (D a multiple of 128, S >= 128).

    key0 = jax.random.PRNGKey(0)
    ks = jax.random.split(key0, 12)

    bound = 1.0 / math.sqrt(D)
    params = {
        "wq": jax.random.uniform(ks[0], (D, D), jnp.float32, -bound, bound),
        "bq": jax.random.uniform(ks[1], (D,), jnp.float32, -bound, bound),
        "wk": jax.random.uniform(ks[2], (D, D), jnp.float32, -bound, bound),
        "bk": jax.random.uniform(ks[3], (D,), jnp.float32, -bound, bound),
        "wv": jax.random.uniform(ks[4], (D, D), jnp.float32, -bound, bound),
        "bv": jax.random.uniform(ks[5], (D,), jnp.float32, -bound, bound),
        "wo": jax.random.uniform(ks[6], (D, D), jnp.float32, -bound, bound),
        "bo": jax.random.uniform(ks[7], (D,), jnp.float32, -bound, bound),
    }

    query = jax.random.normal(ks[8], (B, S, D), jnp.float32)
    keyx = jax.random.normal(ks[9], (B, S, D), jnp.float32)
    value = jax.random.normal(ks[10], (B, S, D), jnp.float32)

    # mask of shape (B, 1, 1, S); zero out the last two key positions of batch 1.
    mask = jnp.ones((B, 1, 1, S), jnp.float32)
    mask = mask.at[1, :, :, 6:].set(0.0)

    # (1) general (distinct Q/K/V) path, f32, exact-precision check.
    ref = _reference(query, keyx, value, mask, params, heads=H)
    out = jax.block_until_ready(
        multi_headed_attention(query, keyx, value, mask, params, heads=H))
    assert out.shape == (B, S, D)
    assert jnp.allclose(out, ref, atol=1e-4, rtol=1e-4), "mismatch vs reference (f32)"

    # (2) self-attention path (key is value -> deduped single KV DMA stream).
    ref_self = _reference(query, query, query, mask, params, heads=H)
    out_self = jax.block_until_ready(
        multi_headed_attention(query, query, query, mask, params, heads=H))
    assert jnp.allclose(out_self, ref_self, atol=1e-4, rtol=1e-4), "mismatch (self-attn)"

    # (3) multi-tile flash path: S=256, 128-wide q/kv tiles -> online softmax runs
    # over 2 KV tiles per q tile, with masked keys crossing a tile boundary.
    S2 = 256
    q2 = jax.random.normal(ks[11], (1, S2, D), jnp.float32)
    mask2 = jnp.ones((1, 1, 1, S2), jnp.float32)
    mask2 = mask2.at[0, :, :, 200:].set(0.0)
    ref2 = _reference(q2, q2, q2, mask2, params, heads=H)
    out2 = jax.block_until_ready(
        multi_headed_attention(q2, q2, q2, mask2, params, heads=H,
                               q_block=128, kv_block=128))
    assert jnp.allclose(out2, ref2, atol=1e-4, rtol=1e-4), "mismatch (flash tiling)"

    # (4) bf16-MXU + approximate-reciprocal perf mode (weights pre-cast to bf16,
    # f32 accumulation); only small numeric drift vs the f32 reference expected.
    out_bf16 = jax.block_until_ready(
        multi_headed_attention(query, keyx, value, mask, params, heads=H,
                               mxu_dtype=jnp.bfloat16, approx_softmax=True))
    assert bool(jnp.all(jnp.isfinite(out_bf16)))
    assert float(jnp.max(jnp.abs(out_bf16 - ref))) < 0.5, "bf16 path grossly off"

    print("KERNEL_OK")
</pallas_src>

<mosaic_0001>
module attributes {stable_mosaic.version = 11 : i64} {
  func.func @kernel(%arg0: i32, %arg1: i32, %arg2: i32, %arg3: memref<1x8x32xf32, #tpu.memory_space<vmem>>, %arg4: memref<1x8x32xf32, #tpu.memory_space<vmem>>, %arg5: memref<1x8x32xf32, #tpu.memory_space<vmem>>, %arg6: memref<1x1x8xf32, #tpu.memory_space<vmem>>, %arg7: memref<3x4x32x8xf32, #tpu.memory_space<vmem>>, %arg8: memref<3x4x1x8xf32, #tpu.memory_space<vmem>>, %arg9: memref<4x8x32xf32, #tpu.memory_space<vmem>>, %arg10: memref<1x32xf32, #tpu.memory_space<vmem>>, %arg11: memref<1x8x32xf32, #tpu.memory_space<vmem>>, %arg12: memref<4x8x8xf32, #tpu.memory_space<vmem>>, %arg13: memref<4x8x1xf32, #tpu.memory_space<vmem>>, %arg14: memref<4x8x1xf32, #tpu.memory_space<vmem>>, %arg15: memref<4x8x8xf32, #tpu.memory_space<vmem>>) attributes {dimension_semantics = [#tpu.dimension_semantics<parallel>, #tpu.dimension_semantics<parallel>, #tpu.dimension_semantics<arbitrary>], iteration_bounds = array<i64: 2, 1, 1>, scalar_prefetch = 0 : i64, scratch_operands = 4 : i64, tpu.core_type = #tpu.core_type<tc>, window_params = [{transform_indices = @transform_0, window_bounds = array<i64: 1, 8, 32>}, {transform_indices = @transform_1, window_bounds = array<i64: 1, 8, 32>}, {transform_indices = @transform_2, window_bounds = array<i64: 1, 8, 32>}, {transform_indices = @transform_3, window_bounds = array<i64: 1, 1, 8>}, {pipeline_mode = #tpu.pipeline_mode<synchronous>, transform_indices = @transform_4, window_bounds = array<i64: 3, 4, 32, 8>}, {pipeline_mode = #tpu.pipeline_mode<synchronous>, transform_indices = @transform_5, window_bounds = array<i64: 3, 4, 1, 8>}, {pipeline_mode = #tpu.pipeline_mode<synchronous>, transform_indices = @transform_6, window_bounds = array<i64: 4, 8, 32>}, {pipeline_mode = #tpu.pipeline_mode<synchronous>, transform_indices = @transform_7, window_bounds = array<i64: 1, 32>}, {transform_indices = @transform_8, window_bounds = array<i64: 1, 8, 32>}]} {
    %c0_i32 = arith.constant 0 : i32
    %0 = arith.cmpi eq, %arg2, %c0_i32 : i32
    %1 = arith.extui %0 : i1 to i32
    %c0_i32_0 = arith.constant 0 : i32
    %2 = arith.cmpi ne, %1, %c0_i32_0 : i32
    scf.if %2 {
      %c0_104 = arith.constant 0 : index
      %c0_105 = arith.constant 0 : index
      %c0_106 = arith.constant 0 : index
      %105 = vector.load %arg3[%c0_104, %c0_105, %c0_106] : memref<1x8x32xf32, #tpu.memory_space<vmem>>, vector<1x8x32xf32>
      %106 = vector.shape_cast %105 : vector<1x8x32xf32> to vector<8x32xf32>
      %c0_107 = arith.constant 0 : index
      %c0_108 = arith.constant 0 : index
      %c0_109 = arith.constant 0 : index
      %c0_110 = arith.constant 0 : index
      %107 = vector.load %arg7[%c0_107, %c0_108, %c0_109, %c0_110] : memref<3x4x32x8xf32, #tpu.memory_space<vmem>>, vector<1x1x32x8xf32>
      %108 = vector.shape_cast %107 : vector<1x1x32x8xf32> to vector<32x8xf32>
      %cst_111 = arith.constant dense<0.000000e+00> : vector<8x8xf32>
      %109 = tpu.matmul %106, %108, %cst_111 {dimension_numbers = #tpu.dot_dimension_numbers<[1], [0], [0], [1], [0, 0, 1, 1], [], []>} : vector<8x32xf32>, vector<32x8xf32>, vector<8x8xf32> -> vector<8x8xf32>
      %c0_112 = arith.constant 0 : index
      %c0_113 = arith.constant 0 : index
      %c0_114 = arith.constant 0 : index
      %c0_115 = arith.constant 0 : index
      %110 = vector.load %arg8[%c0_112, %c0_113, %c0_114, %c0_115] : memref<3x4x1x8xf32, #tpu.memory_space<vmem>>, vector<1x1x1x8xf32>
      %111 = vector.shape_cast %110 : vector<1x1x1x8xf32> to vector<1x8xf32>
      %112 = vector.broadcast %111 : vector<1x8xf32> to vector<8x8xf32>
      %113 = arith.addf %109, %112 : vector<8x8xf32>
      %cst_116 = arith.constant 0.353553385 : f32
      %114 = vector.broadcast %cst_116 : f32 to vector<8x8xf32>
      %115 = arith.mulf %113, %114 : vector<8x8xf32>
      %c0_117 = arith.constant 0 : index
      %c0_118 = arith.constant 0 : index
      %c0_119 = arith.constant 0 : index
      %116 = vector.load %arg12[%c0_117, %c0_118, %c0_119] : memref<4x8x8xf32, #tpu.memory_space<vmem>>, vector<1x8x8xf32>
      %117 = vector.shape_cast %116 : vector<1x8x8xf32> to vector<8x8xf32>
      %118 = vector.shape_cast %115 : vector<8x8xf32> to vector<1x8x8xf32>
      tpu.vector_store %arg12[%c0_117, %c0_118, %c0_119], %118 {strides = array<i32>} : memref<4x8x8xf32, #tpu.memory_space<vmem>>, vector<1x8x8xf32>,
      %c0_120 = arith.constant 0 : index
      %c1_121 = arith.constant 1 : index
      %c0_122 = arith.constant 0 : index
      %c0_123 = arith.constant 0 : index
      %119 = vector.load %arg7[%c0_120, %c1_121, %c0_122, %c0_123] : memref<3x4x32x8xf32, #tpu.memory_space<vmem>>, vector<1x1x32x8xf32>
      %120 = vector.shape_cast %119 : vector<1x1x32x8xf32> to vector<32x8xf32>
      %cst_124 = arith.constant dense<0.000000e+00> : vector<8x8xf32>
      %121 = tpu.matmul %106, %120, %cst_124 {dimension_numbers = #tpu.dot_dimension_numbers<[1], [0], [0], [1], [0, 0, 1, 1], [], []>} : vector<8x32xf32>, vector<32x8xf32>, vector<8x8xf32> -> vector<8x8xf32>
      %c0_125 = arith.constant 0 : index
      %c1_126 = arith.constant 1 : index
      %c0_127 = arith.constant 0 : index
      %c0_128 = arith.constant 0 : index
      %122 = vector.load %arg8[%c0_125, %c1_126, %c0_127, %c0_128] : memref<3x4x1x8xf32, #tpu.memory_space<vmem>>, vector<1x1x1x8xf32>
      %123 = vector.shape_cast %122 : vector<1x1x1x8xf32> to vector<1x8xf32>
      %124 = vector.broadcast %123 : vector<1x8xf32> to vector<8x8xf32>
      %125 = arith.addf %121, %124 : vector<8x8xf32>
      %cst_129 = arith.constant 0.353553385 : f32
      %126 = vector.broadcast %cst_129 : f32 to vector<8x8xf32>
      %127 = arith.mulf %125, %126 : vector<8x8xf32>
      %c1_130 = arith.constant 1 : index
      %c0_131 = arith.constant 0 : index
      %c0_132 = arith.constant 0 : index
      %128 = vector.load %arg12[%c1_130, %c0_131, %c0_132] : memref<4x8x8xf32, #tpu.memory_space<vmem>>, vector<1x8x8xf32>
      %129 = vector.shape_cast %128 : vector<1x8x8xf32> to vector<8x8xf32>
      %130 = vector.shape_cast %127 : vector<8x8xf32> to vector<1x8x8xf32>
      tpu.vector_store %arg12[%c1_130, %c0_131, %c0_132], %130 {strides = array<i32>} : memref<4x8x8xf32, #tpu.memory_space<vmem>>, vector<1x8x8xf32>,
      %c0_133 = arith.constant 0 : index
      %c2_134 = arith.constant 2 : index
      %c0_135 = arith.constant 0 : index
      %c0_136 = arith.constant 0 : index
      %131 = vector.load %arg7[%c0_133, %c2_134, %c0_135, %c0_136] : memref<3x4x32x8xf32, #tpu.memory_space<vmem>>, vector<1x1x32x8xf32>
      %132 = vector.shape_cast %131 : vector<1x1x32x8xf32> to vector<32x8xf32>
      %cst_137 = arith.constant dense<0.000000e+00> : vector<8x8xf32>
      %133 = tpu.matmul %106, %132, %cst_137 {dimension_numbers = #tpu.dot_dimension_numbers<[1], [0], [0], [1], [0, 0, 1, 1], [], []>} : vector<8x32xf32>, vector<32x8xf32>, vector<8x8xf32> -> vector<8x8xf32>
      %c0_138 = arith.constant 0 : index
      %c2_139 = arith.constant 2 : index
      %c0_140 = arith.constant 0 : index
      %c0_141 = arith.constant 0 : index
      %134 = vector.load %arg8[%c0_138, %c2_139, %c0_140, %c0_141] : memref<3x4x1x8xf32, #tpu.memory_space<vmem>>, vector<1x1x1x8xf32>
      %135 = vector.shape_cast %134 : vector<1x1x1x8xf32> to vector<1x8xf32>
      %136 = vector.broadcast %135 : vector<1x8xf32> to vector<8x8xf32>
      %137 = arith.addf %133, %136 : vector<8x8xf32>
      %cst_142 = arith.constant 0.353553385 : f32
      %138 = vector.broadcast %cst_142 : f32 to vector<8x8xf32>
      %139 = arith.mulf %137, %138 : vector<8x8xf32>
      %c2_143 = arith.constant 2 : index
      %c0_144 = arith.constant 0 : index
      %c0_145 = arith.constant 0 : index
      %140 = vector.load %arg12[%c2_143, %c0_144, %c0_145] : memref<4x8x8xf32, #tpu.memory_space<vmem>>, vector<1x8x8xf32>
      %141 = vector.shape_cast %140 : vector<1x8x8xf32> to vector<8x8xf32>
      %142 = vector.shape_cast %139 : vector<8x8xf32> to vector<1x8x8xf32>
      tpu.vector_store %arg12[%c2_143, %c0_144, %c0_145], %142 {strides = array<i32>} : memref<4x8x8xf32, #tpu.memory_space<vmem>>, vector<1x8x8xf32>,
      %c0_146 = arith.constant 0 : index
      %c3_147 = arith.constant 3 : index
      %c0_148 = arith.constant 0 : index
      %c0_149 = arith.constant 0 : index
      %143 = vector.load %arg7[%c0_146, %c3_147, %c0_148, %c0_149] : memref<3x4x32x8xf32, #tpu.memory_space<vmem>>, vector<1x1x32x8xf32>
      %144 = vector.shape_cast %143 : vector<1x1x32x8xf32> to vector<32x8xf32>
      %cst_150 = arith.constant dense<0.000000e+00> : vector<8x8xf32>
      %145 = tpu.matmul %106, %144, %cst_150 {dimension_numbers = #tpu.dot_dimension_numbers<[1], [0], [0], [1], [0, 0, 1, 1], [], []>} : vector<8x32xf32>, vector<32x8xf32>, vector<8x8xf32> -> vector<8x8xf32>
      %c0_151 = arith.constant 0 : index
      %c3_152 = arith.constant 3 : index
      %c0_153 = arith.constant 0 : index
      %c0_154 = arith.constant 0 : index
      %146 = vector.load %arg8[%c0_151, %c3_152, %c0_153, %c0_154] : memref<3x4x1x8xf32, #tpu.memory_space<vmem>>, vector<1x1x1x8xf32>
      %147 = vector.shape_cast %146 : vector<1x1x1x8xf32> to vector<1x8xf32>
      %148 = vector.broadcast %147 : vector<1x8xf32> to vector<8x8xf32>
      %149 = arith.addf %145, %148 : vector<8x8xf32>
      %cst_155 = arith.constant 0.353553385 : f32
      %150 = vector.broadcast %cst_155 : f32 to vector<8x8xf32>
      %151 = arith.mulf %149, %150 : vector<8x8xf32>
      %c3_156 = arith.constant 3 : index
      %c0_157 = arith.constant 0 : index
      %c0_158 = arith.constant 0 : index
      %152 = vector.load %arg12[%c3_156, %c0_157, %c0_158] : memref<4x8x8xf32, #tpu.memory_space<vmem>>, vector<1x8x8xf32>
      %153 = vector.shape_cast %152 : vector<1x8x8xf32> to vector<8x8xf32>
      %154 = vector.shape_cast %151 : vector<8x8xf32> to vector<1x8x8xf32>
      tpu.vector_store %arg12[%c3_156, %c0_157, %c0_158], %154 {strides = array<i32>} : memref<4x8x8xf32, #tpu.memory_space<vmem>>, vector<1x8x8xf32>,
      %cst_159 = arith.constant 0xFF800000 : f32
      %155 = vector.broadcast %cst_159 : f32 to vector<4x8x1xf32>
      %c0_160 = arith.constant 0 : index
      %c0_161 = arith.constant 0 : index
      %c0_162 = arith.constant 0 : index
      %156 = vector.load %arg13[%c0_160, %c0_161, %c0_162] : memref<4x8x1xf32, #tpu.memory_space<vmem>>, vector<4x8x1xf32>
      tpu.vector_store %arg13[%c0_160, %c0_161, %c0_162], %155 {strides = array<i32>} : memref<4x8x1xf32, #tpu.memory_space<vmem>>, vector<4x8x1xf32>,
      %cst_163 = arith.constant 0.000000e+00 : f32
      %157 = vector.broadcast %cst_163 : f32 to vector<4x8x1xf32>
      %c0_164 = arith.constant 0 : index
      %c0_165 = arith.constant 0 : index
      %c0_166 = arith.constant 0 : index
      %158 = vector.load %arg14[%c0_164, %c0_165, %c0_166] : memref<4x8x1xf32, #tpu.memory_space<vmem>>, vector<4x8x1xf32>
      tpu.vector_store %arg14[%c0_164, %c0_165, %c0_166], %157 {strides = array<i32>} : memref<4x8x1xf32, #tpu.memory_space<vmem>>, vector<4x8x1xf32>,
      %cst_167 = arith.constant 0.000000e+00 : f32
      %159 = vector.broadcast %cst_167 : f32 to vector<4x8x8xf32>
      %c0_168 = arith.constant 0 : index
      %c0_169 = arith.constant 0 : index
      %c0_170 = arith.constant 0 : index
      %160 = vector.load %arg15[%c0_168, %c0_169, %c0_170] : memref<4x8x8xf32, #tpu.memory_space<vmem>>, vector<4x8x8xf32>
      tpu.vector_store %arg15[%c0_168, %c0_169, %c0_170], %159 {strides = array<i32>} : memref<4x8x8xf32, #tpu.memory_space<vmem>>, vector<4x8x8xf32>,
    } else {
    }
    %c0 = arith.constant 0 : index
    %c0_1 = arith.constant 0 : index
    %c0_2 = arith.constant 0 : index
    %3 = vector.load %arg4[%c0, %c0_1, %c0_2] : memref<1x8x32xf32, #tpu.memory_space<vmem>>, vector<1x8x32xf32>
    %4 = vector.shape_cast %3 : vector<1x8x32xf32> to vector<8x32xf32>
    %c0_3 = arith.constant 0 : index
    %c0_4 = arith.constant 0 : index
    %c0_5 = arith.constant 0 : index
    %5 = vector.load %arg5[%c0_3, %c0_4, %c0_5] : memref<1x8x32xf32, #tpu.memory_space<vmem>>, vector<1x8x32xf32>
    %6 = vector.shape_cast %5 : vector<1x8x32xf32> to vector<8x32xf32>
    %c1 = arith.constant 1 : index
    %c0_6 = arith.constant 0 : index
    %c0_7 = arith.constant 0 : index
    %c0_8 = arith.constant 0 : index
    %7 = vector.load %arg7[%c1, %c0_6, %c0_7, %c0_8] : memref<3x4x32x8xf32, #tpu.memory_space<vmem>>, vector<1x1x32x8xf32>
    %8 = vector.shape_cast %7 : vector<1x1x32x8xf32> to vector<32x8xf32>
    %cst = arith.constant dense<0.000000e+00> : vector<8x8xf32>
    %9 = tpu.matmul %4, %8, %cst {dimension_numbers = #tpu.dot_dimension_numbers<[1], [0], [0], [1], [0, 0, 1, 1], [], []>} : vector<8x32xf32>, vector<32x8xf32>, vector<8x8xf32> -> vector<8x8xf32>
    %c1_9 = arith.constant 1 : index
    %c0_10 = arith.constant 0 : index
    %c0_11 = arith.constant 0 : index
    %c0_12 = arith.constant 0 : index
    %10 = vector.load %arg8[%c1_9, %c0_10, %c0_11, %c0_12] : memref<3x4x1x8xf32, #tpu.memory_space<vmem>>, vector<1x1x1x8xf32>
    %11 = vector.shape_cast %10 : vector<1x1x1x8xf32> to vector<1x8xf32>
    %12 = vector.broadcast %11 : vector<1x8xf32> to vector<8x8xf32>
    %13 = arith.addf %9, %12 : vector<8x8xf32>
    %c1_13 = arith.constant 1 : index
    %c1_14 = arith.constant 1 : index
    %c0_15 = arith.constant 0 : index
    %c0_16 = arith.constant 0 : index
    %14 = vector.load %arg7[%c1_13, %c1_14, %c0_15, %c0_16] : memref<3x4x32x8xf32, #tpu.memory_space<vmem>>, vector<1x1x32x8xf32>
    %15 = vector.shape_cast %14 : vector<1x1x32x8xf32> to vector<32x8xf32>
    %cst_17 = arith.constant dense<0.000000e+00> : vector<8x8xf32>
    %16 = tpu.matmul %4, %15, %cst_17 {dimension_numbers = #tpu.dot_dimension_numbers<[1], [0], [0], [1], [0, 0, 1, 1], [], []>} : vector<8x32xf32>, vector<32x8xf32>, vector<8x8xf32> -> vector<8x8xf32>
    %c1_18 = arith.constant 1 : index
    %c1_19 = arith.constant 1 : index
    %c0_20 = arith.constant 0 : index
    %c0_21 = arith.constant 0 : index
    %17 = vector.load %arg8[%c1_18, %c1_19, %c0_20, %c0_21] : memref<3x4x1x8xf32, #tpu.memory_space<vmem>>, vector<1x1x1x8xf32>
    %18 = vector.shape_cast %17 : vector<1x1x1x8xf32> to vector<1x8xf32>
    %19 = vector.broadcast %18 : vector<1x8xf32> to vector<8x8xf32>
    %20 = arith.addf %16, %19 : vector<8x8xf32>
    %c1_22 = arith.constant 1 : index
    %c2 = arith.constant 2 : index
    %c0_23 = arith.constant 0 : index
    %c0_24 = arith.constant 0 : index
    %21 = vector.load %arg7[%c1_22, %c2, %c0_23, %c0_24] : memref<3x4x32x8xf32, #tpu.memory_space<vmem>>, vector<1x1x32x8xf32>
    %22 = vector.shape_cast %21 : vector<1x1x32x8xf32> to vector<32x8xf32>
    %cst_25 = arith.constant dense<0.000000e+00> : vector<8x8xf32>
    %23 = tpu.matmul %4, %22, %cst_25 {dimension_numbers = #tpu.dot_dimension_numbers<[1], [0], [0], [1], [0, 0, 1, 1], [], []>} : vector<8x32xf32>, vector<32x8xf32>, vector<8x8xf32> -> vector<8x8xf32>
    %c1_26 = arith.constant 1 : index
    %c2_27 = arith.constant 2 : index
    %c0_28 = arith.constant 0 : index
    %c0_29 = arith.constant 0 : index
    %24 = vector.load %arg8[%c1_26, %c2_27, %c0_28, %c0_29] : memref<3x4x1x8xf32, #tpu.memory_space<vmem>>, vector<1x1x1x8xf32>
    %25 = vector.shape_cast %24 : vector<1x1x1x8xf32> to vector<1x8xf32>
    %26 = vector.broadcast %25 : vector<1x8xf32> to vector<8x8xf32>
    %27 = arith.addf %23, %26 : vector<8x8xf32>
    %c1_30 = arith.constant 1 : index
    %c3 = arith.constant 3 : index
    %c0_31 = arith.constant 0 : index
    %c0_32 = arith.constant 0 : index
    %28 = vector.load %arg7[%c1_30, %c3, %c0_31, %c0_32] : memref<3x4x32x8xf32, #tpu.memory_space<vmem>>, vector<1x1x32x8xf32>
    %29 = vector.shape_cast %28 : vector<1x1x32x8xf32> to vector<32x8xf32>
    %cst_33 = arith.constant dense<0.000000e+00> : vector<8x8xf32>
    %30 = tpu.matmul %4, %29, %cst_33 {dimension_numbers = #tpu.dot_dimension_numbers<[1], [0], [0], [1], [0, 0, 1, 1], [], []>} : vector<8x32xf32>, vector<32x8xf32>, vector<8x8xf32> -> vector<8x8xf32>
    %c1_34 = arith.constant 1 : index
    %c3_35 = arith.constant 3 : index
    %c0_36 = arith.constant 0 : index
    %c0_37 = arith.constant 0 : index
    %31 = vector.load %arg8[%c1_34, %c3_35, %c0_36, %c0_37] : memref<3x4x1x8xf32, #tpu.memory_space<vmem>>, vector<1x1x1x8xf32>
    %32 = vector.shape_cast %31 : vector<1x1x1x8xf32> to vector<1x8xf32>
    %33 = vector.broadcast %32 : vector<1x8xf32> to vector<8x8xf32>
    %34 = arith.addf %30, %33 : vector<8x8xf32>
    %35 = vector.shape_cast %13 : vector<8x8xf32> to vector<1x8x8xf32>
    %36 = vector.shape_cast %20 : vector<8x8xf32> to vector<1x8x8xf32>
    %37 = vector.shape_cast %27 : vector<8x8xf32> to vector<1x8x8xf32>
    %38 = vector.shape_cast %34 : vector<8x8xf32> to vector<1x8x8xf32>
    %39 = tpu.concatenate %35, %36, %37, %38 in 0 : vector<1x8x8xf32>, vector<1x8x8xf32>, vector<1x8x8xf32>, vector<1x8x8xf32> -> vector<4x8x8xf32>
    %c2_38 = arith.constant 2 : index
    %c0_39 = arith.constant 0 : index
    %c0_40 = arith.constant 0 : index
    %c0_41 = arith.constant 0 : index
    %40 = vector.load %arg7[%c2_38, %c0_39, %c0_40, %c0_41] : memref<3x4x32x8xf32, #tpu.memory_space<vmem>>, vector<1x1x32x8xf32>
    %41 = vector.shape_cast %40 : vector<1x1x32x8xf32> to vector<32x8xf32>
    %cst_42 = arith.constant dense<0.000000e+00> : vector<8x8xf32>
    %42 = tpu.matmul %6, %41, %cst_42 {dimension_numbers = #tpu.dot_dimension_numbers<[1], [0], [0], [1], [0, 0, 1, 1], [], []>} : vector<8x32xf32>, vector<32x8xf32>, vector<8x8xf32> -> vector<8x8xf32>
    %c2_43 = arith.constant 2 : index
    %c0_44 = arith.constant 0 : index
    %c0_45 = arith.constant 0 : index
    %c0_46 = arith.constant 0 : index
    %43 = vector.load %arg8[%c2_43, %c0_44, %c0_45, %c0_46] : memref<3x4x1x8xf32, #tpu.memory_space<vmem>>, vector<1x1x1x8xf32>
    %44 = vector.shape_cast %43 : vector<1x1x1x8xf32> to vector<1x8xf32>
    %45 = vector.broadcast %44 : vector<1x8xf32> to vector<8x8xf32>
    %46 = arith.addf %42, %45 : vector<8x8xf32>
    %c2_47 = arith.constant 2 : index
    %c1_48 = arith.constant 1 : index
    %c0_49 = arith.constant 0 : index
    %c0_50 = arith.constant 0 : index
    %47 = vector.load %arg7[%c2_47, %c1_48, %c0_49, %c0_50] : memref<3x4x32x8xf32, #tpu.memory_space<vmem>>, vector<1x1x32x8xf32>
    %48 = vector.shape_cast %47 : vector<1x1x32x8xf32> to vector<32x8xf32>
    %cst_51 = arith.constant dense<0.000000e+00> : vector<8x8xf32>
    %49 = tpu.matmul %6, %48, %cst_51 {dimension_numbers = #tpu.dot_dimension_numbers<[1], [0], [0], [1], [0, 0, 1, 1], [], []>} : vector<8x32xf32>, vector<32x8xf32>, vector<8x8xf32> -> vector<8x8xf32>
    %c2_52 = arith.constant 2 : index
    %c1_53 = arith.constant 1 : index
    %c0_54 = arith.constant 0 : index
    %c0_55 = arith.constant 0 : index
    %50 = vector.load %arg8[%c2_52, %c1_53, %c0_54, %c0_55] : memref<3x4x1x8xf32, #tpu.memory_space<vmem>>, vector<1x1x1x8xf32>
    %51 = vector.shape_cast %50 : vector<1x1x1x8xf32> to vector<1x8xf32>
    %52 = vector.broadcast %51 : vector<1x8xf32> to vector<8x8xf32>
    %53 = arith.addf %49, %52 : vector<8x8xf32>
    %c2_56 = arith.constant 2 : index
    %c2_57 = arith.constant 2 : index
    %c0_58 = arith.constant 0 : index
    %c0_59 = arith.constant 0 : index
    %54 = vector.load %arg7[%c2_56, %c2_57, %c0_58, %c0_59] : memref<3x4x32x8xf32, #tpu.memory_space<vmem>>, vector<1x1x32x8xf32>
    %55 = vector.shape_cast %54 : vector<1x1x32x8xf32> to vector<32x8xf32>
    %cst_60 = arith.constant dense<0.000000e+00> : vector<8x8xf32>
    %56 = tpu.matmul %6, %55, %cst_60 {dimension_numbers = #tpu.dot_dimension_numbers<[1], [0], [0], [1], [0, 0, 1, 1], [], []>} : vector<8x32xf32>, vector<32x8xf32>, vector<8x8xf32> -> vector<8x8xf32>
    %c2_61 = arith.constant 2 : index
    %c2_62 = arith.constant 2 : index
    %c0_63 = arith.constant 0 : index
    %c0_64 = arith.constant 0 : index
    %57 = vector.load %arg8[%c2_61, %c2_62, %c0_63, %c0_64] : memref<3x4x1x8xf32, #tpu.memory_space<vmem>>, vector<1x1x1x8xf32>
    %58 = vector.shape_cast %57 : vector<1x1x1x8xf32> to vector<1x8xf32>
    %59 = vector.broadcast %58 : vector<1x8xf32> to vector<8x8xf32>
    %60 = arith.addf %56, %59 : vector<8x8xf32>
    %c2_65 = arith.constant 2 : index
    %c3_66 = arith.constant 3 : index
    %c0_67 = arith.constant 0 : index
    %c0_68 = arith.constant 0 : index
    %61 = vector.load %arg7[%c2_65, %c3_66, %c0_67, %c0_68] : memref<3x4x32x8xf32, #tpu.memory_space<vmem>>, vector<1x1x32x8xf32>
    %62 = vector.shape_cast %61 : vector<1x1x32x8xf32> to vector<32x8xf32>
    %cst_69 = arith.constant dense<0.000000e+00> : vector<8x8xf32>
    %63 = tpu.matmul %6, %62, %cst_69 {dimension_numbers = #tpu.dot_dimension_numbers<[1], [0], [0], [1], [0, 0, 1, 1], [], []>} : vector<8x32xf32>, vector<32x8xf32>, vector<8x8xf32> -> vector<8x8xf32>
    %c2_70 = arith.constant 2 : index
    %c3_71 = arith.constant 3 : index
    %c0_72 = arith.constant 0 : index
    %c0_73 = arith.constant 0 : index
    %64 = vector.load %arg8[%c2_70, %c3_71, %c0_72, %c0_73] : memref<3x4x1x8xf32, #tpu.memory_space<vmem>>, vector<1x1x1x8xf32>
    %65 = vector.shape_cast %64 : vector<1x1x1x8xf32> to vector<1x8xf32>
    %66 = vector.broadcast %65 : vector<1x8xf32> to vector<8x8xf32>
    %67 = arith.addf %63, %66 : vector<8x8xf32>
    %68 = vector.shape_cast %46 : vector<8x8xf32> to vector<1x8x8xf32>
    %69 = vector.shape_cast %53 : vector<8x8xf32> to vector<1x8x8xf32>
    %70 = vector.shape_cast %60 : vector<8x8xf32> to vector<1x8x8xf32>
    %71 = vector.shape_cast %67 : vector<8x8xf32> to vector<1x8x8xf32>
    %72 = tpu.concatenate %68, %69, %70, %71 in 0 : vector<1x8x8xf32>, vector<1x8x8xf32>, vector<1x8x8xf32>, vector<1x8x8xf32> -> vector<4x8x8xf32>
    %c0_74 = arith.constant 0 : index
    %c0_75 = arith.constant 0 : index
    %c0_76 = arith.constant 0 : index
    %73 = vector.load %arg12[%c0_74, %c0_75, %c0_76] : memref<4x8x8xf32, #tpu.memory_space<vmem>>, vector<4x8x8xf32>
    "tpu.trace_start"() <{level = 10 : i32, message = "hqd,hkd->hqk"}> : () -> ()
    %cst_77 = arith.constant dense<0.000000e+00> : vector<4x8x8xf32>
    %74 = tpu.matmul %73, %39, %cst_77 {dimension_numbers = #tpu.dot_dimension_numbers<[2], [2], [1], [1], [0, 0, 0, 1, 1, 1], [0], [0]>} : vector<4x8x8xf32>, vector<4x8x8xf32>, vector<4x8x8xf32> -> vector<4x8x8xf32>
    "tpu.trace_stop"() : () -> ()
    %c0_78 = arith.constant 0 : index
    %c0_79 = arith.constant 0 : index
    %c0_80 = arith.constant 0 : index
    %75 = vector.load %arg6[%c0_78, %c0_79, %c0_80] : memref<1x1x8xf32, #tpu.memory_space<vmem>>, vector<1x1x8xf32>
    %76 = vector.shape_cast %75 : vector<1x1x8xf32> to vector<1x8xf32>
    %77 = vector.shape_cast %76 : vector<1x8xf32> to vector<1x1x8xf32>
    %78 = vector.broadcast %77 : vector<1x1x8xf32> to vector<4x8x8xf32>
    %79 = arith.addf %74, %78 : vector<4x8x8xf32>
    %c0_81 = arith.constant 0 : index
    %c0_82 = arith.constant 0 : index
    %c0_83 = arith.constant 0 : index
    %80 = vector.load %arg13[%c0_81, %c0_82, %c0_83] : memref<4x8x1xf32, #tpu.memory_space<vmem>>, vector<4x8x1xf32>
    %cst_84 = arith.constant dense<0xFF800000> : vector<4x8xf32>
    %81 = vector.multi_reduction <maximumf>, %79, %cst_84 [2] : vector<4x8x8xf32> to vector<4x8xf32>
    %82 = vector.shape_cast %81 : vector<4x8xf32> to vector<4x8x1xf32>
    %83 = arith.maximumf %80, %82 : vector<4x8x1xf32>
    %84 = arith.subf %80, %83 : vector<4x8x1xf32>
    %85 = math.exp %84 : vector<4x8x1xf32>
    %86 = vector.broadcast %83 : vector<4x8x1xf32> to vector<4x8x8xf32>
    %87 = arith.subf %79, %86 : vector<4x8x8xf32>
    %88 = math.exp %87 : vector<4x8x8xf32>
    %c0_85 = arith.constant 0 : index
    %c0_86 = arith.constant 0 : index
    %c0_87 = arith.constant 0 : index
    %89 = vector.load %arg14[%c0_85, %c0_86, %c0_87] : memref<4x8x1xf32, #tpu.memory_space<vmem>>, vector<4x8x1xf32>
    %90 = arith.mulf %85, %89 : vector<4x8x1xf32>
    %cst_88 = arith.constant dense<0.000000e+00> : vector<4x8xf32>
    %91 = vector.multi_reduction <add>, %88, %cst_88 [2] : vector<4x8x8xf32> to vector<4x8xf32>
    %92 = vector.shape_cast %91 : vector<4x8xf32> to vector<4x8x1xf32>
    %93 = arith.addf %90, %92 : vector<4x8x1xf32>
    %c0_89 = arith.constant 0 : index
    %c0_90 = arith.constant 0 : index
    %c0_91 = arith.constant 0 : index
    %94 = vector.load %arg14[%c0_89, %c0_90, %c0_91] : memref<4x8x1xf32, #tpu.memory_space<vmem>>, vector<4x8x1xf32>
    tpu.vector_store %arg14[%c0_89, %c0_90, %c0_91], %93 {strides = array<i32>} : memref<4x8x1xf32, #tpu.memory_space<vmem>>, vector<4x8x1xf32>,
    %c0_92 = arith.constant 0 : index
    %c0_93 = arith.constant 0 : index
    %c0_94 = arith.constant 0 : index
    %95 = vector.load %arg15[%c0_92, %c0_93, %c0_94] : memref<4x8x8xf32, #tpu.memory_space<vmem>>, vector<4x8x8xf32>
    %96 = vector.broadcast %85 : vector<4x8x1xf32> to vector<4x8x8xf32>
    %97 = arith.mulf %96, %95 : vector<4x8x8xf32>
    "tpu.trace_start"() <{level = 10 : i32, message = "hqk,hkd->hqd"}> : () -> ()
    %cst_95 = arith.constant dense<0.000000e+00> : vector<4x8x8xf32>
    %98 = tpu.matmul %88, %72, %cst_95 {dimension_numbers = #tpu.dot_dimension_numbers<[2], [1], [1], [2], [0, 0, 0, 1, 1, 2], [0], [0]>} : vector<4x8x8xf32>, vector<4x8x8xf32>, vector<4x8x8xf32> -> vector<4x8x8xf32>
    "tpu.trace_stop"() : () -> ()
    %99 = arith.addf %97, %98 : vector<4x8x8xf32>
    %c0_96 = arith.constant 0 : index
    %c0_97 = arith.constant 0 : index
    %c0_98 = arith.constant 0 : index
    %100 = vector.load %arg15[%c0_96, %c0_97, %c0_98] : memref<4x8x8xf32, #tpu.memory_space<vmem>>, vector<4x8x8xf32>
    tpu.vector_store %arg15[%c0_96, %c0_97, %c0_98], %99 {strides = array<i32>} : memref<4x8x8xf32, #tpu.memory_space<vmem>>, vector<4x8x8xf32>,
    %c0_99 = arith.constant 0 : index
    %c0_100 = arith.constant 0 : index
    %c0_101 = arith.constant 0 : index
    %101 = vector.load %arg13[%c0_99, %c0_100, %c0_101] : memref<4x8x1xf32, #tpu.memory_space<vmem>>, vector<4x8x1xf32>
    tpu.vector_store %arg13[%c0_99, %c0_100, %c0_101], %83 {strides = array<i32>} : memref<4x8x1xf32, #tpu.memory_space<vmem>>, vector<4x8x1xf32>,
    %c0_i32_102 = arith.constant 0 : i32
    %102 = arith.cmpi eq, %arg2, %c0_i32_102 : i32
    %103 = arith.extui %102 : i1 to i32
    %c0_i32_103 = arith.constant 0 : i32
    %104 = arith.cmpi ne, %103, %c0_i32_103 : i32
    scf.if %104 {
      %c0_104 = arith.constant 0 : index
      %c0_105 = arith.constant 0 : index
      %c0_106 = arith.constant 0 : index
      %105 = vector.load %arg14[%c0_104, %c0_105, %c0_106] : memref<4x8x1xf32, #tpu.memory_space<vmem>>, vector<4x8x1xf32>
      %106 = tpu.reciprocal %105 : vector<4x8x1xf32> -> vector<4x8x1xf32>
      %c0_107 = arith.constant 0 : index
      %c0_108 = arith.constant 0 : index
      %c0_109 = arith.constant 0 : index
      %107 = vector.load %arg15[%c0_107, %c0_108, %c0_109] : memref<4x8x8xf32, #tpu.memory_space<vmem>>, vector<1x8x8xf32>
      %108 = vector.shape_cast %107 : vector<1x8x8xf32> to vector<8x8xf32>
      %109 = vector.extract_strided_slice %106 {offsets = [0, 0, 0], sizes = [1, 8, 1], strides = [1, 1, 1]} : vector<4x8x1xf32> to vector<1x8x1xf32>
      %110 = vector.shape_cast %109 : vector<1x8x1xf32> to vector<8x1xf32>
      %111 = vector.broadcast %110 : vector<8x1xf32> to vector<8x8xf32>
      %112 = arith.mulf %108, %111 : vector<8x8xf32>
      %c0_110 = arith.constant 0 : index
      %c0_111 = arith.constant 0 : index
      %c0_112 = arith.constant 0 : index
      %113 = vector.load %arg9[%c0_110, %c0_111, %c0_112] : memref<4x8x32xf32, #tpu.memory_space<vmem>>, vector<1x8x32xf32>
      %114 = vector.shape_cast %113 : vector<1x8x32xf32> to vector<8x32xf32>
      %cst_113 = arith.constant dense<0.000000e+00> : vector<8x32xf32>
      %115 = tpu.matmul %112, %114, %cst_113 {dimension_numbers = #tpu.dot_dimension_numbers<[1], [0], [0], [1], [0, 0, 1, 1], [], []>} : vector<8x8xf32>, vector<8x32xf32>, vector<8x32xf32> -> vector<8x32xf32>
      %c1_114 = arith.constant 1 : index
      %c0_115 = arith.constant 0 : index
      %c0_116 = arith.constant 0 : index
      %116 = vector.load %arg15[%c1_114, %c0_115, %c0_116] : memref<4x8x8xf32, #tpu.memory_space<vmem>>, vector<1x8x8xf32>
      %117 = vector.shape_cast %116 : vector<1x8x8xf32> to vector<8x8xf32>
      %118 = vector.extract_strided_slice %106 {offsets = [1, 0, 0], sizes = [1, 8, 1], strides = [1, 1, 1]} : vector<4x8x1xf32> to vector<1x8x1xf32>
      %119 = vector.shape_cast %118 : vector<1x8x1xf32> to vector<8x1xf32>
      %120 = vector.broadcast %119 : vector<8x1xf32> to vector<8x8xf32>
      %121 = arith.mulf %117, %120 : vector<8x8xf32>
      %c1_117 = arith.constant 1 : index
      %c0_118 = arith.constant 0 : index
      %c0_119 = arith.constant 0 : index
      %122 = vector.load %arg9[%c1_117, %c0_118, %c0_119] : memref<4x8x32xf32, #tpu.memory_space<vmem>>, vector<1x8x32xf32>
      %123 = vector.shape_cast %122 : vector<1x8x32xf32> to vector<8x32xf32>
      %cst_120 = arith.constant dense<0.000000e+00> : vector<8x32xf32>
      %124 = tpu.matmul %121, %123, %cst_120 {dimension_numbers = #tpu.dot_dimension_numbers<[1], [0], [0], [1], [0, 0, 1, 1], [], []>} : vector<8x8xf32>, vector<8x32xf32>, vector<8x32xf32> -> vector<8x32xf32>
      %125 = arith.addf %115, %124 : vector<8x32xf32>
      %c2_121 = arith.constant 2 : index
      %c0_122 = arith.constant 0 : index
      %c0_123 = arith.constant 0 : index
      %126 = vector.load %arg15[%c2_121, %c0_122, %c0_123] : memref<4x8x8xf32, #tpu.memory_space<vmem>>, vector<1x8x8xf32>
      %127 = vector.shape_cast %126 : vector<1x8x8xf32> to vector<8x8xf32>
      %128 = vector.extract_strided_slice %106 {offsets = [2, 0, 0], sizes = [1, 8, 1], strides = [1, 1, 1]} : vector<4x8x1xf32> to vector<1x8x1xf32>
      %129 = vector.shape_cast %128 : vector<1x8x1xf32> to vector<8x1xf32>
      %130 = vector.broadcast %129 : vector<8x1xf32> to vector<8x8xf32>
      %131 = arith.mulf %127, %130 : vector<8x8xf32>
      %c2_124 = arith.constant 2 : index
      %c0_125 = arith.constant 0 : index
      %c0_126 = arith.constant 0 : index
      %132 = vector.load %arg9[%c2_124, %c0_125, %c0_126] : memref<4x8x32xf32, #tpu.memory_space<vmem>>, vector<1x8x32xf32>
      %133 = vector.shape_cast %132 : vector<1x8x32xf32> to vector<8x32xf32>
      %cst_127 = arith.constant dense<0.000000e+00> : vector<8x32xf32>
      %134 = tpu.matmul %131, %133, %cst_127 {dimension_numbers = #tpu.dot_dimension_numbers<[1], [0], [0], [1], [0, 0, 1, 1], [], []>} : vector<8x8xf32>, vector<8x32xf32>, vector<8x32xf32> -> vector<8x32xf32>
      %135 = arith.addf %125, %134 : vector<8x32xf32>
      %c3_128 = arith.constant 3 : index
      %c0_129 = arith.constant 0 : index
      %c0_130 = arith.constant 0 : index
      %136 = vector.load %arg15[%c3_128, %c0_129, %c0_130] : memref<4x8x8xf32, #tpu.memory_space<vmem>>, vector<1x8x8xf32>
      %137 = vector.shape_cast %136 : vector<1x8x8xf32> to vector<8x8xf32>
      %138 = vector.extract_strided_slice %106 {offsets = [3, 0, 0], sizes = [1, 8, 1], strides = [1, 1, 1]} : vector<4x8x1xf32> to vector<1x8x1xf32>
      %139 = vector.shape_cast %138 : vector<1x8x1xf32> to vector<8x1xf32>
      %140 = vector.broadcast %139 : vector<8x1xf32> to vector<8x8xf32>
      %141 = arith.mulf %137, %140 : vector<8x8xf32>
      %c3_131 = arith.constant 3 : index
      %c0_132 = arith.constant 0 : index
      %c0_133 = arith.constant 0 : index
      %142 = vector.load %arg9[%c3_131, %c0_132, %c0_133] : memref<4x8x32xf32, #tpu.memory_space<vmem>>, vector<1x8x32xf32>
      %143 = vector.shape_cast %142 : vector<1x8x32xf32> to vector<8x32xf32>
      %cst_134 = arith.constant dense<0.000000e+00> : vector<8x32xf32>
      %144 = tpu.matmul %141, %143, %cst_134 {dimension_numbers = #tpu.dot_dimension_numbers<[1], [0], [0], [1], [0, 0, 1, 1], [], []>} : vector<8x8xf32>, vector<8x32xf32>, vector<8x32xf32> -> vector<8x32xf32>
      %145 = arith.addf %135, %144 : vector<8x32xf32>
      %c0_135 = arith.constant 0 : index
      %c0_136 = arith.constant 0 : index
      %146 = vector.load %arg10[%c0_135, %c0_136] : memref<1x32xf32, #tpu.memory_space<vmem>>, vector<1x32xf32>
      %147 = vector.shape_cast %146 : vector<1x32xf32> to vector<32xf32>
      %148 = vector.shape_cast %147 : vector<32xf32> to vector<1x32xf32>
      %149 = vector.broadcast %148 : vector<1x32xf32> to vector<8x32xf32>
      %150 = arith.addf %145, %149 : vector<8x32xf32>
      %c0_137 = arith.constant 0 : index
      %c0_138 = arith.constant 0 : index
      %c0_139 = arith.constant 0 : index
      %151 = vector.load %arg11[%c0_137, %c0_138, %c0_139] : memref<1x8x32xf32, #tpu.memory_space<vmem>>, vector<1x8x32xf32>
      %152 = vector.shape_cast %151 : vector<1x8x32xf32> to vector<8x32xf32>
      %153 = vector.shape_cast %150 : vector<8x32xf32> to vector<1x8x32xf32>
      tpu.vector_store %arg11[%c0_137, %c0_138, %c0_139], %153 {strides = array<i32>} : memref<1x8x32xf32, #tpu.memory_space<vmem>>, vector<1x8x32xf32>,
    } else {
    }
    return
  }
  func.func @transform_0(%arg0: i32, %arg1: i32, %arg2: i32) -> (i32, i32, i32) {
    %c0_i32 = arith.constant 0 : i32
    %c0_i32_0 = arith.constant 0 : i32
    return %arg0, %arg1, %c0_i32 : i32, i32, i32
  }
  func.func @transform_1(%arg0: i32, %arg1: i32, %arg2: i32) -> (i32, i32, i32) {
    %c0_i32 = arith.constant 0 : i32
    %c0_i32_0 = arith.constant 0 : i32
    return %arg0, %arg2, %c0_i32 : i32, i32, i32
  }
  func.func @transform_2(%arg0: i32, %arg1: i32, %arg2: i32) -> (i32, i32, i32) {
    %c0_i32 = arith.constant 0 : i32
    %c0_i32_0 = arith.constant 0 : i32
    return %arg0, %arg2, %c0_i32 : i32, i32, i32
  }
  func.func @transform_3(%arg0: i32, %arg1: i32, %arg2: i32) -> (i32, i32, i32) {
    %c0_i32 = arith.constant 0 : i32
    %c0_i32_0 = arith.constant 0 : i32
    return %arg0, %c0_i32, %arg2 : i32, i32, i32
  }
  func.func @transform_4(%arg0: i32, %arg1: i32, %arg2: i32) -> (i32, i32, i32, i32) {
    %c0_i32 = arith.constant 0 : i32
    %c0_i32_0 = arith.constant 0 : i32
    %c0_i32_1 = arith.constant 0 : i32
    %c0_i32_2 = arith.constant 0 : i32
    %c0_i32_3 = arith.constant 0 : i32
    return %c0_i32, %c0_i32_0, %c0_i32_1, %c0_i32_2 : i32, i32, i32, i32
  }
  func.func @transform_5(%arg0: i32, %arg1: i32, %arg2: i32) -> (i32, i32, i32, i32) {
    %c0_i32 = arith.constant 0 : i32
    %c0_i32_0 = arith.constant 0 : i32
    %c0_i32_1 = arith.constant 0 : i32
    %c0_i32_2 = arith.constant 0 : i32
    %c0_i32_3 = arith.constant 0 : i32
    return %c0_i32, %c0_i32_0, %c0_i32_1, %c0_i32_2 : i32, i32, i32, i32
  }
  func.func @transform_6(%arg0: i32, %arg1: i32, %arg2: i32) -> (i32, i32, i32) {
    %c0_i32 = arith.constant 0 : i32
    %c0_i32_0 = arith.constant 0 : i32
    %c0_i32_1 = arith.constant 0 : i32
    %c0_i32_2 = arith.constant 0 : i32
    return %c0_i32, %c0_i32_0, %c0_i32_1 : i32, i32, i32
  }
  func.func @transform_7(%arg0: i32, %arg1: i32, %arg2: i32) -> (i32, i32) {
    %c0_i32 = arith.constant 0 : i32
    %c0_i32_0 = arith.constant 0 : i32
    %c0_i32_1 = arith.constant 0 : i32
    return %c0_i32, %c0_i32_0 : i32, i32
  }
  func.func @transform_8(%arg0: i32, %arg1: i32, %arg2: i32) -> (i32, i32, i32) {
    %c0_i32 = arith.constant 0 : i32
    %c0_i32_0 = arith.constant 0 : i32
    return %arg0, %arg1, %c0_i32 : i32, i32, i32
  }
}

</mosaic_0001>

<llo_original>
// kernel: tpu_custom_call.1
$region0: #{tpu_custom_call.1}
  #allocation0 [shape = 'u32[]', space=smem, size = 0x4, offset = 0x4, fixed_abs, tag = 'smem constant byte address 0x4 - core index']
  #allocation1 [shape = 'u32[144,128]{1,0:T(1,128)}', space=vmem, size = 0x12000, scoped, tag = 'internal scratch']
  #allocation2 [shape = 'f32[4,8,8]{2,1,0:T(8,128)}', space=vmem, size = 0x4000, scoped, tag = 'scratch operand']
  #allocation3 [shape = 'f32[4,8,1]{2,1,0:T(8,128)}', space=vmem, size = 0x4000, scoped, tag = 'scratch operand']
  #allocation4 [shape = 'f32[4,8,1]{2,1,0:T(8,128)}', space=vmem, size = 0x4000, scoped, tag = 'scratch operand']
  #allocation5 [shape = 'f32[4,8,8]{2,1,0:T(8,128)}', space=vmem, size = 0x4000, scoped, tag = 'scratch operand']
  %s0 = inlined_call_operand.vmem [shape: f32[2,8,32], index: 0, kind: input, shape index: {}]
  %s1 = inlined_call_operand.vmem [shape: f32[2,8,32], index: 1, kind: input, shape index: {}]
  %s2 = inlined_call_operand.vmem [shape: f32[2,8,32], index: 2, kind: input, shape index: {}]
  %s3 = inlined_call_operand.vmem [shape: f32[2,1,8], index: 3, kind: input, shape index: {}]
  %s4 = inlined_call_operand.vmem [shape: f32[3,4,32,8], index: 4, kind: input, shape index: {}]
  %s5 = inlined_call_operand.vmem [shape: f32[3,4,1,8], index: 5, kind: input, shape index: {}]
  %s6 = inlined_call_operand.vmem [shape: f32[4,8,32], index: 6, kind: input, shape index: {}]
  %s7 = inlined_call_operand.vmem [shape: f32[1,32], index: 7, kind: input, shape index: {}]
  %s8 = inlined_call_operand.hbm [shape: f32[2,8,32], index: 8, kind: output, shape index: {}]
  %s9 = sld [smem:[#allocation0]]
  $region73: #{tpu_custom_call.1} parent=0
    _
  %s11 = ssub.s32 1, %s9
  %s12 = scalar_select 0, %s11, %s9
  $region1: #{tpu_custom_call.1} parent=0
    #allocation6 [shape = 'u8[8192]{0}', space=vmem, size = 0x2000, scoped, tag = 'output window, operand 0']
    #allocation7 [shape = 's32[2]{0}', space=sflag, size = 0x8, scoped, tag = 'scoped memory for tpu_custom_call.1']
    %13 = vsyncpa [#allocation7], 0
    %s14 = scalar_lea.sflag [#allocation7], 1
    %15 = vsyncpa %s14, 0
    loop: start=0, step=1, limit=4
    $region2: #{tpu_custom_call.1} parent=1 // loop_pre_header
      _
    $region3: #{tpu_custom_call.1} parent=1 // loop_header
      %s17 = sphi 0, %s21
      %p18 = scmp.ge.s32.totalorder %s17, 4
      %s24 = sphi 0, %s43
      %s25 = sphi 0, %s39
      %s26 = sphi 0, %s35
      %s27 = sphi 0, %s24
      %s28 = sphi 0, %s25
      %s29 = sphi 0, %s26
      %s30 = sphi 0, %s27
      %s31 = sphi 0, %s28
      %s32 = sphi 0, %s29
      %s48 = sphi 0, %s50
      %s51 = sphi 0, %s48
      %s52 = sphi 0, %s51
      %s68 = sphi 0, %s52
      %s76 = sphi 0, %s78
      %s79 = sphi 0, %s76
      %s80 = sphi 0, %s79
      %s96 = sphi 0, %s80
      %s104 = sphi 0, %s106
      %s107 = sphi 0, %s104
      %s108 = sphi 0, %s107
      %s124 = sphi 0, %s108
      %s132 = sphi 0, %s134
      %s135 = sphi 0, %s132
      %s136 = sphi 0, %s135
      %s152 = sphi 0, %s136
      %s156 = sphi 0, %s156
      %s158 = sphi 0, %s156
      %s159 = sphi 0, %s158
      %s173 = sphi 0, %s159
      %s177 = sphi 0, %s177
      %s179 = sphi 0, %s177
      %s180 = sphi 0, %s179
      %s194 = sphi 0, %s180
      %s198 = sphi 0, %s198
      %s200 = sphi 0, %s198
      %s201 = sphi 0, %s200
      %s215 = sphi 0, %s201
      %s219 = sphi 0, %s219
      %s221 = sphi 0, %s219
      %s222 = sphi 0, %s221
      %s236 = sphi 0, %s222
      %s244 = sphi 0, %s246
      %s247 = sphi 0, %s244
      %s248 = sphi 0, %s247
      %s264 = sphi 0, %s248
    $region4: #{tpu_custom_call.1} parent=1 // loop_header_branch
      %20 = sbr.rel (%p18) target = $region8
    $region5: #{tpu_custom_call.1} parent=1 // loop_body
      %s22 = ssub.s32 %s17, 1
      %s23 = ssub.s32 %s17, 2
      %s33 = sadd.s32 1, %s26
      %p34 = scmp.ge.s32.totalorder %s33, 1
      %s35 = scalar_select %p34, 0, %s33
      %s36 = sadd.s32 1, %s25
      %s37 = scalar_select %p34, %s36, %s25
      %p38 = scmp.ge.s32.totalorder %s37, 1
      %s39 = scalar_select %p38, 0, %s37
      %s40 = sadd.s32 1, %s24
      %s41 = scalar_select %p38, %s40, %s24
      %p42 = scmp.ge.s32.totalorder %s41, 2
      %s43 = scalar_select %p42, 0, %s41
      %s44 = ssub.s32 %s24, %s43
      %s45 = ssub.s32 %s25, %s39
      %s46 = sor.u32 %s44, %s45
      %p47 = scmp.eq.s32.totalorder %s46, 0
      %s49 = sadd.s32 %s48, 1
      %s50 = scalar_select %p47, %s48, %s49
      %p53 = pneg %p47
      %p54 = scmp.eq.s32.totalorder %s17, 1
      %p55 = por %p53, %p54
      %p56 = scmp.ne.s32.totalorder %s48, %s51
      %p57 = scmp.eq.s32.totalorder %s17, 0
      %p58 = por %p56, %p57
      %p59 = scmp.ne.s32.totalorder %s48, %s51
      %p60 = scmp.eq.s32.totalorder %s22, 1
      %p61 = por %p59, %p60
      %p62 = scmp.ne.s32.totalorder %s51, %s52
      %p63 = scmp.eq.s32.totalorder %s22, 0
      %p64 = por %p62, %p63
      %p65 = scmp.ne.s32.totalorder %s51, %s52
      %p66 = scmp.eq.s32.totalorder %s23, 1
      %p67 = por %p65, %p66
      %p69 = scmp.ne.s32.totalorder %s52, %s68
      %p70 = scmp.eq.s32.totalorder %s23, 0
      %p71 = por %p69, %p70
      %s72 = ssub.s32 %s24, %s43
      %s73 = ssub.s32 %s26, %s35
      %s74 = sor.u32 %s72, %s73
      %p75 = scmp.eq.s32.totalorder %s74, 0
      %s77 = sadd.s32 %s76, 1
      %s78 = scalar_select %p75, %s76, %s77
      %p81 = pneg %p75
      %p82 = scmp.eq.s32.totalorder %s17, 1
      %p83 = por %p81, %p82
      %p84 = scmp.ne.s32.totalorder %s76, %s79
      %p85 = scmp.eq.s32.totalorder %s17, 0
      %p86 = por %p84, %p85
      %p87 = scmp.ne.s32.totalorder %s76, %s79
      %p88 = scmp.eq.s32.totalorder %s22, 1
      %p89 = por %p87, %p88
      %p90 = scmp.ne.s32.totalorder %s79, %s80
      %p91 = scmp.eq.s32.totalorder %s22, 0
      %p92 = por %p90, %p91
      %p93 = scmp.ne.s32.totalorder %s79, %s80
      %p94 = scmp.eq.s32.totalorder %s23, 1
      %p95 = por %p93, %p94
      %p97 = scmp.ne.s32.totalorder %s80, %s96
      %p98 = scmp.eq.s32.totalorder %s23, 0
      %p99 = por %p97, %p98
      %s100 = ssub.s32 %s24, %s43
      %s101 = ssub.s32 %s26, %s35
      %s102 = sor.u32 %s100, %s101
      %p103 = scmp.eq.s32.totalorder %s102, 0
      %s105 = sadd.s32 %s104, 1
      %s106 = scalar_select %p103, %s104, %s105
      %p109 = pneg %p103
      %p110 = scmp.eq.s32.totalorder %s17, 1
      %p111 = por %p109, %p110
      %p112 = scmp.ne.s32.totalorder %s104, %s107
      %p113 = scmp.eq.s32.totalorder %s17, 0
      %p114 = por %p112, %p113
      %p115 = scmp.ne.s32.totalorder %s104, %s107
      %p116 = scmp.eq.s32.totalorder %s22, 1
      %p117 = por %p115, %p116
      %p118 = scmp.ne.s32.totalorder %s107, %s108
      %p119 = scmp.eq.s32.totalorder %s22, 0
      %p120 = por %p118, %p119
      %p121 = scmp.ne.s32.totalorder %s107, %s108
      %p122 = scmp.eq.s32.totalorder %s23, 1
      %p123 = por %p121, %p122
      %p125 = scmp.ne.s32.totalorder %s108, %s124
      %p126 = scmp.eq.s32.totalorder %s23, 0
      %p127 = por %p125, %p126
      %s128 = ssub.s32 %s24, %s43
      %s129 = ssub.s32 %s26, %s35
      %s130 = sor.u32 %s128, %s129
      %p131 = scmp.eq.s32.totalorder %s130, 0
      %s133 = sadd.s32 %s132, 1
      %s134 = scalar_select %p131, %s132, %s133
      %p137 = pneg %p131
      %p138 = scmp.eq.s32.totalorder %s17, 1
      %p139 = por %p137, %p138
      %p140 = scmp.ne.s32.totalorder %s132, %s135
      %p141 = scmp.eq.s32.totalorder %s17, 0
      %p142 = por %p140, %p141
      %p143 = scmp.ne.s32.totalorder %s132, %s135
      %p144 = scmp.eq.s32.totalorder %s22, 1
      %p145 = por %p143, %p144
      %p146 = scmp.ne.s32.totalorder %s135, %s136
      %p147 = scmp.eq.s32.totalorder %s22, 0
      %p148 = por %p146, %p147
      %p149 = scmp.ne.s32.totalorder %s135, %s136
      %p150 = scmp.eq.s32.totalorder %s23, 1
      %p151 = por %p149, %p150
      %p153 = scmp.ne.s32.totalorder %s136, %s152
      %p154 = scmp.eq.s32.totalorder %s23, 0
      %p155 = por %p153, %p154
      %s157 = sadd.s32 %s156, 1
      %p160 = scmp.eq.s32.totalorder %s17, 1
      %p161 = scmp.ne.s32.totalorder %s156, %s158
      %p162 = scmp.eq.s32.totalorder %s17, 0
      %p163 = por %p161, %p162
      %p164 = scmp.ne.s32.totalorder %s156, %s158
      %p165 = scmp.eq.s32.totalorder %s22, 1
      %p166 = por %p164, %p165
      %p167 = scmp.ne.s32.totalorder %s158, %s159
      %p168 = scmp.eq.s32.totalorder %s22, 0
      %p169 = por %p167, %p168
      %p170 = scmp.ne.s32.totalorder %s158, %s159
      %p171 = scmp.eq.s32.totalorder %s23, 1
      %p172 = por %p170, %p171
      %p174 = scmp.ne.s32.totalorder %s159, %s173
      %p175 = scmp.eq.s32.totalorder %s23, 0
      %p176 = por %p174, %p175
      %s178 = sadd.s32 %s177, 1
      %p181 = scmp.eq.s32.totalorder %s17, 1
      %p182 = scmp.ne.s32.totalorder %s177, %s179
      %p183 = scmp.eq.s32.totalorder %s17, 0
      %p184 = por %p182, %p183
      %p185 = scmp.ne.s32.totalorder %s177, %s179
      %p186 = scmp.eq.s32.totalorder %s22, 1
      %p187 = por %p185, %p186
      %p188 = scmp.ne.s32.totalorder %s179, %s180
      %p189 = scmp.eq.s32.totalorder %s22, 0
      %p190 = por %p188, %p189
      %p191 = scmp.ne.s32.totalorder %s179, %s180
      %p192 = scmp.eq.s32.totalorder %s23, 1
      %p193 = por %p191, %p192
      %p195 = scmp.ne.s32.totalorder %s180, %s194
      %p196 = scmp.eq.s32.totalorder %s23, 0
      %p197 = por %p195, %p196
      %s199 = sadd.s32 %s198, 1
      %p202 = scmp.eq.s32.totalorder %s17, 1
      %p203 = scmp.ne.s32.totalorder %s198, %s200
      %p204 = scmp.eq.s32.totalorder %s17, 0
      %p205 = por %p203, %p204
      %p206 = scmp.ne.s32.totalorder %s198, %s200
      %p207 = scmp.eq.s32.totalorder %s22, 1
      %p208 = por %p206, %p207
      %p209 = scmp.ne.s32.totalorder %s200, %s201
      %p210 = scmp.eq.s32.totalorder %s22, 0
      %p211 = por %p209, %p210
      %p212 = scmp.ne.s32.totalorder %s200, %s201
      %p213 = scmp.eq.s32.totalorder %s23, 1
      %p214 = por %p212, %p213
      %p216 = scmp.ne.s32.totalorder %s201, %s215
      %p217 = scmp.eq.s32.totalorder %s23, 0
      %p218 = por %p216, %p217
      %s220 = sadd.s32 %s219, 1
      %p223 = scmp.eq.s32.totalorder %s17, 1
      %p224 = scmp.ne.s32.totalorder %s219, %s221
      %p225 = scmp.eq.s32.totalorder %s17, 0
      %p226 = por %p224, %p225
      %p227 = scmp.ne.s32.totalorder %s219, %s221
      %p228 = scmp.eq.s32.totalorder %s22, 1
      %p229 = por %p227, %p228
      %p230 = scmp.ne.s32.totalorder %s221, %s222
      %p231 = scmp.eq.s32.totalorder %s22, 0
      %p232 = por %p230, %p231
      %p233 = scmp.ne.s32.totalorder %s221, %s222
      %p234 = scmp.eq.s32.totalorder %s23, 1
      %p235 = por %p233, %p234
      %p237 = scmp.ne.s32.totalorder %s222, %s236
      %p238 = scmp.eq.s32.totalorder %s23, 0
      %p239 = por %p237, %p238
      %s240 = ssub.s32 %s24, %s43
      %s241 = ssub.s32 %s25, %s39
      %s242 = sor.u32 %s240, %s241
      %p243 = scmp.eq.s32.totalorder %s242, 0
      %s245 = sadd.s32 %s244, 1
      %s246 = scalar_select %p243, %s244, %s245
      %p249 = pneg %p243
      %p250 = scmp.eq.s32.totalorder %s17, 1
      %p251 = por %p249, %p250
      %p252 = scmp.ne.s32.totalorder %s244, %s247
      %p253 = scmp.eq.s32.totalorder %s17, 0
      %p254 = por %p252, %p253
      %p255 = scmp.ne.s32.totalorder %s244, %s247
      %p256 = scmp.eq.s32.totalorder %s22, 1
      %p257 = por %p255, %p256
      %p258 = scmp.ne.s32.totalorder %s247, %s248
      %p259 = scmp.eq.s32.totalorder %s22, 0
      %p260 = por %p258, %p259
      %p261 = scmp.ne.s32.totalorder %s247, %s248
      %p262 = scmp.eq.s32.totalorder %s23, 1
      %p263 = por %p261, %p262
      %p265 = scmp.ne.s32.totalorder %s248, %s264
      %p266 = scmp.eq.s32.totalorder %s23, 0
      %p267 = por %p265, %p266
      %p268 = scmp.le.s32.totalorder 1, %s17
      %p269 = scmp.lt.s32.totalorder %s17, 3
      %p270 = pnand %p268, %p269
      %p271 = pneg %p270
      // Predicated region
      $region9: #{tpu_custom_call.1} parent=5 // pred_check
        _
      $region10: #{tpu_custom_call.1} parent=5 // pred_check_branch
        %273 = sbr.rel (%p270) target = $region12
      $region11: #{tpu_custom_call.1} parent=5 // pred_region
        %s274 = ssub.s32 %s17, 1
        // Predicated region
        $region13: #{tpu_custom_call.1} parent=11 // pred_check
          %p275 = pneg %p169
        $region14: #{tpu_custom_call.1} parent=11 // pred_check_branch
          %277 = sbr.rel (%p275) target = $region16
        $region15: #{tpu_custom_call.1} parent=11 // pred_region
          _
        $region16: #{tpu_custom_call.1} parent=11 // pred_fallthru
          _
        // Predicated region
        $region17: #{tpu_custom_call.1} parent=11 // pred_check
          %p278 = pneg %p190
        $region18: #{tpu_custom_call.1} parent=11 // pred_check_branch
          %280 = sbr.rel (%p278) target = $region20
        $region19: #{tpu_custom_call.1} parent=11 // pred_region
          _
        $region20: #{tpu_custom_call.1} parent=11 // pred_fallthru
          _
        // Predicated region
        $region21: #{tpu_custom_call.1} parent=11 // pred_check
          %p281 = pneg %p211
        $region22: #{tpu_custom_call.1} parent=11 // pred_check_branch
          %283 = sbr.rel (%p281) target = $region24
        $region23: #{tpu_custom_call.1} parent=11 // pred_region
          _
        $region24: #{tpu_custom_call.1} parent=11 // pred_fallthru
          _
        // Predicated region
        $region25: #{tpu_custom_call.1} parent=11 // pred_check
          %p284 = pneg %p232
        $region26: #{tpu_custom_call.1} parent=11 // pred_check_branch
          %286 = sbr.rel (%p284) target = $region28
        $region27: #{tpu_custom_call.1} parent=11 // pred_region
          _
        $region28: #{tpu_custom_call.1} parent=11 // pred_fallthru
          _
      $region12: #{tpu_custom_call.1} parent=5 // pred_fallthru
        _
      %p287 = scmp.lt.s32.totalorder %s17, 2
      // Predicated region
      $region29: #{tpu_custom_call.1} parent=5 // pred_check
        %p288 = pneg %p287
      $region30: #{tpu_custom_call.1} parent=5 // pred_check_branch
        %290 = sbr.rel (%p288) target = $region32
      $region31: #{tpu_custom_call.1} parent=5 // pred_region
        // Predicated region
        $region33: #{tpu_custom_call.1} parent=31 // pred_check
          %p291 = pneg %p58
        $region34: #{tpu_custom_call.1} parent=31 // pred_check_branch
          %293 = sbr.rel (%p291) target = $region36
        $region35: #{tpu_custom_call.1} parent=31 // pred_region
          %p294 = scmp.lt.s32.totalorder %s24, 1
          %s295 = scalar_select %p294, %s24, 1
          %p296 = scmp.lt.s32.totalorder %s25, 0
          %s297 = scalar_select %p296, %s25, 0
          %s298 = sadd.s32 %s297, %s295
          %s299 = smul.addr %s298, 8
          %s300 = scalar_lea.vmem %s0, %s299
        $region36: #{tpu_custom_call.1} parent=31 // pred_fallthru
          _
        // Predicated region
        $region37: #{tpu_custom_call.1} parent=31 // pred_check
          %p301 = pneg %p86
        $region38: #{tpu_custom_call.1} parent=31 // pred_check_branch
          %303 = sbr.rel (%p301) target = $region40
        $region39: #{tpu_custom_call.1} parent=31 // pred_region
          %p304 = scmp.lt.s32.totalorder %s24, 1
          %s305 = scalar_select %p304, %s24, 1
          %p306 = scmp.lt.s32.totalorder %s26, 0
          %s307 = scalar_select %p306, %s26, 0
          %s308 = sadd.s32 %s307, %s305
          %s309 = smul.addr %s308, 8
          %s310 = scalar_lea.vmem %s1, %s309
        $region40: #{tpu_custom_call.1} parent=31 // pred_fallthru
          _
        // Predicated region
        $region41: #{tpu_custom_call.1} parent=31 // pred_check
          %p311 = pneg %p114
        $region42: #{tpu_custom_call.1} parent=31 // pred_check_branch
          %313 = sbr.rel (%p311) target = $region44
        $region43: #{tpu_custom_call.1} parent=31 // pred_region
          %p314 = scmp.lt.s32.totalorder %s24, 1
          %s315 = scalar_select %p314, %s24, 1
          %p316 = scmp.lt.s32.totalorder %s26, 0
          %s317 = scalar_select %p316, %s26, 0
          %s318 = sadd.s32 %s317, %s315
          %s319 = smul.addr %s318, 8
          %s320 = scalar_lea.vmem %s2, %s319
        $region44: #{tpu_custom_call.1} parent=31 // pred_fallthru
          _
        // Predicated region
        $region45: #{tpu_custom_call.1} parent=31 // pred_check
          %p321 = pneg %p142
        $region46: #{tpu_custom_call.1} parent=31 // pred_check_branch
          %323 = sbr.rel (%p321) target = $region48
        $region47: #{tpu_custom_call.1} parent=31 // pred_region
          %p324 = scmp.lt.s32.totalorder %s24, 1
          %s325 = scalar_select %p324, %s24, 1
          %p326 = scmp.lt.s32.totalorder %s26, 0
          %s327 = scalar_select %p326, %s26, 0
          %s328 = sadd.s32 %s327, %s325
          %s329 = scalar_lea.vmem %s3, %s328
        $region48: #{tpu_custom_call.1} parent=31 // pred_fallthru
          _
      $region32: #{tpu_custom_call.1} parent=5 // pred_fallthru
        _
      %p330 = scmp.le.s32.totalorder 1, %s17
      %p331 = scmp.lt.s32.totalorder %s17, 3
      %p332 = pnand %p330, %p331
      %p333 = pneg %p332
      // Predicated region
      $region49: #{tpu_custom_call.1} parent=5 // pred_check
        _
      $region50: #{tpu_custom_call.1} parent=5 // pred_check_branch
        %335 = sbr.rel (%p332) target = $region52
      $region51: #{tpu_custom_call.1} parent=5 // pred_region
        %s336 = ssub.s32 %s17, 1
        %p337 = scmp.lt.s32.totalorder %s27, 1
        %s338 = scalar_select %p337, %s27, 1
        %p339 = scmp.lt.s32.totalorder %s28, 0
        %s340 = scalar_select %p339, %s28, 0
        %s341 = sadd.s32 %s340, %s338
        %s342 = smul.addr %s341, 8
        %s343 = scalar_lea.vmem %s0, %s342
        %p344 = pneg %p64
        %p345 = pneg %p61
        %p346 = scmp.lt.s32.totalorder %s27, 1
        %s347 = scalar_select %p346, %s27, 1
        %p348 = scmp.lt.s32.totalorder %s29, 0
        %s349 = scalar_select %p348, %s29, 0
        %s350 = sadd.s32 %s349, %s347
        %s351 = smul.addr %s350, 8
        %s352 = scalar_lea.vmem %s1, %s351
        %p353 = pneg %p92
        %p354 = pneg %p89
        %p355 = scmp.lt.s32.totalorder %s27, 1
        %s356 = scalar_select %p355, %s27, 1
        %p357 = scmp.lt.s32.totalorder %s29, 0
        %s358 = scalar_select %p357, %s29, 0
        %s359 = sadd.s32 %s358, %s356
        %s360 = smul.addr %s359, 8
        %s361 = scalar_lea.vmem %s2, %s360
        %p362 = pneg %p120
        %p363 = pneg %p117
        %p364 = scmp.lt.s32.totalorder %s27, 1
        %s365 = scalar_select %p364, %s27, 1
        %p366 = scmp.lt.s32.totalorder %s29, 0
        %s367 = scalar_select %p366, %s29, 0
        %s368 = sadd.s32 %s367, %s365
        %s369 = scalar_lea.vmem %s3, %s368
        %p370 = pneg %p148
        %p371 = pneg %p145
        %p372 = pneg %p169
        %p373 = pneg %p166
        %p374 = pneg %p190
        %p375 = pneg %p187
        %p376 = pneg %p211
        %p377 = pneg %p208
        %p378 = pneg %p232
        %p379 = pneg %p229
        %p380 = pneg %p260
        %p381 = pneg %p257
        %s382 = sand.u32 %s247, 1
        %s383 = scalar_lea.sflag [#allocation7], %s382
        %s384 = sand.u32 %s247, 1
        %s385 = smul.addr %s384, 8
        %s386 = scalar_lea.vmem [#allocation6], %s385
        %p387 = scmp.lt.s32.totalorder %s27, 1
        %s388 = scalar_select %p387, %s27, 1
        %p389 = scmp.lt.s32.totalorder %s28, 0
        %s390 = scalar_select %p389, %s28, 0
        %s391 = sadd.s32 %s390, %s388
        %s392 = smul.addr %s391, 8
        %s393 = scalar_lea.vmem %s0, %s392
        %p394 = scmp.lt.s32.totalorder %s27, 1
        %s395 = scalar_select %p394, %s27, 1
        %p396 = scmp.lt.s32.totalorder %s29, 0
        %s397 = scalar_select %p396, %s29, 0
        %s398 = sadd.s32 %s397, %s395
        %s399 = smul.addr %s398, 8
        %s400 = scalar_lea.vmem %s1, %s399
        %p401 = scmp.lt.s32.totalorder %s27, 1
        %s402 = scalar_select %p401, %s27, 1
        %p403 = scmp.lt.s32.totalorder %s29, 0
        %s404 = scalar_select %p403, %s29, 0
        %s405 = sadd.s32 %s404, %s402
        %s406 = smul.addr %s405, 8
        %s407 = scalar_lea.vmem %s2, %s406
        %p408 = scmp.lt.s32.totalorder %s27, 1
        %s409 = scalar_select %p408, %s27, 1
        %p410 = scmp.lt.s32.totalorder %s29, 0
        %s411 = scalar_select %p410, %s29, 0
        %s412 = sadd.s32 %s411, %s409
        %s413 = scalar_lea.vmem %s3, %s412
        %p414 = scmp.eq.s32.totalorder %s29, 0
        // Predicated region
        $region53: #{tpu_custom_call.1} parent=51 // pred_check
          %p415 = pneg %p414
        $region54: #{tpu_custom_call.1} parent=51 // pred_check_branch
          %417 = sbr.rel (%p415) target = $region56
        $region55: #{tpu_custom_call.1} parent=51 // pred_region
          %v418 = vld [vmem:[%s393] sm:$0xff]
          %v419 = vld [vmem:[%s4] sm:$0xff]
          %v420 = vld [vmem:[%s4 + $0x8] sm:$0xff]
          %v421 = vld [vmem:[%s4 + $0x10] sm:$0xff]
          %v422 = vld [vmem:[%s4 + $0x18] sm:$0xff]
          %v423 = vld [vmem:[%s5] sm:$0x1]
          %v425 = vlaneseq
          %v426 = vshrl.u32 %v425, 7
          %v427 = vsub.s32 0, %v426
          %v428 = vrot.slane %v423, %v427
          %vm430 = vcmask 261120
          %v432 = vsel %vm430, %v418, 0
          %434 = vmatprep.subr.mxu0 0.0
          %435 = vmatpush1.msra.mxu0 %v419
          %436 = vmatprep.subr.mxu0 0.0
          %437 = vmatpush1.msra.mxu0 %v420
          %438 = vmatprep.subr.mxu0 0.0
          %439 = vmatpush1.msra.mxu0 %v421
          %440 = vmatprep.subr.mxu0 0.0
          %441 = vmatpush1.msra.mxu0 %v422
          %442 = vmatprep.subr.mxu0 0.0
          %443 = vmatpush1.msra.mxu0 0.0
          %444 = vmatprep.subr.mxu0 0.0
          %445 = vmatpush1.msra.mxu0 0.0
          %446 = vmatprep.subr.mxu0 0.0
          %447 = vmatpush1.msra.mxu0 0.0
          %448 = vmatprep.subr.mxu0 0.0
          %449 = vmatpush1.msra.mxu0 0.0
          %450 = vmatprep.subr.mxu0 0.0
          %451 = vmatpush1.msra.mxu0 0.0
          %452 = vmatprep.subr.mxu0 0.0
          %453 = vmatpush1.msra.mxu0 0.0
          %454 = vmatprep.subr.mxu0 0.0
          %455 = vmatpush1.msra.mxu0 0.0
          %456 = vmatprep.subr.mxu0 0.0
          %457 = vmatpush1.msra.mxu0 0.0
          %458 = vmatprep.subr.mxu0 0.0
          %459 = vmatpush1.msra.mxu0 0.0
          %460 = vmatprep.subr.mxu0 0.0
          %461 = vmatpush1.msra.mxu0 0.0
          %462 = vmatprep.subr.mxu0 0.0
          %463 = vmatpush1.msra.mxu0 0.0
          %464 = vmatprep.subr.mxu0 0.0
          %465 = vmatpush1.msra.mxu0 0.0
          %466 = vmatprep.subr.mxu0 0.0
          %467 = vmatpush1.msra.mxu0 0.0
          %468 = vmatprep.subr.mxu0 0.0
          %469 = vmatpush1.msra.mxu0 0.0
          %470 = vmatprep.subr.mxu0 0.0
          %471 = vmatpush1.msra.mxu0 0.0
          %472 = vmatprep.subr.mxu0 0.0
          %473 = vmatpush1.msra.mxu0 0.0
          %474 = vmatprep.subr.mxu0 0.0
          %475 = vmatpush1.msra.mxu0 0.0
          %476 = vmatprep.subr.mxu0 0.0
          %477 = vmatpush1.msra.mxu0 0.0
          %478 = vmatprep.subr.mxu0 0.0
          %479 = vmatpush1.msra.mxu0 0.0
          %480 = vmatprep.subr.mxu0 0.0
          %481 = vmatpush1.msra.mxu0 0.0
          %482 = vmatprep.subr.mxu0 0.0
          %483 = vmatpush1.msra.mxu0 0.0
          %484 = vmatprep.subr.mxu0 0.0
          %485 = vmatpush1.msra.mxu0 0.0
          %486 = vmatprep.subr.mxu0 0.0
          %487 = vmatpush1.msra.mxu0 0.0
          %488 = vmatprep.subr.mxu0 0.0
          %489 = vmatpush1.msra.mxu0 0.0
          %490 = vmatprep.subr.mxu0 0.0
          %491 = vmatpush1.msra.mxu0 0.0
          %492 = vmatprep.subr.mxu0 0.0
          %493 = vmatpush1.msra.mxu0 0.0
          %494 = vmatprep.subr.mxu0 0.0
          %495 = vmatpush1.msra.mxu0 0.0
          %496 = vmatprep.subr.mxu0 0.0
          %497 = vmatpush1.msra.mxu0 0.0
          %498 = vmatprep.mubr.f32.mxu0 0.0
          %499 = vmatmul.mubr.f32.gmra.mrb[0].mxu0 %v432
          %v500 = vpop.f32.mrb[0].mxu0
          %v501 = vadd.f32 %v428, %v500
          %v502 = vpop.f32.mrb[0].mxu0
          %503 = vdwg.mxu0
          %v504 = vmul.f32 %v501, 0.35355338
          %vm505 = vcmask 64512
          %506 = vst.msk [vmem:[#allocation2] sm:$0xff] %vm505, %v504
          %s507 = scalar_lea.vmem %s4, 32
          %v508 = vld [vmem:[%s507] sm:$0xff]
          %v509 = vld [vmem:[%s507 + $0x8] sm:$0xff]
          %v510 = vld [vmem:[%s507 + $0x10] sm:$0xff]
          %v511 = vld [vmem:[%s507 + $0x18] sm:$0xff]
          %s512 = scalar_lea.vmem %s5, 1
          %v513 = vld [vmem:[%s512] sm:$0x1]
          %v515 = vlaneseq
          %v516 = vshrl.u32 %v515, 7
          %v517 = vsub.s32 0, %v516
          %v518 = vrot.slane %v513, %v517
          %520 = vmatprep.subr.mxu0 0.0
          %521 = vmatpush1.msra.mxu0 %v508
          %522 = vmatprep.subr.mxu0 0.0
          %523 = vmatpush1.msra.mxu0 %v509
          %524 = vmatprep.subr.mxu0 0.0
          %525 = vmatpush1.msra.mxu0 %v510
          %526 = vmatprep.subr.mxu0 0.0
          %527 = vmatpush1.msra.mxu0 %v511
          %528 = vmatprep.subr.mxu0 0.0
          %529 = vmatpush1.msra.mxu0 0.0
          %530 = vmatprep.subr.mxu0 0.0
          %531 = vmatpush1.msra.mxu0 0.0
          %532 = vmatprep.subr.mxu0 0.0
          %533 = vmatpush1.msra.mxu0 0.0
          %534 = vmatprep.subr.mxu0 0.0
          %535 = vmatpush1.msra.mxu0 0.0
          %536 = vmatprep.subr.mxu0 0.0
          %537 = vmatpush1.msra.mxu0 0.0
          %538 = vmatprep.subr.mxu0 0.0
          %539 = vmatpush1.msra.mxu0 0.0
          %540 = vmatprep.subr.mxu0 0.0
          %541 = vmatpush1.msra.mxu0 0.0
          %542 = vmatprep.subr.mxu0 0.0
          %543 = vmatpush1.msra.mxu0 0.0
          %544 = vmatprep.subr.mxu0 0.0
          %545 = vmatpush1.msra.mxu0 0.0
          %546 = vmatprep.subr.mxu0 0.0
          %547 = vmatpush1.msra.mxu0 0.0
          %548 = vmatprep.subr.mxu0 0.0
          %549 = vmatpush1.msra.mxu0 0.0
          %550 = vmatprep.subr.mxu0 0.0
          %551 = vmatpush1.msra.mxu0 0.0
          %552 = vmatprep.subr.mxu0 0.0
          %553 = vmatpush1.msra.mxu0 0.0
          %554 = vmatprep.subr.mxu0 0.0
          %555 = vmatpush1.msra.mxu0 0.0
          %556 = vmatprep.subr.mxu0 0.0
          %557 = vmatpush1.msra.mxu0 0.0
          %558 = vmatprep.subr.mxu0 0.0
          %559 = vmatpush1.msra.mxu0 0.0
          %560 = vmatprep.subr.mxu0 0.0
          %561 = vmatpush1.msra.mxu0 0.0
          %562 = vmatprep.subr.mxu0 0.0
          %563 = vmatpush1.msra.mxu0 0.0
          %564 = vmatprep.subr.mxu0 0.0
          %565 = vmatpush1.msra.mxu0 0.0
          %566 = vmatprep.subr.mxu0 0.0
          %567 = vmatpush1.msra.mxu0 0.0
          %568 = vmatprep.subr.mxu0 0.0
          %569 = vmatpush1.msra.mxu0 0.0
          %570 = vmatprep.subr.mxu0 0.0
          %571 = vmatpush1.msra.mxu0 0.0
          %572 = vmatprep.subr.mxu0 0.0
          %573 = vmatpush1.msra.mxu0 0.0
          %574 = vmatprep.subr.mxu0 0.0
          %575 = vmatpush1.msra.mxu0 0.0
          %576 = vmatprep.subr.mxu0 0.0
          %577 = vmatpush1.msra.mxu0 0.0
          %578 = vmatprep.subr.mxu0 0.0
          %579 = vmatpush1.msra.mxu0 0.0
          %580 = vmatprep.subr.mxu0 0.0
          %581 = vmatpush1.msra.mxu0 0.0
          %582 = vmatprep.subr.mxu0 0.0
          %583 = vmatpush1.msra.mxu0 0.0
          %584 = vmatprep.mubr.f32.mxu0 0.0
          %585 = vmatmul.mubr.f32.gmra.mrb[0].mxu0 %v432
          %v586 = vpop.f32.mrb[0].mxu0
          %v587 = vadd.f32 %v518, %v586
          %v588 = vpop.f32.mrb[0].mxu0
          %589 = vdwg.mxu0
          %v590 = vmul.f32 %v587, 0.35355338
          %s591 = scalar_lea.vmem [#allocation2], 8
          %592 = vst.msk [vmem:[%s591] sm:$0xff] %vm505, %v590
          %s593 = scalar_lea.vmem %s4, 64
          %v594 = vld [vmem:[%s593] sm:$0xff]
          %v595 = vld [vmem:[%s593 + $0x8] sm:$0xff]
          %v596 = vld [vmem:[%s593 + $0x10] sm:$0xff]
          %v597 = vld [vmem:[%s593 + $0x18] sm:$0xff]
          %s598 = scalar_lea.vmem %s5, 2
          %v599 = vld [vmem:[%s598] sm:$0x1]
          %v601 = vlaneseq
          %v602 = vshrl.u32 %v601, 7
          %v603 = vsub.s32 0, %v602
          %v604 = vrot.slane %v599, %v603
          %606 = vmatprep.subr.mxu0 0.0
          %607 = vmatpush1.msra.mxu0 %v594
          %608 = vmatprep.subr.mxu0 0.0
          %609 = vmatpush1.msra.mxu0 %v595
          %610 = vmatprep.subr.mxu0 0.0
          %611 = vmatpush1.msra.mxu0 %v596
          %612 = vmatprep.subr.mxu0 0.0
          %613 = vmatpush1.msra.mxu0 %v597
          %614 = vmatprep.subr.mxu0 0.0
          %615 = vmatpush1.msra.mxu0 0.0
          %616 = vmatprep.subr.mxu0 0.0
          %617 = vmatpush1.msra.mxu0 0.0
          %618 = vmatprep.subr.mxu0 0.0
          %619 = vmatpush1.msra.mxu0 0.0
          %620 = vmatprep.subr.mxu0 0.0
          %621 = vmatpush1.msra.mxu0 0.0
          %622 = vmatprep.subr.mxu0 0.0
          %623 = vmatpush1.msra.mxu0 0.0
          %624 = vmatprep.subr.mxu0 0.0
          %625 = vmatpush1.msra.mxu0 0.0
          %626 = vmatprep.subr.mxu0 0.0
          %627 = vmatpush1.msra.mxu0 0.0
          %628 = vmatprep.subr.mxu0 0.0
          %629 = vmatpush1.msra.mxu0 0.0
          %630 = vmatprep.subr.mxu0 0.0
          %631 = vmatpush1.msra.mxu0 0.0
          %632 = vmatprep.subr.mxu0 0.0
          %633 = vmatpush1.msra.mxu0 0.0
          %634 = vmatprep.subr.mxu0 0.0
          %635 = vmatpush1.msra.mxu0 0.0
          %636 = vmatprep.subr.mxu0 0.0
          %637 = vmatpush1.msra.mxu0 0.0
          %638 = vmatprep.subr.mxu0 0.0
          %639 = vmatpush1.msra.mxu0 0.0
          %640 = vmatprep.subr.mxu0 0.0
          %641 = vmatpush1.msra.mxu0 0.0
          %642 = vmatprep.subr.mxu0 0.0
          %643 = vmatpush1.msra.mxu0 0.0
          %644 = vmatprep.subr.mxu0 0.0
          %645 = vmatpush1.msra.mxu0 0.0
          %646 = vmatprep.subr.mxu0 0.0
          %647 = vmatpush1.msra.mxu0 0.0
          %648 = vmatprep.subr.mxu0 0.0
          %649 = vmatpush1.msra.mxu0 0.0
          %650 = vmatprep.subr.mxu0 0.0
          %651 = vmatpush1.msra.mxu0 0.0
          %652 = vmatprep.subr.mxu0 0.0
          %653 = vmatpush1.msra.mxu0 0.0
          %654 = vmatprep.subr.mxu0 0.0
          %655 = vmatpush1.msra.mxu0 0.0
          %656 = vmatprep.subr.mxu0 0.0
          %657 = vmatpush1.msra.mxu0 0.0
          %658 = vmatprep.subr.mxu0 0.0
          %659 = vmatpush1.msra.mxu0 0.0
          %660 = vmatprep.subr.mxu0 0.0
          %661 = vmatpush1.msra.mxu0 0.0
          %662 = vmatprep.subr.mxu0 0.0
          %663 = vmatpush1.msra.mxu0 0.0
          %664 = vmatprep.subr.mxu0 0.0
          %665 = vmatpush1.msra.mxu0 0.0
          %666 = vmatprep.subr.mxu0 0.0
          %667 = vmatpush1.msra.mxu0 0.0
          %668 = vmatprep.subr.mxu0 0.0
          %669 = vmatpush1.msra.mxu0 0.0
          %670 = vmatprep.mubr.f32.mxu0 0.0
          %671 = vmatmul.mubr.f32.gmra.mrb[0].mxu0 %v432
          %v672 = vpop.f32.mrb[0].mxu0
          %v673 = vadd.f32 %v604, %v672
          %v674 = vpop.f32.mrb[0].mxu0
          %675 = vdwg.mxu0
          %v676 = vmul.f32 %v673, 0.35355338
          %s677 = scalar_lea.vmem [#allocation2], 16
          %678 = vst.msk [vmem:[%s677] sm:$0xff] %vm505, %v676
          %s679 = scalar_lea.vmem %s4, 96
          %v680 = vld [vmem:[%s679] sm:$0xff]
          %v681 = vld [vmem:[%s679 + $0x8] sm:$0xff]
          %v682 = vld [vmem:[%s679 + $0x10] sm:$0xff]
          %v683 = vld [vmem:[%s679 + $0x18] sm:$0xff]
          %s684 = scalar_lea.vmem %s5, 3
          %v685 = vld [vmem:[%s684] sm:$0x1]
          %v687 = vlaneseq
          %v688 = vshrl.u32 %v687, 7
          %v689 = vsub.s32 0, %v688
          %v690 = vrot.slane %v685, %v689
          %692 = vmatprep.subr.mxu0 0.0
          %693 = vmatpush1.msra.mxu0 %v680
          %694 = vmatprep.subr.mxu0 0.0
          %695 = vmatpush1.msra.mxu0 %v681
          %696 = vmatprep.subr.mxu0 0.0
          %697 = vmatpush1.msra.mxu0 %v682
          %698 = vmatprep.subr.mxu0 0.0
          %699 = vmatpush1.msra.mxu0 %v683
          %700 = vmatprep.subr.mxu0 0.0
          %701 = vmatpush1.msra.mxu0 0.0
          %702 = vmatprep.subr.mxu0 0.0
          %703 = vmatpush1.msra.mxu0 0.0
          %704 = vmatprep.subr.mxu0 0.0
          %705 = vmatpush1.msra.mxu0 0.0
          %706 = vmatprep.subr.mxu0 0.0
          %707 = vmatpush1.msra.mxu0 0.0
          %708 = vmatprep.subr.mxu0 0.0
          %709 = vmatpush1.msra.mxu0 0.0
          %710 = vmatprep.subr.mxu0 0.0
          %711 = vmatpush1.msra.mxu0 0.0
          %712 = vmatprep.subr.mxu0 0.0
          %713 = vmatpush1.msra.mxu0 0.0
          %714 = vmatprep.subr.mxu0 0.0
          %715 = vmatpush1.msra.mxu0 0.0
          %716 = vmatprep.subr.mxu0 0.0
          %717 = vmatpush1.msra.mxu0 0.0
          %718 = vmatprep.subr.mxu0 0.0
          %719 = vmatpush1.msra.mxu0 0.0
          %720 = vmatprep.subr.mxu0 0.0
          %721 = vmatpush1.msra.mxu0 0.0
          %722 = vmatprep.subr.mxu0 0.0
          %723 = vmatpush1.msra.mxu0 0.0
          %724 = vmatprep.subr.mxu0 0.0
          %725 = vmatpush1.msra.mxu0 0.0
          %726 = vmatprep.subr.mxu0 0.0
          %727 = vmatpush1.msra.mxu0 0.0
          %728 = vmatprep.subr.mxu0 0.0
          %729 = vmatpush1.msra.mxu0 0.0
          %730 = vmatprep.subr.mxu0 0.0
          %731 = vmatpush1.msra.mxu0 0.0
          %732 = vmatprep.subr.mxu0 0.0
          %733 = vmatpush1.msra.mxu0 0.0
          %734 = vmatprep.subr.mxu0 0.0
          %735 = vmatpush1.msra.mxu0 0.0
          %736 = vmatprep.subr.mxu0 0.0
          %737 = vmatpush1.msra.mxu0 0.0
          %738 = vmatprep.subr.mxu0 0.0
          %739 = vmatpush1.msra.mxu0 0.0
          %740 = vmatprep.subr.mxu0 0.0
          %741 = vmatpush1.msra.mxu0 0.0
          %742 = vmatprep.subr.mxu0 0.0
          %743 = vmatpush1.msra.mxu0 0.0
          %744 = vmatprep.subr.mxu0 0.0
          %745 = vmatpush1.msra.mxu0 0.0
          %746 = vmatprep.subr.mxu0 0.0
          %747 = vmatpush1.msra.mxu0 0.0
          %748 = vmatprep.subr.mxu0 0.0
          %749 = vmatpush1.msra.mxu0 0.0
          %750 = vmatprep.subr.mxu0 0.0
          %751 = vmatpush1.msra.mxu0 0.0
          %752 = vmatprep.subr.mxu0 0.0
          %753 = vmatpush1.msra.mxu0 0.0
          %754 = vmatprep.subr.mxu0 0.0
          %755 = vmatpush1.msra.mxu0 0.0
          %756 = vmatprep.mubr.f32.mxu0 0.0
          %757 = vmatmul.mubr.f32.gmra.mrb[0].mxu0 %v432
          %v758 = vpop.f32.mrb[0].mxu0
          %v759 = vadd.f32 %v690, %v758
          %v760 = vpop.f32.mrb[0].mxu0
          %761 = vdwg.mxu0
          %v762 = vmul.f32 %v759, 0.35355338
          %s763 = scalar_lea.vmem [#allocation2], 24
          %764 = vst.msk [vmem:[%s763] sm:$0xff] %vm505, %v762
          %vm765 = vcmask 7168
          %766 = vst.msk [vmem:[#allocation3] sm:$0xff] %vm765, -inf
          %767 = vst.msk [vmem:[#allocation3 + $0x8] sm:$0xff] %vm765, -inf
          %768 = vst.msk [vmem:[#allocation3 + $0x10] sm:$0xff] %vm765, -inf
          %769 = vst.msk [vmem:[#allocation3 + $0x18] sm:$0xff] %vm765, -inf
          %770 = vst.msk [vmem:[#allocation4] sm:$0xff] %vm765, 0.0
          %771 = vst.msk [vmem:[#allocation4 + $0x8] sm:$0xff] %vm765, 0.0
          %772 = vst.msk [vmem:[#allocation4 + $0x10] sm:$0xff] %vm765, 0.0
          %773 = vst.msk [vmem:[#allocation4 + $0x18] sm:$0xff] %vm765, 0.0
          %774 = vst.msk [vmem:[#allocation5] sm:$0xff] %vm505, 0.0
          %775 = vst.msk [vmem:[#allocation5 + $0x8] sm:$0xff] %vm505, 0.0
          %776 = vst.msk [vmem:[#allocation5 + $0x10] sm:$0xff] %vm505, 0.0
          %777 = vst.msk [vmem:[#allocation5 + $0x18] sm:$0xff] %vm505, 0.0
        $region56: #{tpu_custom_call.1} parent=51 // pred_fallthru
          _
        %v778 = vld [vmem:[%s400] sm:$0xff]
        %v779 = vld [vmem:[%s407] sm:$0xff]
        %s780 = scalar_lea.vmem %s4, 128
        %v781 = vld [vmem:[%s780] sm:$0xff]
        %v782 = vld [vmem:[%s780 + $0x8] sm:$0xff]
        %v783 = vld [vmem:[%s780 + $0x10] sm:$0xff]
        %v784 = vld [vmem:[%s780 + $0x18] sm:$0xff]
        %s785 = scalar_lea.vmem %s5, 4
        %v786 = vld [vmem:[%s785] sm:$0x1]
        %v788 = vlaneseq
        %v789 = vshrl.u32 %v788, 7
        %v790 = vsub.s32 0, %v789
        %v791 = vrot.slane %v786, %v790
        %vm793 = vcmask 261120
        %v795 = vsel %vm793, %v778, 0
        %797 = vmatprep.subr.mxu0 0.0
        %798 = vmatpush1.msra.mxu0 %v781
        %799 = vmatprep.subr.mxu0 0.0
        %800 = vmatpush1.msra.mxu0 %v782
        %801 = vmatprep.subr.mxu0 0.0
        %802 = vmatpush1.msra.mxu0 %v783
        %803 = vmatprep.subr.mxu0 0.0
        %804 = vmatpush1.msra.mxu0 %v784
        %805 = vmatprep.subr.mxu0 0.0
        %806 = vmatpush1.msra.mxu0 0.0
        %807 = vmatprep.subr.mxu0 0.0
        %808 = vmatpush1.msra.mxu0 0.0
        %809 = vmatprep.subr.mxu0 0.0
        %810 = vmatpush1.msra.mxu0 0.0
        %811 = vmatprep.subr.mxu0 0.0
        %812 = vmatpush1.msra.mxu0 0.0
        %813 = vmatprep.subr.mxu0 0.0
        %814 = vmatpush1.msra.mxu0 0.0
        %815 = vmatprep.subr.mxu0 0.0
        %816 = vmatpush1.msra.mxu0 0.0
        %817 = vmatprep.subr.mxu0 0.0
        %818 = vmatpush1.msra.mxu0 0.0
        %819 = vmatprep.subr.mxu0 0.0
        %820 = vmatpush1.msra.mxu0 0.0
        %821 = vmatprep.subr.mxu0 0.0
        %822 = vmatpush1.msra.mxu0 0.0
        %823 = vmatprep.subr.mxu0 0.0
        %824 = vmatpush1.msra.mxu0 0.0
        %825 = vmatprep.subr.mxu0 0.0
        %826 = vmatpush1.msra.mxu0 0.0
        %827 = vmatprep.subr.mxu0 0.0
        %828 = vmatpush1.msra.mxu0 0.0
        %829 = vmatprep.subr.mxu0 0.0
        %830 = vmatpush1.msra.mxu0 0.0
        %831 = vmatprep.subr.mxu0 0.0
        %832 = vmatpush1.msra.mxu0 0.0
        %833 = vmatprep.subr.mxu0 0.0
        %834 = vmatpush1.msra.mxu0 0.0
        %835 = vmatprep.subr.mxu0 0.0
        %836 = vmatpush1.msra.mxu0 0.0
        %837 = vmatprep.subr.mxu0 0.0
        %838 = vmatpush1.msra.mxu0 0.0
        %839 = vmatprep.subr.mxu0 0.0
        %840 = vmatpush1.msra.mxu0 0.0
        %841 = vmatprep.subr.mxu0 0.0
        %842 = vmatpush1.msra.mxu0 0.0
        %843 = vmatprep.subr.mxu0 0.0
        %844 = vmatpush1.msra.mxu0 0.0
        %845 = vmatprep.subr.mxu0 0.0
        %846 = vmatpush1.msra.mxu0 0.0
        %847 = vmatprep.subr.mxu0 0.0
        %848 = vmatpush1.msra.mxu0 0.0
        %849 = vmatprep.subr.mxu0 0.0
        %850 = vmatpush1.msra.mxu0 0.0
        %851 = vmatprep.subr.mxu0 0.0
        %852 = vmatpush1.msra.mxu0 0.0
        %853 = vmatprep.subr.mxu0 0.0
        %854 = vmatpush1.msra.mxu0 0.0
        %855 = vmatprep.subr.mxu0 0.0
        %856 = vmatpush1.msra.mxu0 0.0
        %857 = vmatprep.subr.mxu0 0.0
        %858 = vmatpush1.msra.mxu0 0.0
        %859 = vmatprep.subr.mxu0 0.0
        %860 = vmatpush1.msra.mxu0 0.0
        %861 = vmatprep.mubr.f32.mxu0 0.0
        %862 = vmatmul.mubr.f32.gmra.mrb[0].mxu0 %v795
        %v863 = vpop.f32.mrb[0].mxu0
        %v864 = vadd.f32 %v791, %v863
        %v865 = vpop.f32.mrb[0].mxu0
        %866 = vdwg.mxu0
        %s867 = scalar_lea.vmem %s4, 160
        %v868 = vld [vmem:[%s867] sm:$0xff]
        %v869 = vld [vmem:[%s867 + $0x8] sm:$0xff]
        %v870 = vld [vmem:[%s867 + $0x10] sm:$0xff]
        %v871 = vld [vmem:[%s867 + $0x18] sm:$0xff]
        %s872 = scalar_lea.vmem %s5, 5
        %v873 = vld [vmem:[%s872] sm:$0x1]
        %v875 = vlaneseq
        %v876 = vshrl.u32 %v875, 7
        %v877 = vsub.s32 0, %v876
        %v878 = vrot.slane %v873, %v877
        %880 = vmatprep.subr.mxu0 0.0
        %881 = vmatpush1.msra.mxu0 %v868
        %882 = vmatprep.subr.mxu0 0.0
        %883 = vmatpush1.msra.mxu0 %v869
        %884 = vmatprep.subr.mxu0 0.0
        %885 = vmatpush1.msra.mxu0 %v870
        %886 = vmatprep.subr.mxu0 0.0
        %887 = vmatpush1.msra.mxu0 %v871
        %888 = vmatprep.subr.mxu0 0.0
        %889 = vmatpush1.msra.mxu0 0.0
        %890 = vmatprep.subr.mxu0 0.0
        %891 = vmatpush1.msra.mxu0 0.0
        %892 = vmatprep.subr.mxu0 0.0
        %893 = vmatpush1.msra.mxu0 0.0
        %894 = vmatprep.subr.mxu0 0.0
        %895 = vmatpush1.msra.mxu0 0.0
        %896 = vmatprep.subr.mxu0 0.0
        %897 = vmatpush1.msra.mxu0 0.0
        %898 = vmatprep.subr.mxu0 0.0
        %899 = vmatpush1.msra.mxu0 0.0
        %900 = vmatprep.subr.mxu0 0.0
        %901 = vmatpush1.msra.mxu0 0.0
        %902 = vmatprep.subr.mxu0 0.0
        %903 = vmatpush1.msra.mxu0 0.0
        %904 = vmatprep.subr.mxu0 0.0
        %905 = vmatpush1.msra.mxu0 0.0
        %906 = vmatprep.subr.mxu0 0.0
        %907 = vmatpush1.msra.mxu0 0.0
        %908 = vmatprep.subr.mxu0 0.0
        %909 = vmatpush1.msra.mxu0 0.0
        %910 = vmatprep.subr.mxu0 0.0
        %911 = vmatpush1.msra.mxu0 0.0
        %912 = vmatprep.subr.mxu0 0.0
        %913 = vmatpush1.msra.mxu0 0.0
        %914 = vmatprep.subr.mxu0 0.0
        %915 = vmatpush1.msra.mxu0 0.0
        %916 = vmatprep.subr.mxu0 0.0
        %917 = vmatpush1.msra.mxu0 0.0
        %918 = vmatprep.subr.mxu0 0.0
        %919 = vmatpush1.msra.mxu0 0.0
        %920 = vmatprep.subr.mxu0 0.0
        %921 = vmatpush1.msra.mxu0 0.0
        %922 = vmatprep.subr.mxu0 0.0
        %923 = vmatpush1.msra.mxu0 0.0
        %924 = vmatprep.subr.mxu0 0.0
        %925 = vmatpush1.msra.mxu0 0.0
        %926 = vmatprep.subr.mxu0 0.0
        %927 = vmatpush1.msra.mxu0 0.0
        %928 = vmatprep.subr.mxu0 0.0
        %929 = vmatpush1.msra.mxu0 0.0
        %930 = vmatprep.subr.mxu0 0.0
        %931 = vmatpush1.msra.mxu0 0.0
        %932 = vmatprep.subr.mxu0 0.0
        %933 = vmatpush1.msra.mxu0 0.0
        %934 = vmatprep.subr.mxu0 0.0
        %935 = vmatpush1.msra.mxu0 0.0
        %936 = vmatprep.subr.mxu0 0.0
        %937 = vmatpush1.msra.mxu0 0.0
        %938 = vmatprep.subr.mxu0 0.0
        %939 = vmatpush1.msra.mxu0 0.0
        %940 = vmatprep.subr.mxu0 0.0
        %941 = vmatpush1.msra.mxu0 0.0
        %942 = vmatprep.subr.mxu0 0.0
        %943 = vmatpush1.msra.mxu0 0.0
        %944 = vmatprep.mubr.f32.mxu0 0.0
        %945 = vmatmul.mubr.f32.gmra.mrb[0].mxu0 %v795
        %v946 = vpop.f32.mrb[0].mxu0
        %v947 = vadd.f32 %v878, %v946
        %v948 = vpop.f32.mrb[0].mxu0
        %949 = vdwg.mxu0
        %s950 = scalar_lea.vmem %s4, 192
        %v951 = vld [vmem:[%s950] sm:$0xff]
        %v952 = vld [vmem:[%s950 + $0x8] sm:$0xff]
        %v953 = vld [vmem:[%s950 + $0x10] sm:$0xff]
        %v954 = vld [vmem:[%s950 + $0x18] sm:$0xff]
        %s955 = scalar_lea.vmem %s5, 6
        %v956 = vld [vmem:[%s955] sm:$0x1]
        %v958 = vlaneseq
        %v959 = vshrl.u32 %v958, 7
        %v960 = vsub.s32 0, %v959
        %v961 = vrot.slane %v956, %v960
        %963 = vmatprep.subr.mxu0 0.0
        %964 = vmatpush1.msra.mxu0 %v951
        %965 = vmatprep.subr.mxu0 0.0
        %966 = vmatpush1.msra.mxu0 %v952
        %967 = vmatprep.subr.mxu0 0.0
        %968 = vmatpush1.msra.mxu0 %v953
        %969 = vmatprep.subr.mxu0 0.0
        %970 = vmatpush1.msra.mxu0 %v954
        %971 = vmatprep.subr.mxu0 0.0
        %972 = vmatpush1.msra.mxu0 0.0
        %973 = vmatprep.subr.mxu0 0.0
        %974 = vmatpush1.msra.mxu0 0.0
        %975 = vmatprep.subr.mxu0 0.0
        %976 = vmatpush1.msra.mxu0 0.0
        %977 = vmatprep.subr.mxu0 0.0
        %978 = vmatpush1.msra.mxu0 0.0
        %979 = vmatprep.subr.mxu0 0.0
        %980 = vmatpush1.msra.mxu0 0.0
        %981 = vmatprep.subr.mxu0 0.0
        %982 = vmatpush1.msra.mxu0 0.0
        %983 = vmatprep.subr.mxu0 0.0
        %984 = vmatpush1.msra.mxu0 0.0
        %985 = vmatprep.subr.mxu0 0.0
        %986 = vmatpush1.msra.mxu0 0.0
        %987 = vmatprep.subr.mxu0 0.0
        %988 = vmatpush1.msra.mxu0 0.0
        %989 = vmatprep.subr.mxu0 0.0
        %990 = vmatpush1.msra.mxu0 0.0
        %991 = vmatprep.subr.mxu0 0.0
        %992 = vmatpush1.msra.mxu0 0.0
        %993 = vmatprep.subr.mxu0 0.0
        %994 = vmatpush1.msra.mxu0 0.0
        %995 = vmatprep.subr.mxu0 0.0
        %996 = vmatpush1.msra.mxu0 0.0
        %997 = vmatprep.subr.mxu0 0.0
        %998 = vmatpush1.msra.mxu0 0.0
        %999 = vmatprep.subr.mxu0 0.0
        %1000 = vmatpush1.msra.mxu0 0.0
        %1001 = vmatprep.subr.mxu0 0.0
        %1002 = vmatpush1.msra.mxu0 0.0
        %1003 = vmatprep.subr.mxu0 0.0
        %1004 = vmatpush1.msra.mxu0 0.0
        %1005 = vmatprep.subr.mxu0 0.0
        %1006 = vmatpush1.msra.mxu0 0.0
        %1007 = vmatprep.subr.mxu0 0.0
        %1008 = vmatpush1.msra.mxu0 0.0
        %1009 = vmatprep.subr.mxu0 0.0
        %1010 = vmatpush1.msra.mxu0 0.0
        %1011 = vmatprep.subr.mxu0 0.0
        %1012 = vmatpush1.msra.mxu0 0.0
        %1013 = vmatprep.subr.mxu0 0.0
        %1014 = vmatpush1.msra.mxu0 0.0
        %1015 = vmatprep.subr.mxu0 0.0
        %1016 = vmatpush1.msra.mxu0 0.0
        %1017 = vmatprep.subr.mxu0 0.0
        %1018 = vmatpush1.msra.mxu0 0.0
        %1019 = vmatprep.subr.mxu0 0.0
        %1020 = vmatpush1.msra.mxu0 0.0
        %1021 = vmatprep.subr.mxu0 0.0
        %1022 = vmatpush1.msra.mxu0 0.0
        %1023 = vmatprep.subr.mxu0 0.0
        %1024 = vmatpush1.msra.mxu0 0.0
        %1025 = vmatprep.subr.mxu0 0.0
        %1026 = vmatpush1.msra.mxu0 0.0
        %1027 = vmatprep.mubr.f32.mxu0 0.0
        %1028 = vmatmul.mubr.f32.gmra.mrb[0].mxu0 %v795
        %v1029 = vpop.f32.mrb[0].mxu0
        %v1030 = vadd.f32 %v961, %v1029
        %v1031 = vpop.f32.mrb[0].mxu0
        %1032 = vdwg.mxu0
        %s1033 = scalar_lea.vmem %s4, 224
        %v1034 = vld [vmem:[%s1033] sm:$0xff]
        %v1035 = vld [vmem:[%s1033 + $0x8] sm:$0xff]
        %v1036 = vld [vmem:[%s1033 + $0x10] sm:$0xff]
        %v1037 = vld [vmem:[%s1033 + $0x18] sm:$0xff]
        %s1038 = scalar_lea.vmem %s5, 7
        %v1039 = vld [vmem:[%s1038] sm:$0x1]
        %v1041 = vlaneseq
        %v1042 = vshrl.u32 %v1041, 7
        %v1043 = vsub.s32 0, %v1042
        %v1044 = vrot.slane %v1039, %v1043
        %1046 = vmatprep.subr.mxu0 0.0
        %1047 = vmatpush1.msra.mxu0 %v1034
        %1048 = vmatprep.subr.mxu0 0.0
        %1049 = vmatpush1.msra.mxu0 %v1035
        %1050 = vmatprep.subr.mxu0 0.0
        %1051 = vmatpush1.msra.mxu0 %v1036
        %1052 = vmatprep.subr.mxu0 0.0
        %1053 = vmatpush1.msra.mxu0 %v1037
        %1054 = vmatprep.subr.mxu0 0.0
        %1055 = vmatpush1.msra.mxu0 0.0
        %1056 = vmatprep.subr.mxu0 0.0
        %1057 = vmatpush1.msra.mxu0 0.0
        %1058 = vmatprep.subr.mxu0 0.0
        %1059 = vmatpush1.msra.mxu0 0.0
        %1060 = vmatprep.subr.mxu0 0.0
        %1061 = vmatpush1.msra.mxu0 0.0
        %1062 = vmatprep.subr.mxu0 0.0
        %1063 = vmatpush1.msra.mxu0 0.0
        %1064 = vmatprep.subr.mxu0 0.0
        %1065 = vmatpush1.msra.mxu0 0.0
        %1066 = vmatprep.subr.mxu0 0.0
        %1067 = vmatpush1.msra.mxu0 0.0
        %1068 = vmatprep.subr.mxu0 0.0
        %1069 = vmatpush1.msra.mxu0 0.0
        %1070 = vmatprep.subr.mxu0 0.0
        %1071 = vmatpush1.msra.mxu0 0.0
        %1072 = vmatprep.subr.mxu0 0.0
        %1073 = vmatpush1.msra.mxu0 0.0
        %1074 = vmatprep.subr.mxu0 0.0
        %1075 = vmatpush1.msra.mxu0 0.0
        %1076 = vmatprep.subr.mxu0 0.0
        %1077 = vmatpush1.msra.mxu0 0.0
        %1078 = vmatprep.subr.mxu0 0.0
        %1079 = vmatpush1.msra.mxu0 0.0
        %1080 = vmatprep.subr.mxu0 0.0
        %1081 = vmatpush1.msra.mxu0 0.0
        %1082 = vmatprep.subr.mxu0 0.0
        %1083 = vmatpush1.msra.mxu0 0.0
        %1084 = vmatprep.subr.mxu0 0.0
        %1085 = vmatpush1.msra.mxu0 0.0
        %1086 = vmatprep.subr.mxu0 0.0
        %1087 = vmatpush1.msra.mxu0 0.0
        %1088 = vmatprep.subr.mxu0 0.0
        %1089 = vmatpush1.msra.mxu0 0.0
        %1090 = vmatprep.subr.mxu0 0.0
        %1091 = vmatpush1.msra.mxu0 0.0
        %1092 = vmatprep.subr.mxu0 0.0
        %1093 = vmatpush1.msra.mxu0 0.0
        %1094 = vmatprep.subr.mxu0 0.0
        %1095 = vmatpush1.msra.mxu0 0.0
        %1096 = vmatprep.subr.mxu0 0.0
        %1097 = vmatpush1.msra.mxu0 0.0
        %1098 = vmatprep.subr.mxu0 0.0
        %1099 = vmatpush1.msra.mxu0 0.0
        %1100 = vmatprep.subr.mxu0 0.0
        %1101 = vmatpush1.msra.mxu0 0.0
        %1102 = vmatprep.subr.mxu0 0.0
        %1103 = vmatpush1.msra.mxu0 0.0
        %1104 = vmatprep.subr.mxu0 0.0
        %1105 = vmatpush1.msra.mxu0 0.0
        %1106 = vmatprep.subr.mxu0 0.0
        %1107 = vmatpush1.msra.mxu0 0.0
        %1108 = vmatprep.subr.mxu0 0.0
        %1109 = vmatpush1.msra.mxu0 0.0
        %1110 = vmatprep.mubr.f32.mxu0 0.0
        %1111 = vmatmul.mubr.f32.gmra.mrb[0].mxu0 %v795
        %v1112 = vpop.f32.mrb[0].mxu0
        %v1113 = vadd.f32 %v1044, %v1112
        %v1114 = vpop.f32.mrb[0].mxu0
        %1115 = vdwg.mxu0
        %s1116 = scalar_lea.vmem %s4, 256
        %v1117 = vld [vmem:[%s1116] sm:$0xff]
        %v1118 = vld [vmem:[%s1116 + $0x8] sm:$0xff]
        %v1119 = vld [vmem:[%s1116 + $0x10] sm:$0xff]
        %v1120 = vld [vmem:[%s1116 + $0x18] sm:$0xff]
        %s1121 = scalar_lea.vmem %s5, 8
        %v1122 = vld [vmem:[%s1121] sm:$0x1]
        %v1124 = vlaneseq
        %v1125 = vshrl.u32 %v1124, 7
        %v1126 = vsub.s32 0, %v1125
        %v1127 = vrot.slane %v1122, %v1126
        %v1130 = vsel %vm793, %v779, 0
        %1132 = vmatprep.subr.mxu0 0.0
        %1133 = vmatpush1.msra.mxu0 %v1117
        %1134 = vmatprep.subr.mxu0 0.0
        %1135 = vmatpush1.msra.mxu0 %v1118
        %1136 = vmatprep.subr.mxu0 0.0
        %1137 = vmatpush1.msra.mxu0 %v1119
        %1138 = vmatprep.subr.mxu0 0.0
        %1139 = vmatpush1.msra.mxu0 %v1120
        %1140 = vmatprep.subr.mxu0 0.0
        %1141 = vmatpush1.msra.mxu0 0.0
        %1142 = vmatprep.subr.mxu0 0.0
        %1143 = vmatpush1.msra.mxu0 0.0
        %1144 = vmatprep.subr.mxu0 0.0
        %1145 = vmatpush1.msra.mxu0 0.0
        %1146 = vmatprep.subr.mxu0 0.0
        %1147 = vmatpush1.msra.mxu0 0.0
        %1148 = vmatprep.subr.mxu0 0.0
        %1149 = vmatpush1.msra.mxu0 0.0
        %1150 = vmatprep.subr.mxu0 0.0
        %1151 = vmatpush1.msra.mxu0 0.0
        %1152 = vmatprep.subr.mxu0 0.0
        %1153 = vmatpush1.msra.mxu0 0.0
        %1154 = vmatprep.subr.mxu0 0.0
        %1155 = vmatpush1.msra.mxu0 0.0
        %1156 = vmatprep.subr.mxu0 0.0
        %1157 = vmatpush1.msra.mxu0 0.0
        %1158 = vmatprep.subr.mxu0 0.0
        %1159 = vmatpush1.msra.mxu0 0.0
        %1160 = vmatprep.subr.mxu0 0.0
        %1161 = vmatpush1.msra.mxu0 0.0
        %1162 = vmatprep.subr.mxu0 0.0
        %1163 = vmatpush1.msra.mxu0 0.0
        %1164 = vmatprep.subr.mxu0 0.0
        %1165 = vmatpush1.msra.mxu0 0.0
        %1166 = vmatprep.subr.mxu0 0.0
        %1167 = vmatpush1.msra.mxu0 0.0
        %1168 = vmatprep.subr.mxu0 0.0
        %1169 = vmatpush1.msra.mxu0 0.0
        %1170 = vmatprep.subr.mxu0 0.0
        %1171 = vmatpush1.msra.mxu0 0.0
        %1172 = vmatprep.subr.mxu0 0.0
        %1173 = vmatpush1.msra.mxu0 0.0
        %1174 = vmatprep.subr.mxu0 0.0
        %1175 = vmatpush1.msra.mxu0 0.0
        %1176 = vmatprep.subr.mxu0 0.0
        %1177 = vmatpush1.msra.mxu0 0.0
        %1178 = vmatprep.subr.mxu0 0.0
        %1179 = vmatpush1.msra.mxu0 0.0
        %1180 = vmatprep.subr.mxu0 0.0
        %1181 = vmatpush1.msra.mxu0 0.0
        %1182 = vmatprep.subr.mxu0 0.0
        %1183 = vmatpush1.msra.mxu0 0.0
        %1184 = vmatprep.subr.mxu0 0.0
        %1185 = vmatpush1.msra.mxu0 0.0
        %1186 = vmatprep.subr.mxu0 0.0
        %1187 = vmatpush1.msra.mxu0 0.0
        %1188 = vmatprep.subr.mxu0 0.0
        %1189 = vmatpush1.msra.mxu0 0.0
        %1190 = vmatprep.subr.mxu0 0.0
        %1191 = vmatpush1.msra.mxu0 0.0
        %1192 = vmatprep.subr.mxu0 0.0
        %1193 = vmatpush1.msra.mxu0 0.0
        %1194 = vmatprep.subr.mxu0 0.0
        %1195 = vmatpush1.msra.mxu0 0.0
        %1196 = vmatprep.mubr.f32.mxu0 0.0
        %1197 = vmatmul.mubr.f32.gmra.mrb[0].mxu0 %v1130
        %v1198 = vpop.f32.mrb[0].mxu0
        %v1199 = vadd.f32 %v1127, %v1198
        %v1200 = vpop.f32.mrb[0].mxu0
        %1201 = vdwg.mxu0
        %s1202 = scalar_lea.vmem %s4, 288
        %v1203 = vld [vmem:[%s1202] sm:$0xff]
        %v1204 = vld [vmem:[%s1202 + $0x8] sm:$0xff]
        %v1205 = vld [vmem:[%s1202 + $0x10] sm:$0xff]
        %v1206 = vld [vmem:[%s1202 + $0x18] sm:$0xff]
        %s1207 = scalar_lea.vmem %s5, 9
        %v1208 = vld [vmem:[%s1207] sm:$0x1]
        %v1210 = vlaneseq
        %v1211 = vshrl.u32 %v1210, 7
        %v1212 = vsub.s32 0, %v1211
        %v1213 = vrot.slane %v1208, %v1212
        %1215 = vmatprep.subr.mxu0 0.0
        %1216 = vmatpush1.msra.mxu0 %v1203
        %1217 = vmatprep.subr.mxu0 0.0
        %1218 = vmatpush1.msra.mxu0 %v1204
        %1219 = vmatprep.subr.mxu0 0.0
        %1220 = vmatpush1.msra.mxu0 %v1205
        %1221 = vmatprep.subr.mxu0 0.0
        %1222 = vmatpush1.msra.mxu0 %v1206
        %1223 = vmatprep.subr.mxu0 0.0
        %1224 = vmatpush1.msra.mxu0 0.0
        %1225 = vmatprep.subr.mxu0 0.0
        %1226 = vmatpush1.msra.mxu0 0.0
        %1227 = vmatprep.subr.mxu0 0.0
        %1228 = vmatpush1.msra.mxu0 0.0
        %1229 = vmatprep.subr.mxu0 0.0
        %1230 = vmatpush1.msra.mxu0 0.0
        %1231 = vmatprep.subr.mxu0 0.0
        %1232 = vmatpush1.msra.mxu0 0.0
        %1233 = vmatprep.subr.mxu0 0.0
        %1234 = vmatpush1.msra.mxu0 0.0
        %1235 = vmatprep.subr.mxu0 0.0
        %1236 = vmatpush1.msra.mxu0 0.0
        %1237 = vmatprep.subr.mxu0 0.0
        %1238 = vmatpush1.msra.mxu0 0.0
        %1239 = vmatprep.subr.mxu0 0.0
        %1240 = vmatpush1.msra.mxu0 0.0
        %1241 = vmatprep.subr.mxu0 0.0
        %1242 = vmatpush1.msra.mxu0 0.0
        %1243 = vmatprep.subr.mxu0 0.0
        %1244 = vmatpush1.msra.mxu0 0.0
        %1245 = vmatprep.subr.mxu0 0.0
        %1246 = vmatpush1.msra.mxu0 0.0
        %1247 = vmatprep.subr.mxu0 0.0
        %1248 = vmatpush1.msra.mxu0 0.0
        %1249 = vmatprep.subr.mxu0 0.0
        %1250 = vmatpush1.msra.mxu0 0.0
        %1251 = vmatprep.subr.mxu0 0.0
        %1252 = vmatpush1.msra.mxu0 0.0
        %1253 = vmatprep.subr.mxu0 0.0
        %1254 = vmatpush1.msra.mxu0 0.0
        %1255 = vmatprep.subr.mxu0 0.0
        %1256 = vmatpush1.msra.mxu0 0.0
        %1257 = vmatprep.subr.mxu0 0.0
        %1258 = vmatpush1.msra.mxu0 0.0
        %1259 = vmatprep.subr.mxu0 0.0
        %1260 = vmatpush1.msra.mxu0 0.0
        %1261 = vmatprep.subr.mxu0 0.0
        %1262 = vmatpush1.msra.mxu0 0.0
        %1263 = vmatprep.subr.mxu0 0.0
        %1264 = vmatpush1.msra.mxu0 0.0
        %1265 = vmatprep.subr.mxu0 0.0
        %1266 = vmatpush1.msra.mxu0 0.0
        %1267 = vmatprep.subr.mxu0 0.0
        %1268 = vmatpush1.msra.mxu0 0.0
        %1269 = vmatprep.subr.mxu0 0.0
        %1270 = vmatpush1.msra.mxu0 0.0
        %1271 = vmatprep.subr.mxu0 0.0
        %1272 = vmatpush1.msra.mxu0 0.0
        %1273 = vmatprep.subr.mxu0 0.0
        %1274 = vmatpush1.msra.mxu0 0.0
        %1275 = vmatprep.subr.mxu0 0.0
        %1276 = vmatpush1.msra.mxu0 0.0
        %1277 = vmatprep.subr.mxu0 0.0
        %1278 = vmatpush1.msra.mxu0 0.0
        %1279 = vmatprep.mubr.f32.mxu0 0.0
        %1280 = vmatmul.mubr.f32.gmra.mrb[0].mxu0 %v1130
        %v1281 = vpop.f32.mrb[0].mxu0
        %v1282 = vadd.f32 %v1213, %v1281
        %v1283 = vpop.f32.mrb[0].mxu0
        %1284 = vdwg.mxu0
        %s1285 = scalar_lea.vmem %s4, 320
        %v1286 = vld [vmem:[%s1285] sm:$0xff]
        %v1287 = vld [vmem:[%s1285 + $0x8] sm:$0xff]
        %v1288 = vld [vmem:[%s1285 + $0x10] sm:$0xff]
        %v1289 = vld [vmem:[%s1285 + $0x18] sm:$0xff]
        %s1290 = scalar_lea.vmem %s5, 10
        %v1291 = vld [vmem:[%s1290] sm:$0x1]
        %v1293 = vlaneseq
        %v1294 = vshrl.u32 %v1293, 7
        %v1295 = vsub.s32 0, %v1294
        %v1296 = vrot.slane %v1291, %v1295
        %1298 = vmatprep.subr.mxu0 0.0
        %1299 = vmatpush1.msra.mxu0 %v1286
        %1300 = vmatprep.subr.mxu0 0.0
        %1301 = vmatpush1.msra.mxu0 %v1287
        %1302 = vmatprep.subr.mxu0 0.0
        %1303 = vmatpush1.msra.mxu0 %v1288
        %1304 = vmatprep.subr.mxu0 0.0
        %1305 = vmatpush1.msra.mxu0 %v1289
        %1306 = vmatprep.subr.mxu0 0.0
        %1307 = vmatpush1.msra.mxu0 0.0
        %1308 = vmatprep.subr.mxu0 0.0
        %1309 = vmatpush1.msra.mxu0 0.0
        %1310 = vmatprep.subr.mxu0 0.0
        %1311 = vmatpush1.msra.mxu0 0.0
        %1312 = vmatprep.subr.mxu0 0.0
        %1313 = vmatpush1.msra.mxu0 0.0
        %1314 = vmatprep.subr.mxu0 0.0
        %1315 = vmatpush1.msra.mxu0 0.0
        %1316 = vmatprep.subr.mxu0 0.0
        %1317 = vmatpush1.msra.mxu0 0.0
        %1318 = vmatprep.subr.mxu0 0.0
        %1319 = vmatpush1.msra.mxu0 0.0
        %1320 = vmatprep.subr.mxu0 0.0
        %1321 = vmatpush1.msra.mxu0 0.0
        %1322 = vmatprep.subr.mxu0 0.0
        %1323 = vmatpush1.msra.mxu0 0.0
        %1324 = vmatprep.subr.mxu0 0.0
        %1325 = vmatpush1.msra.mxu0 0.0
        %1326 = vmatprep.subr.mxu0 0.0
        %1327 = vmatpush1.msra.mxu0 0.0
        %1328 = vmatprep.subr.mxu0 0.0
        %1329 = vmatpush1.msra.mxu0 0.0
        %1330 = vmatprep.subr.mxu0 0.0
        %1331 = vmatpush1.msra.mxu0 0.0
        %1332 = vmatprep.subr.mxu0 0.0
        %1333 = vmatpush1.msra.mxu0 0.0
        %1334 = vmatprep.subr.mxu0 0.0
        %1335 = vmatpush1.msra.mxu0 0.0
        %1336 = vmatprep.subr.mxu0 0.0
        %1337 = vmatpush1.msra.mxu0 0.0
        %1338 = vmatprep.subr.mxu0 0.0
        %1339 = vmatpush1.msra.mxu0 0.0
        %1340 = vmatprep.subr.mxu0 0.0
        %1341 = vmatpush1.msra.mxu0 0.0
        %1342 = vmatprep.subr.mxu0 0.0
        %1343 = vmatpush1.msra.mxu0 0.0
        %1344 = vmatprep.subr.mxu0 0.0
        %1345 = vmatpush1.msra.mxu0 0.0
        %1346 = vmatprep.subr.mxu0 0.0
        %1347 = vmatpush1.msra.mxu0 0.0
        %1348 = vmatprep.subr.mxu0 0.0
        %1349 = vmatpush1.msra.mxu0 0.0
        %1350 = vmatprep.subr.mxu0 0.0
        %1351 = vmatpush1.msra.mxu0 0.0
        %1352 = vmatprep.subr.mxu0 0.0
        %1353 = vmatpush1.msra.mxu0 0.0
        %1354 = vmatprep.subr.mxu0 0.0
        %1355 = vmatpush1.msra.mxu0 0.0
        %1356 = vmatprep.subr.mxu0 0.0
        %1357 = vmatpush1.msra.mxu0 0.0
        %1358 = vmatprep.subr.mxu0 0.0
        %1359 = vmatpush1.msra.mxu0 0.0
        %1360 = vmatprep.subr.mxu0 0.0
        %1361 = vmatpush1.msra.mxu0 0.0
        %1362 = vmatprep.mubr.f32.mxu0 0.0
        %1363 = vmatmul.mubr.f32.gmra.mrb[0].mxu0 %v1130
        %v1364 = vpop.f32.mrb[0].mxu0
        %v1365 = vadd.f32 %v1296, %v1364
        %v1366 = vpop.f32.mrb[0].mxu0
        %1367 = vdwg.mxu0
        %s1368 = scalar_lea.vmem %s4, 352
        %v1369 = vld [vmem:[%s1368] sm:$0xff]
        %v1370 = vld [vmem:[%s1368 + $0x8] sm:$0xff]
        %v1371 = vld [vmem:[%s1368 + $0x10] sm:$0xff]
        %v1372 = vld [vmem:[%s1368 + $0x18] sm:$0xff]
        %s1373 = scalar_lea.vmem %s5, 11
        %v1374 = vld [vmem:[%s1373] sm:$0x1]
        %v1376 = vlaneseq
        %v1377 = vshrl.u32 %v1376, 7
        %v1378 = vsub.s32 0, %v1377
        %v1379 = vrot.slane %v1374, %v1378
        %1381 = vmatprep.subr.mxu0 0.0
        %1382 = vmatpush1.msra.mxu0 %v1369
        %1383 = vmatprep.subr.mxu0 0.0
        %1384 = vmatpush1.msra.mxu0 %v1370
        %1385 = vmatprep.subr.mxu0 0.0
        %1386 = vmatpush1.msra.mxu0 %v1371
        %1387 = vmatprep.subr.mxu0 0.0
        %1388 = vmatpush1.msra.mxu0 %v1372
        %1389 = vmatprep.subr.mxu0 0.0
        %1390 = vmatpush1.msra.mxu0 0.0
        %1391 = vmatprep.subr.mxu0 0.0
        %1392 = vmatpush1.msra.mxu0 0.0
        %1393 = vmatprep.subr.mxu0 0.0
        %1394 = vmatpush1.msra.mxu0 0.0
        %1395 = vmatprep.subr.mxu0 0.0
        %1396 = vmatpush1.msra.mxu0 0.0
        %1397 = vmatprep.subr.mxu0 0.0
        %1398 = vmatpush1.msra.mxu0 0.0
        %1399 = vmatprep.subr.mxu0 0.0
        %1400 = vmatpush1.msra.mxu0 0.0
        %1401 = vmatprep.subr.mxu0 0.0
        %1402 = vmatpush1.msra.mxu0 0.0
        %1403 = vmatprep.subr.mxu0 0.0
        %1404 = vmatpush1.msra.mxu0 0.0
        %1405 = vmatprep.subr.mxu0 0.0
        %1406 = vmatpush1.msra.mxu0 0.0
        %1407 = vmatprep.subr.mxu0 0.0
        %1408 = vmatpush1.msra.mxu0 0.0
        %1409 = vmatprep.subr.mxu0 0.0
        %1410 = vmatpush1.msra.mxu0 0.0
        %1411 = vmatprep.subr.mxu0 0.0
        %1412 = vmatpush1.msra.mxu0 0.0
        %1413 = vmatprep.subr.mxu0 0.0
        %1414 = vmatpush1.msra.mxu0 0.0
        %1415 = vmatprep.subr.mxu0 0.0
        %1416 = vmatpush1.msra.mxu0 0.0
        %1417 = vmatprep.subr.mxu0 0.0
        %1418 = vmatpush1.msra.mxu0 0.0
        %1419 = vmatprep.subr.mxu0 0.0
        %1420 = vmatpush1.msra.mxu0 0.0
        %1421 = vmatprep.subr.mxu0 0.0
        %1422 = vmatpush1.msra.mxu0 0.0
        %1423 = vmatprep.subr.mxu0 0.0
        %1424 = vmatpush1.msra.mxu0 0.0
        %1425 = vmatprep.subr.mxu0 0.0
        %1426 = vmatpush1.msra.mxu0 0.0
        %1427 = vmatprep.subr.mxu0 0.0
        %1428 = vmatpush1.msra.mxu0 0.0
        %1429 = vmatprep.subr.mxu0 0.0
        %1430 = vmatpush1.msra.mxu0 0.0
        %1431 = vmatprep.subr.mxu0 0.0
        %1432 = vmatpush1.msra.mxu0 0.0
        %1433 = vmatprep.subr.mxu0 0.0
        %1434 = vmatpush1.msra.mxu0 0.0
        %1435 = vmatprep.subr.mxu0 0.0
        %1436 = vmatpush1.msra.mxu0 0.0
        %1437 = vmatprep.subr.mxu0 0.0
        %1438 = vmatpush1.msra.mxu0 0.0
        %1439 = vmatprep.subr.mxu0 0.0
        %1440 = vmatpush1.msra.mxu0 0.0
        %1441 = vmatprep.subr.mxu0 0.0
        %1442 = vmatpush1.msra.mxu0 0.0
        %1443 = vmatprep.subr.mxu0 0.0
        %1444 = vmatpush1.msra.mxu0 0.0
        %1445 = vmatprep.mubr.f32.mxu0 0.0
        %1446 = vmatmul.mubr.f32.gmra.mrb[0].mxu0 %v1130
        %v1447 = vpop.f32.mrb[0].mxu0
        %v1448 = vadd.f32 %v1379, %v1447
        %v1449 = vpop.f32.mrb[0].mxu0
        %1450 = vdwg.mxu0
        %v1451 = vld [vmem:[#allocation2] sm:$0xff]
        %v1452 = vld [vmem:[#allocation2 + $0x8] sm:$0xff]
        %v1453 = vld [vmem:[#allocation2 + $0x10] sm:$0xff]
        %v1454 = vld [vmem:[#allocation2 + $0x18] sm:$0xff]
        %v1455 = vld [vmem:[%s413] sm:$0x1]
        %v1457 = vlaneseq
        %v1458 = vshrl.u32 %v1457, 7
        %v1459 = vsub.s32 0, %v1458
        %v1460 = vrot.slane %v1455, %v1459
        %vm1462 = vcmask 64512
        %v1464 = vsel %vm1462, %v1451, 0
        %v1467 = vsel %vm1462, %v864, 0
        %1469 = vmatprep.subr.mxu0 0.0
        %1470 = vmatpush1.xpose.msra.mxu0 %v1467
        %1471 = vmatprep.subr.mxu0 0.0
        %1472 = vmatpush1.xpose.msra.mxu0 0.0
        %1473 = vmatprep.subr.mxu0 0.0
        %1474 = vmatpush1.xpose.msra.mxu0 0.0
        %1475 = vmatprep.subr.mxu0 0.0
        %1476 = vmatpush1.xpose.msra.mxu0 0.0
        %1477 = vmatprep.subr.mxu0 0.0
        %1478 = vmatpush1.xpose.msra.mxu0 0.0
        %1479 = vmatprep.subr.mxu0 0.0
        %1480 = vmatpush1.xpose.msra.mxu0 0.0
        %1481 = vmatprep.subr.mxu0 0.0
        %1482 = vmatpush1.xpose.msra.mxu0 0.0
        %1483 = vmatprep.subr.mxu0 0.0
        %1484 = vmatpush1.xpose.msra.mxu0 0.0
        %1485 = vmatprep.subr.mxu0 0.0
        %1486 = vmatpush1.xpose.msra.mxu0 0.0
        %1487 = vmatprep.subr.mxu0 0.0
        %1488 = vmatpush1.xpose.msra.mxu0 0.0
        %1489 = vmatprep.subr.mxu0 0.0
        %1490 = vmatpush1.xpose.msra.mxu0 0.0
        %1491 = vmatprep.subr.mxu0 0.0
        %1492 = vmatpush1.xpose.msra.mxu0 0.0
        %1493 = vmatprep.subr.mxu0 0.0
        %1494 = vmatpush1.xpose.msra.mxu0 0.0
        %1495 = vmatprep.subr.mxu0 0.0
        %1496 = vmatpush1.xpose.msra.mxu0 0.0
        %1497 = vmatprep.subr.mxu0 0.0
        %1498 = vmatpush1.xpose.msra.mxu0 0.0
        %1499 = vmatprep.subr.mxu0 0.0
        %1500 = vmatpush1.xpose.msra.mxu0 0.0
        %1501 = vmatprep.subr.mxu0 0.0
        %1502 = vmatpush1.xpose.msra.mxu0 0.0
        %1503 = vmatprep.subr.mxu0 0.0
        %1504 = vmatpush1.xpose.msra.mxu0 0.0
        %1505 = vmatprep.subr.mxu0 0.0
        %1506 = vmatpush1.xpose.msra.mxu0 0.0
        %1507 = vmatprep.subr.mxu0 0.0
        %1508 = vmatpush1.xpose.msra.mxu0 0.0
        %1509 = vmatprep.subr.mxu0 0.0
        %1510 = vmatpush1.xpose.msra.mxu0 0.0
        %1511 = vmatprep.subr.mxu0 0.0
        %1512 = vmatpush1.xpose.msra.mxu0 0.0
        %1513 = vmatprep.subr.mxu0 0.0
        %1514 = vmatpush1.xpose.msra.mxu0 0.0
        %1515 = vmatprep.subr.mxu0 0.0
        %1516 = vmatpush1.xpose.msra.mxu0 0.0
        %1517 = vmatprep.subr.mxu0 0.0
        %1518 = vmatpush1.xpose.msra.mxu0 0.0
        %1519 = vmatprep.subr.mxu0 0.0
        %1520 = vmatpush1.xpose.msra.mxu0 0.0
        %1521 = vmatprep.subr.mxu0 0.0
        %1522 = vmatpush1.xpose.msra.mxu0 0.0
        %1523 = vmatprep.subr.mxu0 0.0
        %1524 = vmatpush1.xpose.msra.mxu0 0.0
        %1525 = vmatprep.subr.mxu0 0.0
        %1526 = vmatpush1.xpose.msra.mxu0 0.0
        %1527 = vmatprep.subr.mxu0 0.0
        %1528 = vmatpush1.xpose.msra.mxu0 0.0
        %1529 = vmatprep.subr.mxu0 0.0
        %1530 = vmatpush1.xpose.msra.mxu0 0.0
        %1531 = vmatprep.subr.mxu0 0.0
        %1532 = vmatpush1.xpose.msra.mxu0 0.0
        %1533 = vmatprep.mubr.f32.mxu0 0.0
        %1534 = vmatmul.mubr.f32.gmra.mrb[0].mxu0 %v1464
        %v1535 = vpop.f32.mrb[0].mxu0
        %v1536 = vadd.f32 %v1460, %v1535
        %v1537 = vpop.f32.mrb[0].mxu0
        %1538 = vdwg.mxu0
        %v1540 = vsel %vm1462, %v1452, 0
        %v1543 = vsel %vm1462, %v947, 0
        %1545 = vmatprep.subr.mxu0 0.0
        %1546 = vmatpush1.xpose.msra.mxu0 %v1543
        %1547 = vmatprep.subr.mxu0 0.0
        %1548 = vmatpush1.xpose.msra.mxu0 0.0
        %1549 = vmatprep.subr.mxu0 0.0
        %1550 = vmatpush1.xpose.msra.mxu0 0.0
        %1551 = vmatprep.subr.mxu0 0.0
        %1552 = vmatpush1.xpose.msra.mxu0 0.0
        %1553 = vmatprep.subr.mxu0 0.0
        %1554 = vmatpush1.xpose.msra.mxu0 0.0
        %1555 = vmatprep.subr.mxu0 0.0
        %1556 = vmatpush1.xpose.msra.mxu0 0.0
        %1557 = vmatprep.subr.mxu0 0.0
        %1558 = vmatpush1.xpose.msra.mxu0 0.0
        %1559 = vmatprep.subr.mxu0 0.0
        %1560 = vmatpush1.xpose.msra.mxu0 0.0
        %1561 = vmatprep.subr.mxu0 0.0
        %1562 = vmatpush1.xpose.msra.mxu0 0.0
        %1563 = vmatprep.subr.mxu0 0.0
        %1564 = vmatpush1.xpose.msra.mxu0 0.0
        %1565 = vmatprep.subr.mxu0 0.0
        %1566 = vmatpush1.xpose.msra.mxu0 0.0
        %1567 = vmatprep.subr.mxu0 0.0
        %1568 = vmatpush1.xpose.msra.mxu0 0.0
        %1569 = vmatprep.subr.mxu0 0.0
        %1570 = vmatpush1.xpose.msra.mxu0 0.0
        %1571 = vmatprep.subr.mxu0 0.0
        %1572 = vmatpush1.xpose.msra.mxu0 0.0
        %1573 = vmatprep.subr.mxu0 0.0
        %1574 = vmatpush1.xpose.msra.mxu0 0.0
        %1575 = vmatprep.subr.mxu0 0.0
        %1576 = vmatpush1.xpose.msra.mxu0 0.0
        %1577 = vmatprep.subr.mxu0 0.0
        %1578 = vmatpush1.xpose.msra.mxu0 0.0
        %1579 = vmatprep.subr.mxu0 0.0
        %1580 = vmatpush1.xpose.msra.mxu0 0.0
        %1581 = vmatprep.subr.mxu0 0.0
        %1582 = vmatpush1.xpose.msra.mxu0 0.0
        %1583 = vmatprep.subr.mxu0 0.0
        %1584 = vmatpush1.xpose.msra.mxu0 0.0
        %1585 = vmatprep.subr.mxu0 0.0
        %1586 = vmatpush1.xpose.msra.mxu0 0.0
        %1587 = vmatprep.subr.mxu0 0.0
        %1588 = vmatpush1.xpose.msra.mxu0 0.0
        %1589 = vmatprep.subr.mxu0 0.0
        %1590 = vmatpush1.xpose.msra.mxu0 0.0
        %1591 = vmatprep.subr.mxu0 0.0
        %1592 = vmatpush1.xpose.msra.mxu0 0.0
        %1593 = vmatprep.subr.mxu0 0.0
        %1594 = vmatpush1.xpose.msra.mxu0 0.0
        %1595 = vmatprep.subr.mxu0 0.0
        %1596 = vmatpush1.xpose.msra.mxu0 0.0
        %1597 = vmatprep.subr.mxu0 0.0
        %1598 = vmatpush1.xpose.msra.mxu0 0.0
        %1599 = vmatprep.subr.mxu0 0.0
        %1600 = vmatpush1.xpose.msra.mxu0 0.0
        %1601 = vmatprep.subr.mxu0 0.0
        %1602 = vmatpush1.xpose.msra.mxu0 0.0
        %1603 = vmatprep.subr.mxu0 0.0
        %1604 = vmatpush1.xpose.msra.mxu0 0.0
        %1605 = vmatprep.subr.mxu0 0.0
        %1606 = vmatpush1.xpose.msra.mxu0 0.0
        %1607 = vmatprep.subr.mxu0 0.0
        %1608 = vmatpush1.xpose.msra.mxu0 0.0
        %1609 = vmatprep.mubr.f32.mxu0 0.0
        %1610 = vmatmul.mubr.f32.gmra.mrb[0].mxu0 %v1540
        %v1611 = vpop.f32.mrb[0].mxu0
        %v1612 = vadd.f32 %v1460, %v1611
        %v1613 = vpop.f32.mrb[0].mxu0
        %1614 = vdwg.mxu0
        %v1616 = vsel %vm1462, %v1453, 0
        %v1619 = vsel %vm1462, %v1030, 0
        %1621 = vmatprep.subr.mxu0 0.0
        %1622 = vmatpush1.xpose.msra.mxu0 %v1619
        %1623 = vmatprep.subr.mxu0 0.0
        %1624 = vmatpush1.xpose.msra.mxu0 0.0
        %1625 = vmatprep.subr.mxu0 0.0
        %1626 = vmatpush1.xpose.msra.mxu0 0.0
        %1627 = vmatprep.subr.mxu0 0.0
        %1628 = vmatpush1.xpose.msra.mxu0 0.0
        %1629 = vmatprep.subr.mxu0 0.0
        %1630 = vmatpush1.xpose.msra.mxu0 0.0
        %1631 = vmatprep.subr.mxu0 0.0
        %1632 = vmatpush1.xpose.msra.mxu0 0.0
        %1633 = vmatprep.subr.mxu0 0.0
        %1634 = vmatpush1.xpose.msra.mxu0 0.0
        %1635 = vmatprep.subr.mxu0 0.0
        %1636 = vmatpush1.xpose.msra.mxu0 0.0
        %1637 = vmatprep.subr.mxu0 0.0
        %1638 = vmatpush1.xpose.msra.mxu0 0.0
        %1639 = vmatprep.subr.mxu0 0.0
        %1640 = vmatpush1.xpose.msra.mxu0 0.0
        %1641 = vmatprep.subr.mxu0 0.0
        %1642 = vmatpush1.xpose.msra.mxu0 0.0
        %1643 = vmatprep.subr.mxu0 0.0
        %1644 = vmatpush1.xpose.msra.mxu0 0.0
        %1645 = vmatprep.subr.mxu0 0.0
        %1646 = vmatpush1.xpose.msra.mxu0 0.0
        %1647 = vmatprep.subr.mxu0 0.0
        %1648 = vmatpush1.xpose.msra.mxu0 0.0
        %1649 = vmatprep.subr.mxu0 0.0
        %1650 = vmatpush1.xpose.msra.mxu0 0.0
        %1651 = vmatprep.subr.mxu0 0.0
        %1652 = vmatpush1.xpose.msra.mxu0 0.0
        %1653 = vmatprep.subr.mxu0 0.0
        %1654 = vmatpush1.xpose.msra.mxu0 0.0
        %1655 = vmatprep.subr.mxu0 0.0
        %1656 = vmatpush1.xpose.msra.mxu0 0.0
        %1657 = vmatprep.subr.mxu0 0.0
        %1658 = vmatpush1.xpose.msra.mxu0 0.0
        %1659 = vmatprep.subr.mxu0 0.0
        %1660 = vmatpush1.xpose.msra.mxu0 0.0
        %1661 = vmatprep.subr.mxu0 0.0
        %1662 = vmatpush1.xpose.msra.mxu0 0.0
        %1663 = vmatprep.subr.mxu0 0.0
        %1664 = vmatpush1.xpose.msra.mxu0 0.0
        %1665 = vmatprep.subr.mxu0 0.0
        %1666 = vmatpush1.xpose.msra.mxu0 0.0
        %1667 = vmatprep.subr.mxu0 0.0
        %1668 = vmatpush1.xpose.msra.mxu0 0.0
        %1669 = vmatprep.subr.mxu0 0.0
        %1670 = vmatpush1.xpose.msra.mxu0 0.0
        %1671 = vmatprep.subr.mxu0 0.0
        %1672 = vmatpush1.xpose.msra.mxu0 0.0
        %1673 = vmatprep.subr.mxu0 0.0
        %1674 = vmatpush1.xpose.msra.mxu0 0.0
        %1675 = vmatprep.subr.mxu0 0.0
        %1676 = vmatpush1.xpose.msra.mxu0 0.0
        %1677 = vmatprep.subr.mxu0 0.0
        %1678 = vmatpush1.xpose.msra.mxu0 0.0
        %1679 = vmatprep.subr.mxu0 0.0
        %1680 = vmatpush1.xpose.msra.mxu0 0.0
        %1681 = vmatprep.subr.mxu0 0.0
        %1682 = vmatpush1.xpose.msra.mxu0 0.0
        %1683 = vmatprep.subr.mxu0 0.0
        %1684 = vmatpush1.xpose.msra.mxu0 0.0
        %1685 = vmatprep.mubr.f32.mxu0 0.0
        %1686 = vmatmul.mubr.f32.gmra.mrb[0].mxu0 %v1616
        %v1687 = vpop.f32.mrb[0].mxu0
        %v1688 = vadd.f32 %v1460, %v1687
        %v1689 = vpop.f32.mrb[0].mxu0
        %1690 = vdwg.mxu0
        %v1692 = vsel %vm1462, %v1454, 0
        %v1695 = vsel %vm1462, %v1113, 0
        %1697 = vmatprep.subr.mxu0 0.0
        %1698 = vmatpush1.xpose.msra.mxu0 %v1695
        %1699 = vmatprep.subr.mxu0 0.0
        %1700 = vmatpush1.xpose.msra.mxu0 0.0
        %1701 = vmatprep.subr.mxu0 0.0
        %1702 = vmatpush1.xpose.msra.mxu0 0.0
        %1703 = vmatprep.subr.mxu0 0.0
        %1704 = vmatpush1.xpose.msra.mxu0 0.0
        %1705 = vmatprep.subr.mxu0 0.0
        %1706 = vmatpush1.xpose.msra.mxu0 0.0
        %1707 = vmatprep.subr.mxu0 0.0
        %1708 = vmatpush1.xpose.msra.mxu0 0.0
        %1709 = vmatprep.subr.mxu0 0.0
        %1710 = vmatpush1.xpose.msra.mxu0 0.0
        %1711 = vmatprep.subr.mxu0 0.0
        %1712 = vmatpush1.xpose.msra.mxu0 0.0
        %1713 = vmatprep.subr.mxu0 0.0
        %1714 = vmatpush1.xpose.msra.mxu0 0.0
        %1715 = vmatprep.subr.mxu0 0.0
        %1716 = vmatpush1.xpose.msra.mxu0 0.0
        %1717 = vmatprep.subr.mxu0 0.0
        %1718 = vmatpush1.xpose.msra.mxu0 0.0
        %1719 = vmatprep.subr.mxu0 0.0
        %1720 = vmatpush1.xpose.msra.mxu0 0.0
        %1721 = vmatprep.subr.mxu0 0.0
        %1722 = vmatpush1.xpose.msra.mxu0 0.0
        %1723 = vmatprep.subr.mxu0 0.0
        %1724 = vmatpush1.xpose.msra.mxu0 0.0
        %1725 = vmatprep.subr.mxu0 0.0
        %1726 = vmatpush1.xpose.msra.mxu0 0.0
        %1727 = vmatprep.subr.mxu0 0.0
        %1728 = vmatpush1.xpose.msra.mxu0 0.0
        %1729 = vmatprep.subr.mxu0 0.0
        %1730 = vmatpush1.xpose.msra.mxu0 0.0
        %1731 = vmatprep.subr.mxu0 0.0
        %1732 = vmatpush1.xpose.msra.mxu0 0.0
        %1733 = vmatprep.subr.mxu0 0.0
        %1734 = vmatpush1.xpose.msra.mxu0 0.0
        %1735 = vmatprep.subr.mxu0 0.0
        %1736 = vmatpush1.xpose.msra.mxu0 0.0
        %1737 = vmatprep.subr.mxu0 0.0
        %1738 = vmatpush1.xpose.msra.mxu0 0.0
        %1739 = vmatprep.subr.mxu0 0.0
        %1740 = vmatpush1.xpose.msra.mxu0 0.0
        %1741 = vmatprep.subr.mxu0 0.0
        %1742 = vmatpush1.xpose.msra.mxu0 0.0
        %1743 = vmatprep.subr.mxu0 0.0
        %1744 = vmatpush1.xpose.msra.mxu0 0.0
        %1745 = vmatprep.subr.mxu0 0.0
        %1746 = vmatpush1.xpose.msra.mxu0 0.0
        %1747 = vmatprep.subr.mxu0 0.0
        %1748 = vmatpush1.xpose.msra.mxu0 0.0
        %1749 = vmatprep.subr.mxu0 0.0
        %1750 = vmatpush1.xpose.msra.mxu0 0.0
        %1751 = vmatprep.subr.mxu0 0.0
        %1752 = vmatpush1.xpose.msra.mxu0 0.0
        %1753 = vmatprep.subr.mxu0 0.0
        %1754 = vmatpush1.xpose.msra.mxu0 0.0
        %1755 = vmatprep.subr.mxu0 0.0
        %1756 = vmatpush1.xpose.msra.mxu0 0.0
        %1757 = vmatprep.subr.mxu0 0.0
        %1758 = vmatpush1.xpose.msra.mxu0 0.0
        %1759 = vmatprep.subr.mxu0 0.0
        %1760 = vmatpush1.xpose.msra.mxu0 0.0
        %1761 = vmatprep.mubr.f32.mxu0 0.0
        %1762 = vmatmul.mubr.f32.gmra.mrb[0].mxu0 %v1692
        %v1763 = vpop.f32.mrb[0].mxu0
        %v1764 = vadd.f32 %v1460, %v1763
        %v1765 = vpop.f32.mrb[0].mxu0
        %1766 = vdwg.mxu0
        %v1767 = vld [vmem:[#allocation3] sm:$0xff]
        %v1768 = vld [vmem:[#allocation3 + $0x8] sm:$0xff]
        %v1769 = vld [vmem:[#allocation3 + $0x10] sm:$0xff]
        %v1770 = vld [vmem:[#allocation3 + $0x18] sm:$0xff]
        %v1771 = vsel %vm1462, %v1536, -inf
        %1772 = vmax.xlane.f32.xlu0 %v1771
        %v1773 = vpop.xlane.xlu0 %1772
        %v1774 = vsel %vm1462, %v1612, -inf
        %1775 = vmax.xlane.f32.xlu0 %v1774
        %v1776 = vpop.xlane.xlu0 %1775
        %v1777 = vsel %vm1462, %v1688, -inf
        %1778 = vmax.xlane.f32.xlu0 %v1777
        %v1779 = vpop.xlane.xlu0 %1778
        %v1780 = vsel %vm1462, %v1764, -inf
        %1781 = vmax.xlane.f32.xlu0 %v1780
        %v1782 = vpop.xlane.xlu0 %1781
        %v1783 = vmax.f32 %v1767, %v1773
        %v1784 = vmax.f32 %v1768, %v1776
        %v1785 = vmax.f32 %v1769, %v1779
        %v1786 = vmax.f32 %v1770, %v1782
        %v1787 = vsub.f32 %v1767, %v1783
        %v1788 = vsub.f32 %v1768, %v1784
        %v1789 = vsub.f32 %v1769, %v1785
        %v1790 = vsub.f32 %v1770, %v1786
        %v1791 = vmul.f32 %v1787, 1.442695
        %v1792 = vpow.pop %v1791
        %v1793 = vmul.f32 %v1788, 1.442695
        %v1794 = vpow.pop %v1793
        %v1795 = vmul.f32 %v1789, 1.442695
        %v1796 = vpow.pop %v1795
        %v1797 = vmul.f32 %v1790, 1.442695
        %v1798 = vpow.pop %v1797
        %1800 = vset.pattern.permute.xlu0 0
        %1801 = vperm.xlu0 %1800, %v1783
        %v1802 = vpop.permute.xlu0 %1801
        %1805 = vset.pattern.permute.xlu0 0
        %1806 = vperm.xlu0 %1805, %v1784
        %v1807 = vpop.permute.xlu0 %1806
        %1810 = vset.pattern.permute.xlu0 0
        %1811 = vperm.xlu0 %1810, %v1785
        %v1812 = vpop.permute.xlu0 %1811
        %1815 = vset.pattern.permute.xlu0 0
        %1816 = vperm.xlu0 %1815, %v1786
        %v1817 = vpop.permute.xlu0 %1816
        %v1819 = vsub.f32 %v1536, %v1802
        %v1820 = vsub.f32 %v1612, %v1807
        %v1821 = vsub.f32 %v1688, %v1812
        %v1822 = vsub.f32 %v1764, %v1817
        %v1823 = vmul.f32 %v1819, 1.442695
        %v1824 = vpow.pop %v1823
        %v1825 = vmul.f32 %v1820, 1.442695
        %v1826 = vpow.pop %v1825
        %v1827 = vmul.f32 %v1821, 1.442695
        %v1828 = vpow.pop %v1827
        %v1829 = vmul.f32 %v1822, 1.442695
        %v1830 = vpow.pop %v1829
        %v1831 = vld [vmem:[#allocation4] sm:$0xff]
        %v1832 = vld [vmem:[#allocation4 + $0x8] sm:$0xff]
        %v1833 = vld [vmem:[#allocation4 + $0x10] sm:$0xff]
        %v1834 = vld [vmem:[#allocation4 + $0x18] sm:$0xff]
        %v1835 = vmul.f32 %v1792, %v1831
        %v1836 = vmul.f32 %v1794, %v1832
        %v1837 = vmul.f32 %v1796, %v1833
        %v1838 = vmul.f32 %v1798, %v1834
        %v1839 = vsel %vm1462, %v1824, 0.0
        %1840 = vadd.xlane.f32.xlu0 %v1839
        %v1841 = vpop.xlane.xlu0 %1840
        %v1842 = vsel %vm1462, %v1826, 0.0
        %1843 = vadd.xlane.f32.xlu0 %v1842
        %v1844 = vpop.xlane.xlu0 %1843
        %v1845 = vsel %vm1462, %v1828, 0.0
        %1846 = vadd.xlane.f32.xlu0 %v1845
        %v1847 = vpop.xlane.xlu0 %1846
        %v1848 = vsel %vm1462, %v1830, 0.0
        %1849 = vadd.xlane.f32.xlu0 %v1848
        %v1850 = vpop.xlane.xlu0 %1849
        %v1851 = vadd.f32 %v1835, %v1841
        %v1852 = vadd.f32 %v1836, %v1844
        %v1853 = vadd.f32 %v1837, %v1847
        %v1854 = vadd.f32 %v1838, %v1850
        %vm1855 = vcmask 7168
        %1856 = vst.msk [vmem:[#allocation4] sm:$0xff] %vm1855, %v1851
        %1857 = vst.msk [vmem:[#allocation4 + $0x8] sm:$0xff] %vm1855, %v1852
        %1858 = vst.msk [vmem:[#allocation4 + $0x10] sm:$0xff] %vm1855, %v1853
        %1859 = vst.msk [vmem:[#allocation4 + $0x18] sm:$0xff] %vm1855, %v1854
        %v1860 = vld [vmem:[#allocation5] sm:$0xff]
        %v1861 = vld [vmem:[#allocation5 + $0x8] sm:$0xff]
        %v1862 = vld [vmem:[#allocation5 + $0x10] sm:$0xff]
        %v1863 = vld [vmem:[#allocation5 + $0x18] sm:$0xff]
        %1865 = vset.pattern.permute.xlu0 0
        %1866 = vperm.xlu0 %1865, %v1792
        %v1867 = vpop.permute.xlu0 %1866
        %1870 = vset.pattern.permute.xlu0 0
        %1871 = vperm.xlu0 %1870, %v1794
        %v1872 = vpop.permute.xlu0 %1871
        %1875 = vset.pattern.permute.xlu0 0
        %1876 = vperm.xlu0 %1875, %v1796
        %v1877 = vpop.permute.xlu0 %1876
        %1880 = vset.pattern.permute.xlu0 0
        %1881 = vperm.xlu0 %1880, %v1798
        %v1882 = vpop.permute.xlu0 %1881
        %v1884 = vmul.f32 %v1867, %v1860
        %v1885 = vmul.f32 %v1872, %v1861
        %v1886 = vmul.f32 %v1877, %v1862
        %v1887 = vmul.f32 %v1882, %v1863
        %v1889 = vsel %vm1462, %v1824, 0
        %1891 = vmatprep.subr.mxu0 0.0
        %1892 = vmatpush1.msra.mxu0 %v1199
        %1893 = vmatprep.subr.mxu0 0.0
        %1894 = vmatpush1.msra.mxu0 0.0
        %1895 = vmatprep.subr.mxu0 0.0
        %1896 = vmatpush1.msra.mxu0 0.0
        %1897 = vmatprep.subr.mxu0 0.0
        %1898 = vmatpush1.msra.mxu0 0.0
        %1899 = vmatprep.subr.mxu0 0.0
        %1900 = vmatpush1.msra.mxu0 0.0
        %1901 = vmatprep.subr.mxu0 0.0
        %1902 = vmatpush1.msra.mxu0 0.0
        %1903 = vmatprep.subr.mxu0 0.0
        %1904 = vmatpush1.msra.mxu0 0.0
        %1905 = vmatprep.subr.mxu0 0.0
        %1906 = vmatpush1.msra.mxu0 0.0
        %1907 = vmatprep.subr.mxu0 0.0
        %1908 = vmatpush1.msra.mxu0 0.0
        %1909 = vmatprep.subr.mxu0 0.0
        %1910 = vmatpush1.msra.mxu0 0.0
        %1911 = vmatprep.subr.mxu0 0.0
        %1912 = vmatpush1.msra.mxu0 0.0
        %1913 = vmatprep.subr.mxu0 0.0
        %1914 = vmatpush1.msra.mxu0 0.0
        %1915 = vmatprep.subr.mxu0 0.0
        %1916 = vmatpush1.msra.mxu0 0.0
        %1917 = vmatprep.subr.mxu0 0.0
        %1918 = vmatpush1.msra.mxu0 0.0
        %1919 = vmatprep.subr.mxu0 0.0
        %1920 = vmatpush1.msra.mxu0 0.0
        %1921 = vmatprep.subr.mxu0 0.0
        %1922 = vmatpush1.msra.mxu0 0.0
        %1923 = vmatprep.subr.mxu0 0.0
        %1924 = vmatpush1.msra.mxu0 0.0
        %1925 = vmatprep.subr.mxu0 0.0
        %1926 = vmatpush1.msra.mxu0 0.0
        %1927 = vmatprep.subr.mxu0 0.0
        %1928 = vmatpush1.msra.mxu0 0.0
        %1929 = vmatprep.subr.mxu0 0.0
        %1930 = vmatpush1.msra.mxu0 0.0
        %1931 = vmatprep.subr.mxu0 0.0
        %1932 = vmatpush1.msra.mxu0 0.0
        %1933 = vmatprep.subr.mxu0 0.0
        %1934 = vmatpush1.msra.mxu0 0.0
        %1935 = vmatprep.subr.mxu0 0.0
        %1936 = vmatpush1.msra.mxu0 0.0
        %1937 = vmatprep.subr.mxu0 0.0
        %1938 = vmatpush1.msra.mxu0 0.0
        %1939 = vmatprep.subr.mxu0 0.0
        %1940 = vmatpush1.msra.mxu0 0.0
        %1941 = vmatprep.subr.mxu0 0.0
        %1942 = vmatpush1.msra.mxu0 0.0
        %1943 = vmatprep.subr.mxu0 0.0
        %1944 = vmatpush1.msra.mxu0 0.0
        %1945 = vmatprep.subr.mxu0 0.0
        %1946 = vmatpush1.msra.mxu0 0.0
        %1947 = vmatprep.subr.mxu0 0.0
        %1948 = vmatpush1.msra.mxu0 0.0
        %1949 = vmatprep.subr.mxu0 0.0
        %1950 = vmatpush1.msra.mxu0 0.0
        %1951 = vmatprep.subr.mxu0 0.0
        %1952 = vmatpush1.msra.mxu0 0.0
        %1953 = vmatprep.subr.mxu0 0.0
        %1954 = vmatpush1.msra.mxu0 0.0
        %1955 = vmatprep.mubr.f32.mxu0 0.0
        %1956 = vmatmul.mubr.f32.gmra.mrb[0].mxu0 %v1889
        %v1957 = vpop.f32.mrb[0].mxu0
        %v1958 = vadd.f32 0.0, %v1957
        %v1959 = vpop.f32.mrb[0].mxu0
        %1960 = vdwg.mxu0
        %v1962 = vsel %vm1462, %v1826, 0
        %1964 = vmatprep.subr.mxu0 0.0
        %1965 = vmatpush1.msra.mxu0 %v1282
        %1966 = vmatprep.subr.mxu0 0.0
        %1967 = vmatpush1.msra.mxu0 0.0
        %1968 = vmatprep.subr.mxu0 0.0
        %1969 = vmatpush1.msra.mxu0 0.0
        %1970 = vmatprep.subr.mxu0 0.0
        %1971 = vmatpush1.msra.mxu0 0.0
        %1972 = vmatprep.subr.mxu0 0.0
        %1973 = vmatpush1.msra.mxu0 0.0
        %1974 = vmatprep.subr.mxu0 0.0
        %1975 = vmatpush1.msra.mxu0 0.0
        %1976 = vmatprep.subr.mxu0 0.0
        %1977 = vmatpush1.msra.mxu0 0.0
        %1978 = vmatprep.subr.mxu0 0.0
        %1979 = vmatpush1.msra.mxu0 0.0
        %1980 = vmatprep.subr.mxu0 0.0
        %1981 = vmatpush1.msra.mxu0 0.0
        %1982 = vmatprep.subr.mxu0 0.0
        %1983 = vmatpush1.msra.mxu0 0.0
        %1984 = vmatprep.subr.mxu0 0.0
        %1985 = vmatpush1.msra.mxu0 0.0
        %1986 = vmatprep.subr.mxu0 0.0
        %1987 = vmatpush1.msra.mxu0 0.0
        %1988 = vmatprep.subr.mxu0 0.0
        %1989 = vmatpush1.msra.mxu0 0.0
        %1990 = vmatprep.subr.mxu0 0.0
        %1991 = vmatpush1.msra.mxu0 0.0
        %1992 = vmatprep.subr.mxu0 0.0
        %1993 = vmatpush1.msra.mxu0 0.0
        %1994 = vmatprep.subr.mxu0 0.0
        %1995 = vmatpush1.msra.mxu0 0.0
        %1996 = vmatprep.subr.mxu0 0.0
        %1997 = vmatpush1.msra.mxu0 0.0
        %1998 = vmatprep.subr.mxu0 0.0
        %1999 = vmatpush1.msra.mxu0 0.0
        %2000 = vmatprep.subr.mxu0 0.0
        %2001 = vmatpush1.msra.mxu0 0.0
        %2002 = vmatprep.subr.mxu0 0.0
        %2003 = vmatpush1.msra.mxu0 0.0
        %2004 = vmatprep.subr.mxu0 0.0
        %2005 = vmatpush1.msra.mxu0 0.0
        %2006 = vmatprep.subr.mxu0 0.0
        %2007 = vmatpush1.msra.mxu0 0.0
        %2008 = vmatprep.subr.mxu0 0.0
        %2009 = vmatpush1.msra.mxu0 0.0
        %2010 = vmatprep.subr.mxu0 0.0
        %2011 = vmatpush1.msra.mxu0 0.0
        %2012 = vmatprep.subr.mxu0 0.0
        %2013 = vmatpush1.msra.mxu0 0.0
        %2014 = vmatprep.subr.mxu0 0.0
        %2015 = vmatpush1.msra.mxu0 0.0
        %2016 = vmatprep.subr.mxu0 0.0
        %2017 = vmatpush1.msra.mxu0 0.0
        %2018 = vmatprep.subr.mxu0 0.0
        %2019 = vmatpush1.msra.mxu0 0.0
        %2020 = vmatprep.subr.mxu0 0.0
        %2021 = vmatpush1.msra.mxu0 0.0
        %2022 = vmatprep.subr.mxu0 0.0
        %2023 = vmatpush1.msra.mxu0 0.0
        %2024 = vmatprep.subr.mxu0 0.0
        %2025 = vmatpush1.msra.mxu0 0.0
        %2026 = vmatprep.subr.mxu0 0.0
        %2027 = vmatpush1.msra.mxu0 0.0
        %2028 = vmatprep.mubr.f32.mxu0 0.0
        %2029 = vmatmul.mubr.f32.gmra.mrb[0].mxu0 %v1962
        %v2030 = vpop.f32.mrb[0].mxu0
        %v2031 = vadd.f32 0.0, %v2030
        %v2032 = vpop.f32.mrb[0].mxu0
        %2033 = vdwg.mxu0
        %v2035 = vsel %vm1462, %v1828, 0
        %2037 = vmatprep.subr.mxu0 0.0
        %2038 = vmatpush1.msra.mxu0 %v1365
        %2039 = vmatprep.subr.mxu0 0.0
        %2040 = vmatpush1.msra.mxu0 0.0
        %2041 = vmatprep.subr.mxu0 0.0
        %2042 = vmatpush1.msra.mxu0 0.0
        %2043 = vmatprep.subr.mxu0 0.0
        %2044 = vmatpush1.msra.mxu0 0.0
        %2045 = vmatprep.subr.mxu0 0.0
        %2046 = vmatpush1.msra.mxu0 0.0
        %2047 = vmatprep.subr.mxu0 0.0
        %2048 = vmatpush1.msra.mxu0 0.0
        %2049 = vmatprep.subr.mxu0 0.0
        %2050 = vmatpush1.msra.mxu0 0.0
        %2051 = vmatprep.subr.mxu0 0.0
        %2052 = vmatpush1.msra.mxu0 0.0
        %2053 = vmatprep.subr.mxu0 0.0
        %2054 = vmatpush1.msra.mxu0 0.0
        %2055 = vmatprep.subr.mxu0 0.0
        %2056 = vmatpush1.msra.mxu0 0.0
        %2057 = vmatprep.subr.mxu0 0.0
        %2058 = vmatpush1.msra.mxu0 0.0
        %2059 = vmatprep.subr.mxu0 0.0
        %2060 = vmatpush1.msra.mxu0 0.0
        %2061 = vmatprep.subr.mxu0 0.0
        %2062 = vmatpush1.msra.mxu0 0.0
        %2063 = vmatprep.subr.mxu0 0.0
        %2064 = vmatpush1.msra.mxu0 0.0
        %2065 = vmatprep.subr.mxu0 0.0
        %2066 = vmatpush1.msra.mxu0 0.0
        %2067 = vmatprep.subr.mxu0 0.0
        %2068 = vmatpush1.msra.mxu0 0.0
        %2069 = vmatprep.subr.mxu0 0.0
        %2070 = vmatpush1.msra.mxu0 0.0
        %2071 = vmatprep.subr.mxu0 0.0
        %2072 = vmatpush1.msra.mxu0 0.0
        %2073 = vmatprep.subr.mxu0 0.0
        %2074 = vmatpush1.msra.mxu0 0.0
        %2075 = vmatprep.subr.mxu0 0.0
        %2076 = vmatpush1.msra.mxu0 0.0
        %2077 = vmatprep.subr.mxu0 0.0
        %2078 = vmatpush1.msra.mxu0 0.0
        %2079 = vmatprep.subr.mxu0 0.0
        %2080 = vmatpush1.msra.mxu0 0.0
        %2081 = vmatprep.subr.mxu0 0.0
        %2082 = vmatpush1.msra.mxu0 0.0
        %2083 = vmatprep.subr.mxu0 0.0
        %2084 = vmatpush1.msra.mxu0 0.0
        %2085 = vmatprep.subr.mxu0 0.0
        %2086 = vmatpush1.msra.mxu0 0.0
        %2087 = vmatprep.subr.mxu0 0.0
        %2088 = vmatpush1.msra.mxu0 0.0
        %2089 = vmatprep.subr.mxu0 0.0
        %2090 = vmatpush1.msra.mxu0 0.0
        %2091 = vmatprep.subr.mxu0 0.0
        %2092 = vmatpush1.msra.mxu0 0.0
        %2093 = vmatprep.subr.mxu0 0.0
        %2094 = vmatpush1.msra.mxu0 0.0
        %2095 = vmatprep.subr.mxu0 0.0
        %2096 = vmatpush1.msra.mxu0 0.0
        %2097 = vmatprep.subr.mxu0 0.0
        %2098 = vmatpush1.msra.mxu0 0.0
        %2099 = vmatprep.subr.mxu0 0.0
        %2100 = vmatpush1.msra.mxu0 0.0
        %2101 = vmatprep.mubr.f32.mxu0 0.0
        %2102 = vmatmul.mubr.f32.gmra.mrb[0].mxu0 %v2035
        %v2103 = vpop.f32.mrb[0].mxu0
        %v2104 = vadd.f32 0.0, %v2103
        %v2105 = vpop.f32.mrb[0].mxu0
        %2106 = vdwg.mxu0
        %v2108 = vsel %vm1462, %v1830, 0
        %2110 = vmatprep.subr.mxu0 0.0
        %2111 = vmatpush1.msra.mxu0 %v1448
        %2112 = vmatprep.subr.mxu0 0.0
        %2113 = vmatpush1.msra.mxu0 0.0
        %2114 = vmatprep.subr.mxu0 0.0
        %2115 = vmatpush1.msra.mxu0 0.0
        %2116 = vmatprep.subr.mxu0 0.0
        %2117 = vmatpush1.msra.mxu0 0.0
        %2118 = vmatprep.subr.mxu0 0.0
        %2119 = vmatpush1.msra.mxu0 0.0
        %2120 = vmatprep.subr.mxu0 0.0
        %2121 = vmatpush1.msra.mxu0 0.0
        %2122 = vmatprep.subr.mxu0 0.0
        %2123 = vmatpush1.msra.mxu0 0.0
        %2124 = vmatprep.subr.mxu0 0.0
        %2125 = vmatpush1.msra.mxu0 0.0
        %2126 = vmatprep.subr.mxu0 0.0
        %2127 = vmatpush1.msra.mxu0 0.0
        %2128 = vmatprep.subr.mxu0 0.0
        %2129 = vmatpush1.msra.mxu0 0.0
        %2130 = vmatprep.subr.mxu0 0.0
        %2131 = vmatpush1.msra.mxu0 0.0
        %2132 = vmatprep.subr.mxu0 0.0
        %2133 = vmatpush1.msra.mxu0 0.0
        %2134 = vmatprep.subr.mxu0 0.0
        %2135 = vmatpush1.msra.mxu0 0.0
        %2136 = vmatprep.subr.mxu0 0.0
        %2137 = vmatpush1.msra.mxu0 0.0
        %2138 = vmatprep.subr.mxu0 0.0
        %2139 = vmatpush1.msra.mxu0 0.0
        %2140 = vmatprep.subr.mxu0 0.0
        %2141 = vmatpush1.msra.mxu0 0.0
        %2142 = vmatprep.subr.mxu0 0.0
        %2143 = vmatpush1.msra.mxu0 0.0
        %2144 = vmatprep.subr.mxu0 0.0
        %2145 = vmatpush1.msra.mxu0 0.0
        %2146 = vmatprep.subr.mxu0 0.0
        %2147 = vmatpush1.msra.mxu0 0.0
        %2148 = vmatprep.subr.mxu0 0.0
        %2149 = vmatpush1.msra.mxu0 0.0
        %2150 = vmatprep.subr.mxu0 0.0
        %2151 = vmatpush1.msra.mxu0 0.0
        %2152 = vmatprep.subr.mxu0 0.0
        %2153 = vmatpush1.msra.mxu0 0.0
        %2154 = vmatprep.subr.mxu0 0.0
        %2155 = vmatpush1.msra.mxu0 0.0
        %2156 = vmatprep.subr.mxu0 0.0
        %2157 = vmatpush1.msra.mxu0 0.0
        %2158 = vmatprep.subr.mxu0 0.0
        %2159 = vmatpush1.msra.mxu0 0.0
        %2160 = vmatprep.subr.mxu0 0.0
        %2161 = vmatpush1.msra.mxu0 0.0
        %2162 = vmatprep.subr.mxu0 0.0
        %2163 = vmatpush1.msra.mxu0 0.0
        %2164 = vmatprep.subr.mxu0 0.0
        %2165 = vmatpush1.msra.mxu0 0.0
        %2166 = vmatprep.subr.mxu0 0.0
        %2167 = vmatpush1.msra.mxu0 0.0
        %2168 = vmatprep.subr.mxu0 0.0
        %2169 = vmatpush1.msra.mxu0 0.0
        %2170 = vmatprep.subr.mxu0 0.0
        %2171 = vmatpush1.msra.mxu0 0.0
        %2172 = vmatprep.subr.mxu0 0.0
        %2173 = vmatpush1.msra.mxu0 0.0
        %2174 = vmatprep.mubr.f32.mxu0 0.0
        %2175 = vmatmul.mubr.f32.gmra.mrb[0].mxu0 %v2108
        %v2176 = vpop.f32.mrb[0].mxu0
        %v2177 = vadd.f32 0.0, %v2176
        %v2178 = vpop.f32.mrb[0].mxu0
        %2179 = vdwg.mxu0
        %v2180 = vadd.f32 %v1884, %v1958
        %v2181 = vadd.f32 %v1885, %v2031
        %v2182 = vadd.f32 %v1886, %v2104
        %v2183 = vadd.f32 %v1887, %v2177
        %2184 = vst.msk [vmem:[#allocation5] sm:$0xff] %vm1462, %v2180
        %2185 = vst.msk [vmem:[#allocation5 + $0x8] sm:$0xff] %vm1462, %v2181
        %2186 = vst.msk [vmem:[#allocation5 + $0x10] sm:$0xff] %vm1462, %v2182
        %2187 = vst.msk [vmem:[#allocation5 + $0x18] sm:$0xff] %vm1462, %v2183
        %2188 = vst.msk [vmem:[#allocation3] sm:$0xff] %vm1855, %v1783
        %2189 = vst.msk [vmem:[#allocation3 + $0x8] sm:$0xff] %vm1855, %v1784
        %2190 = vst.msk [vmem:[#allocation3 + $0x10] sm:$0xff] %vm1855, %v1785
        %2191 = vst.msk [vmem:[#allocation3 + $0x18] sm:$0xff] %vm1855, %v1786
        // Predicated region
        $region57: #{tpu_custom_call.1} parent=51 // pred_check
          %p2192 = pneg %p414
        $region58: #{tpu_custom_call.1} parent=51 // pred_check_branch
          %2194 = sbr.rel (%p2192) target = $region60
        $region59: #{tpu_custom_call.1} parent=51 // pred_region
          %v2195 = vld [vmem:[#allocation4] sm:$0xff]
          %v2196 = vld [vmem:[#allocation4 + $0x8] sm:$0xff]
          %v2197 = vld [vmem:[#allocation4 + $0x10] sm:$0xff]
          %v2198 = vld [vmem:[#allocation4 + $0x18] sm:$0xff]
          %v2199 = vrcp.pop %v2195
          %v2200 = vrcp.pop %v2196
          %v2201 = vrcp.pop %v2197
          %v2202 = vrcp.pop %v2198
          %v2203 = vld [vmem:[#allocation5] sm:$0xff]
          %2205 = vset.pattern.permute.xlu0 0
          %2206 = vperm.xlu0 %2205, %v2199
          %v2207 = vpop.permute.xlu0 %2206
          %v2209 = vmul.f32 %v2203, %v2207
          %v2210 = vld [vmem:[%s6] sm:$0xff]
          %s2211 = scalar_lea.vmem [#allocation5], 8
          %v2212 = vld [vmem:[%s2211] sm:$0xff]
          %2214 = vset.pattern.permute.xlu0 0
          %2215 = vperm.xlu0 %2214, %v2200
          %v2216 = vpop.permute.xlu0 %2215
          %v2218 = vmul.f32 %v2212, %v2216
          %s2219 = scalar_lea.vmem %s6, 8
          %v2220 = vld [vmem:[%s2219] sm:$0xff]
          %v2222 = vsel %vm1462, %v2218, 0
          %2224 = vmatprep.subr.mxu0 0.0
          %2225 = vmatpush1.msra.mxu0 %v2220
          %2226 = vmatprep.subr.mxu0 0.0
          %2227 = vmatpush1.msra.mxu0 0.0
          %2228 = vmatprep.subr.mxu0 0.0
          %2229 = vmatpush1.msra.mxu0 0.0
          %2230 = vmatprep.subr.mxu0 0.0
          %2231 = vmatpush1.msra.mxu0 0.0
          %2232 = vmatprep.subr.mxu0 0.0
          %2233 = vmatpush1.msra.mxu0 0.0
          %2234 = vmatprep.subr.mxu0 0.0
          %2235 = vmatpush1.msra.mxu0 0.0
          %2236 = vmatprep.subr.mxu0 0.0
          %2237 = vmatpush1.msra.mxu0 0.0
          %2238 = vmatprep.subr.mxu0 0.0
          %2239 = vmatpush1.msra.mxu0 0.0
          %2240 = vmatprep.subr.mxu0 0.0
          %2241 = vmatpush1.msra.mxu0 0.0
          %2242 = vmatprep.subr.mxu0 0.0
          %2243 = vmatpush1.msra.mxu0 0.0
          %2244 = vmatprep.subr.mxu0 0.0
          %2245 = vmatpush1.msra.mxu0 0.0
          %2246 = vmatprep.subr.mxu0 0.0
          %2247 = vmatpush1.msra.mxu0 0.0
          %2248 = vmatprep.subr.mxu0 0.0
          %2249 = vmatpush1.msra.mxu0 0.0
          %2250 = vmatprep.subr.mxu0 0.0
          %2251 = vmatpush1.msra.mxu0 0.0
          %2252 = vmatprep.subr.mxu0 0.0
          %2253 = vmatpush1.msra.mxu0 0.0
          %2254 = vmatprep.subr.mxu0 0.0
          %2255 = vmatpush1.msra.mxu0 0.0
          %2256 = vmatprep.subr.mxu0 0.0
          %2257 = vmatpush1.msra.mxu0 0.0
          %2258 = vmatprep.subr.mxu0 0.0
          %2259 = vmatpush1.msra.mxu0 0.0
          %2260 = vmatprep.subr.mxu0 0.0
          %2261 = vmatpush1.msra.mxu0 0.0
          %2262 = vmatprep.subr.mxu0 0.0
          %2263 = vmatpush1.msra.mxu0 0.0
          %2264 = vmatprep.subr.mxu0 0.0
          %2265 = vmatpush1.msra.mxu0 0.0
          %2266 = vmatprep.subr.mxu0 0.0
          %2267 = vmatpush1.msra.mxu0 0.0
          %2268 = vmatprep.subr.mxu0 0.0
          %2269 = vmatpush1.msra.mxu0 0.0
          %2270 = vmatprep.subr.mxu0 0.0
          %2271 = vmatpush1.msra.mxu0 0.0
          %2272 = vmatprep.subr.mxu0 0.0
          %2273 = vmatpush1.msra.mxu0 0.0
          %2274 = vmatprep.subr.mxu0 0.0
          %2275 = vmatpush1.msra.mxu0 0.0
          %2276 = vmatprep.subr.mxu0 0.0
          %2277 = vmatpush1.msra.mxu0 0.0
          %2278 = vmatprep.subr.mxu0 0.0
          %2279 = vmatpush1.msra.mxu0 0.0
          %2280 = vmatprep.subr.mxu0 0.0
          %2281 = vmatpush1.msra.mxu0 0.0
          %2282 = vmatprep.subr.mxu0 0.0
          %2283 = vmatpush1.msra.mxu0 0.0
          %2284 = vmatprep.subr.mxu0 0.0
          %2285 = vmatpush1.msra.mxu0 0.0
          %2286 = vmatprep.subr.mxu0 0.0
          %2287 = vmatpush1.msra.mxu0 0.0
          %2288 = vmatprep.mubr.f32.mxu0 0.0
          %2289 = vmatmul.mubr.f32.gmra.mrb[0].mxu0 %v2222
          %v2290 = vpop.f32.mrb[0].mxu0
          %v2291 = vadd.f32 0.0, %v2290
          %v2292 = vpop.f32.mrb[0].mxu0
          %2293 = vdwg.mxu0
          %v2295 = vsel %vm1462, %v2209, 0
          %2297 = vmatprep.subr.mxu0 0.0
          %2298 = vmatpush1.msra.mxu0 %v2210
          %2299 = vmatprep.subr.mxu0 0.0
          %2300 = vmatpush1.msra.mxu0 0.0
          %2301 = vmatprep.subr.mxu0 0.0
          %2302 = vmatpush1.msra.mxu0 0.0
          %2303 = vmatprep.subr.mxu0 0.0
          %2304 = vmatpush1.msra.mxu0 0.0
          %2305 = vmatprep.subr.mxu0 0.0
          %2306 = vmatpush1.msra.mxu0 0.0
          %2307 = vmatprep.subr.mxu0 0.0
          %2308 = vmatpush1.msra.mxu0 0.0
          %2309 = vmatprep.subr.mxu0 0.0
          %2310 = vmatpush1.msra.mxu0 0.0
          %2311 = vmatprep.subr.mxu0 0.0
          %2312 = vmatpush1.msra.mxu0 0.0
          %2313 = vmatprep.subr.mxu0 0.0
          %2314 = vmatpush1.msra.mxu0 0.0
          %2315 = vmatprep.subr.mxu0 0.0
          %2316 = vmatpush1.msra.mxu0 0.0
          %2317 = vmatprep.subr.mxu0 0.0
          %2318 = vmatpush1.msra.mxu0 0.0
          %2319 = vmatprep.subr.mxu0 0.0
          %2320 = vmatpush1.msra.mxu0 0.0
          %2321 = vmatprep.subr.mxu0 0.0
          %2322 = vmatpush1.msra.mxu0 0.0
          %2323 = vmatprep.subr.mxu0 0.0
          %2324 = vmatpush1.msra.mxu0 0.0
          %2325 = vmatprep.subr.mxu0 0.0
          %2326 = vmatpush1.msra.mxu0 0.0
          %2327 = vmatprep.subr.mxu0 0.0
          %2328 = vmatpush1.msra.mxu0 0.0
          %2329 = vmatprep.subr.mxu0 0.0
          %2330 = vmatpush1.msra.mxu0 0.0
          %2331 = vmatprep.subr.mxu0 0.0
          %2332 = vmatpush1.msra.mxu0 0.0
          %2333 = vmatprep.subr.mxu0 0.0
          %2334 = vmatpush1.msra.mxu0 0.0
          %2335 = vmatprep.subr.mxu0 0.0
          %2336 = vmatpush1.msra.mxu0 0.0
          %2337 = vmatprep.subr.mxu0 0.0
          %2338 = vmatpush1.msra.mxu0 0.0
          %2339 = vmatprep.subr.mxu0 0.0
          %2340 = vmatpush1.msra.mxu0 0.0
          %2341 = vmatprep.subr.mxu0 0.0
          %2342 = vmatpush1.msra.mxu0 0.0
          %2343 = vmatprep.subr.mxu0 0.0
          %2344 = vmatpush1.msra.mxu0 0.0
          %2345 = vmatprep.subr.mxu0 0.0
          %2346 = vmatpush1.msra.mxu0 0.0
          %2347 = vmatprep.subr.mxu0 0.0
          %2348 = vmatpush1.msra.mxu0 0.0
          %2349 = vmatprep.subr.mxu0 0.0
          %2350 = vmatpush1.msra.mxu0 0.0
          %2351 = vmatprep.subr.mxu0 0.0
          %2352 = vmatpush1.msra.mxu0 0.0
          %2353 = vmatprep.subr.mxu0 0.0
          %2354 = vmatpush1.msra.mxu0 0.0
          %2355 = vmatprep.subr.mxu0 0.0
          %2356 = vmatpush1.msra.mxu0 0.0
          %2357 = vmatprep.subr.mxu0 0.0
          %2358 = vmatpush1.msra.mxu0 0.0
          %2359 = vmatprep.subr.mxu0 0.0
          %2360 = vmatpush1.msra.mxu0 0.0
          %2361 = vmatprep.mubr.f32.mxu0 0.0
          %2362 = vmatmul.mubr.f32.gmra.mrb[0].mxu0 %v2295
          %v2363 = vpop.f32.mrb[0].mxu0
          %v2364 = vadd.f32 %v2291, %v2363
          %v2365 = vpop.f32.mrb[0].mxu0
          %2366 = vdwg.mxu0
          %s2367 = scalar_lea.vmem [#allocation5], 16
          %v2368 = vld [vmem:[%s2367] sm:$0xff]
          %2370 = vset.pattern.permute.xlu0 0
          %2371 = vperm.xlu0 %2370, %v2201
          %v2372 = vpop.permute.xlu0 %2371
          %v2374 = vmul.f32 %v2368, %v2372
          %s2375 = scalar_lea.vmem %s6, 16
          %v2376 = vld [vmem:[%s2375] sm:$0xff]
          %v2378 = vsel %vm1462, %v2374, 0
          %2380 = vmatprep.subr.mxu0 0.0
          %2381 = vmatpush1.msra.mxu0 %v2376
          %2382 = vmatprep.subr.mxu0 0.0
          %2383 = vmatpush1.msra.mxu0 0.0
          %2384 = vmatprep.subr.mxu0 0.0
          %2385 = vmatpush1.msra.mxu0 0.0
          %2386 = vmatprep.subr.mxu0 0.0
          %2387 = vmatpush1.msra.mxu0 0.0
          %2388 = vmatprep.subr.mxu0 0.0
          %2389 = vmatpush1.msra.mxu0 0.0
          %2390 = vmatprep.subr.mxu0 0.0
          %2391 = vmatpush1.msra.mxu0 0.0
          %2392 = vmatprep.subr.mxu0 0.0
          %2393 = vmatpush1.msra.mxu0 0.0
          %2394 = vmatprep.subr.mxu0 0.0
          %2395 = vmatpush1.msra.mxu0 0.0
          %2396 = vmatprep.subr.mxu0 0.0
          %2397 = vmatpush1.msra.mxu0 0.0
          %2398 = vmatprep.subr.mxu0 0.0
          %2399 = vmatpush1.msra.mxu0 0.0
          %2400 = vmatprep.subr.mxu0 0.0
          %2401 = vmatpush1.msra.mxu0 0.0
          %2402 = vmatprep.subr.mxu0 0.0
          %2403 = vmatpush1.msra.mxu0 0.0
          %2404 = vmatprep.subr.mxu0 0.0
          %2405 = vmatpush1.msra.mxu0 0.0
          %2406 = vmatprep.subr.mxu0 0.0
          %2407 = vmatpush1.msra.mxu0 0.0
          %2408 = vmatprep.subr.mxu0 0.0
          %2409 = vmatpush1.msra.mxu0 0.0
          %2410 = vmatprep.subr.mxu0 0.0
          %2411 = vmatpush1.msra.mxu0 0.0
          %2412 = vmatprep.subr.mxu0 0.0
          %2413 = vmatpush1.msra.mxu0 0.0
          %2414 = vmatprep.subr.mxu0 0.0
          %2415 = vmatpush1.msra.mxu0 0.0
          %2416 = vmatprep.subr.mxu0 0.0
          %2417 = vmatpush1.msra.mxu0 0.0
          %2418 = vmatprep.subr.mxu0 0.0
          %2419 = vmatpush1.msra.mxu0 0.0
          %2420 = vmatprep.subr.mxu0 0.0
          %2421 = vmatpush1.msra.mxu0 0.0
          %2422 = vmatprep.subr.mxu0 0.0
          %2423 = vmatpush1.msra.mxu0 0.0
          %2424 = vmatprep.subr.mxu0 0.0
          %2425 = vmatpush1.msra.mxu0 0.0
          %2426 = vmatprep.subr.mxu0 0.0
          %2427 = vmatpush1.msra.mxu0 0.0
          %2428 = vmatprep.subr.mxu0 0.0
          %2429 = vmatpush1.msra.mxu0 0.0
          %2430 = vmatprep.subr.mxu0 0.0
          %2431 = vmatpush1.msra.mxu0 0.0
          %2432 = vmatprep.subr.mxu0 0.0
          %2433 = vmatpush1.msra.mxu0 0.0
          %2434 = vmatprep.subr.mxu0 0.0
          %2435 = vmatpush1.msra.mxu0 0.0
          %2436 = vmatprep.subr.mxu0 0.0
          %2437 = vmatpush1.msra.mxu0 0.0
          %2438 = vmatprep.subr.mxu0 0.0
          %2439 = vmatpush1.msra.mxu0 0.0
          %2440 = vmatprep.subr.mxu0 0.0
          %2441 = vmatpush1.msra.mxu0 0.0
          %2442 = vmatprep.subr.mxu0 0.0
          %2443 = vmatpush1.msra.mxu0 0.0
          %2444 = vmatprep.mubr.f32.mxu0 0.0
          %2445 = vmatmul.mubr.f32.gmra.mrb[0].mxu0 %v2378
          %v2446 = vpop.f32.mrb[0].mxu0
          %v2447 = vadd.f32 0.0, %v2446
          %v2448 = vpop.f32.mrb[0].mxu0
          %2449 = vdwg.mxu0
          %v2450 = vadd.f32 %v2364, %v2447
          %s2451 = scalar_lea.vmem [#allocation5], 24
          %v2452 = vld [vmem:[%s2451] sm:$0xff]
          %2454 = vset.pattern.permute.xlu0 0
          %2455 = vperm.xlu0 %2454, %v2202
          %v2456 = vpop.permute.xlu0 %2455
          %v2458 = vmul.f32 %v2452, %v2456
          %s2459 = scalar_lea.vmem %s6, 24
          %v2460 = vld [vmem:[%s2459] sm:$0xff]
          %v2462 = vsel %vm1462, %v2458, 0
          %2464 = vmatprep.subr.mxu0 0.0
          %2465 = vmatpush1.msra.mxu0 %v2460
          %2466 = vmatprep.subr.mxu0 0.0
          %2467 = vmatpush1.msra.mxu0 0.0
          %2468 = vmatprep.subr.mxu0 0.0
          %2469 = vmatpush1.msra.mxu0 0.0
          %2470 = vmatprep.subr.mxu0 0.0
          %2471 = vmatpush1.msra.mxu0 0.0
          %2472 = vmatprep.subr.mxu0 0.0
          %2473 = vmatpush1.msra.mxu0 0.0
          %2474 = vmatprep.subr.mxu0 0.0
          %2475 = vmatpush1.msra.mxu0 0.0
          %2476 = vmatprep.subr.mxu0 0.0
          %2477 = vmatpush1.msra.mxu0 0.0
          %2478 = vmatprep.subr.mxu0 0.0
          %2479 = vmatpush1.msra.mxu0 0.0
          %2480 = vmatprep.subr.mxu0 0.0
          %2481 = vmatpush1.msra.mxu0 0.0
          %2482 = vmatprep.subr.mxu0 0.0
          %2483 = vmatpush1.msra.mxu0 0.0
          %2484 = vmatprep.subr.mxu0 0.0
          %2485 = vmatpush1.msra.mxu0 0.0
          %2486 = vmatprep.subr.mxu0 0.0
          %2487 = vmatpush1.msra.mxu0 0.0
          %2488 = vmatprep.subr.mxu0 0.0
          %2489 = vmatpush1.msra.mxu0 0.0
          %2490 = vmatprep.subr.mxu0 0.0
          %2491 = vmatpush1.msra.mxu0 0.0
          %2492 = vmatprep.subr.mxu0 0.0
          %2493 = vmatpush1.msra.mxu0 0.0
          %2494 = vmatprep.subr.mxu0 0.0
          %2495 = vmatpush1.msra.mxu0 0.0
          %2496 = vmatprep.subr.mxu0 0.0
          %2497 = vmatpush1.msra.mxu0 0.0
          %2498 = vmatprep.subr.mxu0 0.0
          %2499 = vmatpush1.msra.mxu0 0.0
          %2500 = vmatprep.subr.mxu0 0.0
          %2501 = vmatpush1.msra.mxu0 0.0
          %2502 = vmatprep.subr.mxu0 0.0
          %2503 = vmatpush1.msra.mxu0 0.0
          %2504 = vmatprep.subr.mxu0 0.0
          %2505 = vmatpush1.msra.mxu0 0.0
          %2506 = vmatprep.subr.mxu0 0.0
          %2507 = vmatpush1.msra.mxu0 0.0
          %2508 = vmatprep.subr.mxu0 0.0
          %2509 = vmatpush1.msra.mxu0 0.0
          %2510 = vmatprep.subr.mxu0 0.0
          %2511 = vmatpush1.msra.mxu0 0.0
          %2512 = vmatprep.subr.mxu0 0.0
          %2513 = vmatpush1.msra.mxu0 0.0
          %2514 = vmatprep.subr.mxu0 0.0
          %2515 = vmatpush1.msra.mxu0 0.0
          %2516 = vmatprep.subr.mxu0 0.0
          %2517 = vmatpush1.msra.mxu0 0.0
          %2518 = vmatprep.subr.mxu0 0.0
          %2519 = vmatpush1.msra.mxu0 0.0
          %2520 = vmatprep.subr.mxu0 0.0
          %2521 = vmatpush1.msra.mxu0 0.0
          %2522 = vmatprep.subr.mxu0 0.0
          %2523 = vmatpush1.msra.mxu0 0.0
          %2524 = vmatprep.subr.mxu0 0.0
          %2525 = vmatpush1.msra.mxu0 0.0
          %2526 = vmatprep.subr.mxu0 0.0
          %2527 = vmatpush1.msra.mxu0 0.0
          %2528 = vmatprep.mubr.f32.mxu0 0.0
          %2529 = vmatmul.mubr.f32.gmra.mrb[0].mxu0 %v2462
          %v2530 = vpop.f32.mrb[0].mxu0
          %v2531 = vadd.f32 0.0, %v2530
          %v2532 = vpop.f32.mrb[0].mxu0
          %2533 = vdwg.mxu0
          %v2534 = vadd.f32 %v2450, %v2531
          %v2535 = vld [vmem:[%s7] sm:$0x1]
          %v2537 = vlaneseq
          %v2538 = vshrl.u32 %v2537, 7
          %v2539 = vsub.s32 0, %v2538
          %v2540 = vrot.slane %v2535, %v2539
          %v2542 = vadd.f32 %v2534, %v2540
          %2543 = vst.msk [vmem:[%s386] sm:$0xff] %vm793, %v2542
        $region60: #{tpu_custom_call.1} parent=51 // pred_fallthru
          _
        %s2544 = sand.u32 %s247, 1
        %s2545 = scalar_lea.sflag [#allocation7], %s2544
        %s2546 = sand.u32 %s247, 1
        %s2547 = smul.addr %s2546, 8
        %s2548 = scalar_lea.vmem [#allocation6], %s2547
        // Predicated region
        $region61: #{tpu_custom_call.1} parent=51 // pred_check
          %p2549 = pneg %p257
        $region62: #{tpu_custom_call.1} parent=51 // pred_check_branch
          %2551 = sbr.rel (%p2549) target = $region64
        $region63: #{tpu_custom_call.1} parent=51 // pred_region
          %s2553 = ssub.s32 128, 128
          %2554 = vsyncadd %s2545, %s2553
          %s2555 = sadd.s32 %s28, %s27
          %s2556 = smul.addr %s2555, 128
          %s2557 = scalar_lea.hbm %s8, %s2556
          %s2559 = sshll.u32 %s2548, 4
          %s2560 = int_to_ptr.vmem [resolvable:$true] %s2559
          %2562 = dma.vmem_to_hbm [thread:$0]  %s2560, 128, %s2557, %s2545
        $region64: #{tpu_custom_call.1} parent=51 // pred_fallthru
          _
      $region52: #{tpu_custom_call.1} parent=5 // pred_fallthru
        _
      %p2563 = scmp.le.s32.totalorder 2, %s17
      // Predicated region
      $region65: #{tpu_custom_call.1} parent=5 // pred_check
        %p2564 = pneg %p2563
      $region66: #{tpu_custom_call.1} parent=5 // pred_check_branch
        %2566 = sbr.rel (%p2564) target = $region68
      $region67: #{tpu_custom_call.1} parent=5 // pred_region
        %s2567 = ssub.s32 %s17, 2
        // Predicated region
        $region69: #{tpu_custom_call.1} parent=67 // pred_check
          %p2568 = pneg %p263
        $region70: #{tpu_custom_call.1} parent=67 // pred_check_branch
          %2570 = sbr.rel (%p2568) target = $region72
        $region71: #{tpu_custom_call.1} parent=67 // pred_region
          %s2571 = sand.u32 %s248, 1
          %s2572 = scalar_lea.sflag [#allocation7], %s2571
          %s2573 = sand.u32 %s248, 1
          %s2574 = smul.addr %s2573, 8
          %s2575 = scalar_lea.vmem [#allocation6], %s2574
          %2576 = dma.done %s2572, 128
        $region72: #{tpu_custom_call.1} parent=67 // pred_fallthru
          _
      $region68: #{tpu_custom_call.1} parent=5 // pred_fallthru
        _
    $region6: #{tpu_custom_call.1} parent=1 // loop_footer
      %s21 = sadd.s32 1, %s17
    $region7: #{tpu_custom_call.1} parent=1 // loop_footer_branch
      %16 = sbr.rel target = $region3
    $region8: #{tpu_custom_call.1} parent=1 // loop_exit
      _
    %2577 = vsyncpa [#allocation7], 1
    %s2578 = scalar_lea.sflag [#allocation7], 1
    %2579 = vsyncpa %s2578, 1

</llo_original>
